<compile_context>
chip_gen: v5e
topology: v5e:2x2
jax: 0.10.0
libtpu: 0.0.40
codegen_flags: <defaults>
</compile_context>

<pallas_src>
import functools

import numpy as np

import jax
import jax.numpy as jnp
from jax import lax
from jax.experimental import pallas as pl
from jax.experimental.pallas import tpu as pltpu


def _round_up(x, m):
    return (x + m - 1) // m * m


# ----------------------------------------------------------------------------
# Fused conv(5x5, VALID) + bias + ReLU + 2x2 max-pool Pallas kernel
# ----------------------------------------------------------------------------
#
# The image is pre-deinterleaved along width into even/odd planes:
#   xd[n, 2*ci + par, h, q] = x[n, ci, h, 2*q + par]
# For pooled output row ip, the four pool-window taps (di, dj) of all output
# channels are a single matmul against a patch matrix
#   A[(c2*3 + t)*6 + u, jp] = xd[c2, 2*ip + u, jp + t],  u in [0,6), t in [0,3)
# with an expanded weight matrix Wm of shape (4*Cout, 2*Cin*3*6) built on the
# host (see _deinterleaved_conv_weights).  Pool = max over the 4 row groups.


def _deinterleaved_conv_weights(w, b):
    """w: (Cout, Cin, 5, 5) -> (4*Cout, 2*Cin*3*6) expanded weights, (Cout,1) bias."""
    cout, cin, KH, KW = w.shape
    di = np.arange(2)[:, None, None, None, None]
    dj = np.arange(2)[None, :, None, None, None]
    c2 = np.arange(2 * cin)[None, None, :, None, None]
    t = np.arange(3)[None, None, None, :, None]
    u = np.arange(6)[None, None, None, None, :]
    ci, par = c2 // 2, c2 % 2
    ki = u - di                      # conv row tap
    kj = 2 * t + par - dj            # conv col tap
    valid = (ki >= 0) & (ki < KH) & (kj >= 0) & (kj < KW)
    idx = ci * (KH * KW) + np.clip(ki, 0, KH - 1) * KW + np.clip(kj, 0, KW - 1)
    w2 = w.reshape(cout, cin * KH * KW)
    g = w2[:, idx] * jnp.asarray(valid, w.dtype)         # (cout, 2, 2, 2cin, 3, 6)
    wm = jnp.transpose(g, (1, 2, 0, 3, 4, 5)).reshape(4 * cout, 2 * cin * 3 * 6)
    return wm, b.reshape(cout, 1)


def _conv_pool_kernel(wm_ref, b_ref, xd_ref, o_ref, a_ref, *, cin, cout, trp, wp):
    """One grid step = one image.  Loops over pooled output rows."""

    def body(p, carry):
        r0 = pl.multiple_of(2 * p, 2)          # first input row of this pool window
        # Build the patch matrix A (K6, wp) from the VMEM-resident image:
        # 2*cin*3 contiguous (6, wp) slabs, no strided accesses anywhere.
        for c2 in range(2 * cin):
            for t in range(3):
                k0 = (c2 * 3 + t) * 6
                a_ref[pl.ds(k0, 6), :] = xd_ref[0, c2, pl.ds(r0, 6), pl.ds(t, wp)]
        # One MXU call -> all 4 pool taps x all output channels for this row.
        y = jnp.dot(wm_ref[...], a_ref[...],
                    preferred_element_type=jnp.float32)          # (4*cout, wp)
        m = jnp.maximum(jnp.maximum(y[0:cout], y[cout:2 * cout]),
                        jnp.maximum(y[2 * cout:3 * cout], y[3 * cout:4 * cout]))
        res = jnp.maximum(m + b_ref[...], 0.0)                   # bias + ReLU
        o_ref[0, pl.ds(p, 1), :, :] = res[None, :, :]
        return carry

    lax.fori_loop(0, trp, body, 0)


def conv_relu_pool(x, w, b):
    """x: (N, Cin, H, W) f32 NCHW, w: (Cout, Cin, 5, 5), b: (Cout,).
    Returns NCHW pooled activations (N, Cout, (H-4)//2, (W-4)//2)."""
    n, cin, H, W = x.shape
    cout = w.shape[0]
    Ho, Wo = H - 4, W - 4
    Hp, Wp = Ho // 2, Wo // 2
    Wh = W // 2
    assert H % 2 == 0 and W % 2 == 0 and Ho % 2 == 0 and Wo % 2 == 0

    # Cheap XLA layout op (~input size): width even/odd deinterleave.
    xd = (x.reshape(n, cin, H, Wh, 2)
           .transpose(0, 1, 4, 2, 3)
           .reshape(n, 2 * cin, H, Wh))
    wm, bb = _deinterleaved_conv_weights(w, b)
    k6 = 2 * cin * 3 * 6

    out_nhcw = pl.pallas_call(
        functools.partial(_conv_pool_kernel, cin=cin, cout=cout, trp=Hp, wp=Wp),
        out_shape=jax.ShapeDtypeStruct((n, Hp, cout, Wp), jnp.float32),
        grid_spec=pltpu.PrefetchScalarGridSpec(
            num_scalar_prefetch=0,
            grid=(n,),
            in_specs=[
                pl.BlockSpec((4 * cout, k6), lambda i: (0, 0)),      # weights (resident)
                pl.BlockSpec((cout, 1), lambda i: (0, 0)),           # bias (resident)
                pl.BlockSpec((1, 2 * cin, H, Wh), lambda i: (i, 0, 0, 0)),  # whole image
            ],
            out_specs=pl.BlockSpec((1, Hp, cout, Wp), lambda i: (i, 0, 0, 0)),
            scratch_shapes=[pltpu.VMEM((k6, Wp), jnp.float32)],
        ),
        compiler_params=pltpu.CompilerParams(
            dimension_semantics=("parallel",)),
    )(wm, bb, xd)
    # Tiny XLA transpose back to NCHW for the next layer / flatten.
    return out_nhcw.transpose(0, 2, 1, 3)


# ----------------------------------------------------------------------------
# Linear layers: K-streaming matmul + bias (+ReLU) with resident M x N output
# ----------------------------------------------------------------------------
def _matmul_bias_acc_kernel(a_ref, b_ref, bias_ref, o_ref, acc_ref, *, nk, relu):
    k = pl.program_id(0)

    @pl.when(k == 0)
    def _():
        acc_ref[...] = jnp.zeros_like(acc_ref)

    acc_ref[...] += jnp.dot(a_ref[...], b_ref[...],
                            preferred_element_type=jnp.float32)

    @pl.when(k == nk - 1)
    def _():
        r = acc_ref[...] + bias_ref[...]
        if relu:
            r = jnp.maximum(r, 0.0)
        o_ref[...] = r.astype(o_ref.dtype)


def _matmul_bias_single_kernel(a_ref, b_ref, bias_ref, o_ref, *, relu):
    r = jnp.dot(a_ref[...], b_ref[...],
                preferred_element_type=jnp.float32) + bias_ref[...]
    if relu:
        r = jnp.maximum(r, 0.0)
    o_ref[...] = r.astype(o_ref.dtype)


def matmul_bias(a, b, bias, relu=False):
    """relu?(a @ b + bias); a:(M,K), b:(K,N), bias:(N,), all f32.
    M and N are tiny in this model, so the full M x N block stays in VMEM and
    only K is streamed.  No M/N padding -> no dead HBM traffic."""
    M, K = a.shape
    K2, N = b.shape
    assert K == K2
    bias2 = bias.reshape(1, N)

    if K <= 4096:  # fc2 / fc3: single block, no accumulator scratch needed.
        return pl.pallas_call(
            functools.partial(_matmul_bias_single_kernel, relu=relu),
            out_shape=jax.ShapeDtypeStruct((M, N), jnp.float32),
            grid_spec=pltpu.PrefetchScalarGridSpec(
                num_scalar_prefetch=0,
                grid=(1,),
                in_specs=[pl.BlockSpec((M, K), lambda k: (0, 0)),
                          pl.BlockSpec((K, N), lambda k: (0, 0)),
                          pl.BlockSpec((1, N), lambda k: (0, 0))],
                out_specs=pl.BlockSpec((M, N), lambda k: (0, 0)),
            ),
            compiler_params=pltpu.CompilerParams(
                dimension_semantics=("arbitrary",)),
        )(a, b, bias2)

    # Large K (fc1: K=57600 -> tk=3840, nk=15; tk divides K exactly).
    tk = None
    for cand in (4096, 3840, 3584, 3072, 2560, 2048, 1536, 1280, 1024, 512, 256, 128):
        if K % cand == 0:
            tk = cand
            break
    if tk is None:
        tk = 2048
        Kp = _round_up(K, tk)
        a = jnp.zeros((M, Kp), a.dtype).at[:, :K].set(a)
        b = jnp.zeros((Kp, N), b.dtype).at[:K, :].set(b)
        K = Kp
    nk = K // tk

    return pl.pallas_call(
        functools.partial(_matmul_bias_acc_kernel, nk=nk, relu=relu),
        out_shape=jax.ShapeDtypeStruct((M, N), jnp.float32),
        grid_spec=pltpu.PrefetchScalarGridSpec(
            num_scalar_prefetch=0,
            grid=(nk,),
            in_specs=[pl.BlockSpec((M, tk), lambda k: (0, k)),
                      pl.BlockSpec((tk, N), lambda k: (k, 0)),
                      pl.BlockSpec((1, N), lambda k: (0, 0))],
            out_specs=pl.BlockSpec((M, N), lambda k: (0, 0)),
            scratch_shapes=[pltpu.VMEM((M, N), jnp.float32)],
        ),
        compiler_params=pltpu.CompilerParams(
            dimension_semantics=("arbitrary",)),
    )(a, b, bias2)


# ----------------------------------------------------------------------------
# Full forward pass (matches PyTorch CNNTwoLayerMaxPooling.forward)
# ----------------------------------------------------------------------------
def cnn_forward(x, p):
    x = conv_relu_pool(x, p["w1"], p["b1"])                 # (N, 6, 124, 124)
    x = conv_relu_pool(x, p["w2"], p["b2"])                 # (N, 16, 60, 60)
    x = x.reshape(x.shape[0], -1)                           # torch.flatten(x, 1)
    x = matmul_bias(x, p["wf1"].T, p["bf1"], relu=True)     # (N, 120)
    x = matmul_bias(x, p["wf2"].T, p["bf2"], relu=True)     # (N, 32)
    x = matmul_bias(x, p["wf3"].T, p["bf3"], relu=False)    # (N, 5)
    return x


# Pure-JAX reference (no Pallas) for the correctness check.
def reference_forward(x, p):
    dn = ('NCHW', 'OIHW', 'NCHW')

    def conv(x, w, b):
        y = lax.conv_general_dilated(x, w, (1, 1), 'VALID',
                                     dimension_numbers=dn,
                                     precision=lax.Precision.HIGHEST)
        return y + b[None, :, None, None]

    def pool(x):
        return lax.reduce_window(x, -jnp.inf, lax.max,
                                 (1, 1, 2, 2), (1, 1, 2, 2), 'VALID')

    x = pool(jax.nn.relu(conv(x, p["w1"], p["b1"])))
    x = pool(jax.nn.relu(conv(x, p["w2"], p["b2"])))
    x = x.reshape(x.shape[0], -1)
    x = jax.nn.relu(jnp.dot(x, p["wf1"].T, precision=lax.Precision.HIGHEST) + p["bf1"])
    x = jax.nn.relu(jnp.dot(x, p["wf2"].T, precision=lax.Precision.HIGHEST) + p["bf2"])
    return jnp.dot(x, p["wf3"].T, precision=lax.Precision.HIGHEST) + p["bf3"]


if __name__ == "__main__":
    key = jax.random.PRNGKey(0)
    ks = jax.random.split(key, 10)
    # Shapes from the module's __init__; fc1 = Linear(16*60*60, 120) pins the
    # spatial input size to 252x252 and Cin=3.  Batch = 2.
    params = {
        "w1": jax.random.normal(ks[0], (6, 3, 5, 5), jnp.float32) * 0.05,
        "b1": jax.random.normal(ks[1], (6,), jnp.float32) * 0.05,
        "w2": jax.random.normal(ks[2], (16, 6, 5, 5), jnp.float32) * 0.05,
        "b2": jax.random.normal(ks[3], (16,), jnp.float32) * 0.05,
        "wf1": jax.random.normal(ks[4], (120, 16 * 60 * 60), jnp.float32) * 0.01,
        "bf1": jax.random.normal(ks[5], (120,), jnp.float32) * 0.05,
        "wf2": jax.random.normal(ks[6], (32, 120), jnp.float32) * 0.05,
        "bf2": jax.random.normal(ks[7], (32,), jnp.float32) * 0.05,
        "wf3": jax.random.normal(ks[8], (5, 32), jnp.float32) * 0.05,
        "bf3": jnp.zeros((5,), jnp.float32),
    }
    x = jax.random.normal(ks[9], (2, 3, 252, 252), jnp.float32)

    out = jax.block_until_ready(jax.jit(cnn_forward)(x, params))
    ref = jax.block_until_ready(jax.jit(reference_forward)(x, params))

    assert out.shape == (2, 5), out.shape
    assert jnp.allclose(out, ref, rtol=1e-2, atol=1e-2), (out, ref)
    print("KERNEL_OK")
</pallas_src>

<mosaic_0001>
module attributes {stable_mosaic.version = 11 : i64} {
  func.func @_conv_pool_kernel(%arg0: i32, %arg1: memref<24x108xf32, #tpu.memory_space<vmem>>, %arg2: memref<6x1xf32, #tpu.memory_space<vmem>>, %arg3: memref<1x6x252x126xf32, #tpu.memory_space<vmem>>, %arg4: memref<1x124x6x124xf32, #tpu.memory_space<vmem>>, %arg5: memref<108x124xf32, #tpu.memory_space<vmem>>) attributes {dimension_semantics = [#tpu.dimension_semantics<parallel>], iteration_bounds = array<i64: 2>, scalar_prefetch = 0 : i64, scratch_operands = 1 : i64, tpu.core_type = #tpu.core_type<tc>, window_params = [{pipeline_mode = #tpu.pipeline_mode<synchronous>, transform_indices = @transform_0, window_bounds = array<i64: 24, 108>}, {pipeline_mode = #tpu.pipeline_mode<synchronous>, transform_indices = @transform_1, window_bounds = array<i64: 6, 1>}, {transform_indices = @transform_2, window_bounds = array<i64: 1, 6, 252, 126>}, {transform_indices = @transform_3, window_bounds = array<i64: 1, 124, 6, 124>}]} {
    %c0_i32 = arith.constant 0 : i32
    %c124_i32 = arith.constant 124 : i32
    %0 = arith.addi %c0_i32, %c124_i32 : i32
    %c1_i32 = arith.constant 1 : i32
    scf.for %arg6 = %c0_i32 to %0 step %c1_i32  : i32 {
      %c2_i32 = arith.constant 2 : i32
      %1 = arith.muli %c2_i32, %arg6 : i32
      %2 = tpu.assume_multiple %1, 2 : i32
      %c0 = arith.constant 0 : index
      %c0_1 = arith.constant 0 : index
      %3 = arith.index_cast %2 : i32 to index
      %c0_2 = arith.constant 0 : index
      %4 = vector.load %arg3[%c0, %c0_1, %3, %c0_2] : memref<1x6x252x126xf32, #tpu.memory_space<vmem>>, vector<1x1x6x124xf32>
      %5 = vector.shape_cast %4 : vector<1x1x6x124xf32> to vector<6x124xf32>
      %c0_3 = arith.constant 0 : index
      %c0_4 = arith.constant 0 : index
      %6 = vector.load %arg5[%c0_3, %c0_4] : memref<108x124xf32, #tpu.memory_space<vmem>>, vector<6x124xf32>
      tpu.vector_store %arg5[%c0_3, %c0_4], %5 {strides = array<i32>} : memref<108x124xf32, #tpu.memory_space<vmem>>, vector<6x124xf32>,
      %c0_5 = arith.constant 0 : index
      %c0_6 = arith.constant 0 : index
      %7 = arith.index_cast %2 : i32 to index
      %c1 = arith.constant 1 : index
      %8 = vector.load %arg3[%c0_5, %c0_6, %7, %c1] : memref<1x6x252x126xf32, #tpu.memory_space<vmem>>, vector<1x1x6x124xf32>
      %9 = vector.shape_cast %8 : vector<1x1x6x124xf32> to vector<6x124xf32>
      %c6 = arith.constant 6 : index
      %c0_7 = arith.constant 0 : index
      %10 = vector.load %arg5[%c6, %c0_7] : memref<108x124xf32, #tpu.memory_space<vmem>>, vector<6x124xf32>
      tpu.vector_store %arg5[%c6, %c0_7], %9 {strides = array<i32>} : memref<108x124xf32, #tpu.memory_space<vmem>>, vector<6x124xf32>,
      %c0_8 = arith.constant 0 : index
      %c0_9 = arith.constant 0 : index
      %11 = arith.index_cast %2 : i32 to index
      %c2 = arith.constant 2 : index
      %12 = vector.load %arg3[%c0_8, %c0_9, %11, %c2] : memref<1x6x252x126xf32, #tpu.memory_space<vmem>>, vector<1x1x6x124xf32>
      %13 = vector.shape_cast %12 : vector<1x1x6x124xf32> to vector<6x124xf32>
      %c12 = arith.constant 12 : index
      %c0_10 = arith.constant 0 : index
      %14 = vector.load %arg5[%c12, %c0_10] : memref<108x124xf32, #tpu.memory_space<vmem>>, vector<6x124xf32>
      tpu.vector_store %arg5[%c12, %c0_10], %13 {strides = array<i32>} : memref<108x124xf32, #tpu.memory_space<vmem>>, vector<6x124xf32>,
      %c0_11 = arith.constant 0 : index
      %c1_12 = arith.constant 1 : index
      %15 = arith.index_cast %2 : i32 to index
      %c0_13 = arith.constant 0 : index
      %16 = vector.load %arg3[%c0_11, %c1_12, %15, %c0_13] : memref<1x6x252x126xf32, #tpu.memory_space<vmem>>, vector<1x1x6x124xf32>
      %17 = vector.shape_cast %16 : vector<1x1x6x124xf32> to vector<6x124xf32>
      %c18 = arith.constant 18 : index
      %c0_14 = arith.constant 0 : index
      %18 = vector.load %arg5[%c18, %c0_14] : memref<108x124xf32, #tpu.memory_space<vmem>>, vector<6x124xf32>
      tpu.vector_store %arg5[%c18, %c0_14], %17 {strides = array<i32>} : memref<108x124xf32, #tpu.memory_space<vmem>>, vector<6x124xf32>,
      %c0_15 = arith.constant 0 : index
      %c1_16 = arith.constant 1 : index
      %19 = arith.index_cast %2 : i32 to index
      %c1_17 = arith.constant 1 : index
      %20 = vector.load %arg3[%c0_15, %c1_16, %19, %c1_17] : memref<1x6x252x126xf32, #tpu.memory_space<vmem>>, vector<1x1x6x124xf32>
      %21 = vector.shape_cast %20 : vector<1x1x6x124xf32> to vector<6x124xf32>
      %c24 = arith.constant 24 : index
      %c0_18 = arith.constant 0 : index
      %22 = vector.load %arg5[%c24, %c0_18] : memref<108x124xf32, #tpu.memory_space<vmem>>, vector<6x124xf32>
      tpu.vector_store %arg5[%c24, %c0_18], %21 {strides = array<i32>} : memref<108x124xf32, #tpu.memory_space<vmem>>, vector<6x124xf32>,
      %c0_19 = arith.constant 0 : index
      %c1_20 = arith.constant 1 : index
      %23 = arith.index_cast %2 : i32 to index
      %c2_21 = arith.constant 2 : index
      %24 = vector.load %arg3[%c0_19, %c1_20, %23, %c2_21] : memref<1x6x252x126xf32, #tpu.memory_space<vmem>>, vector<1x1x6x124xf32>
      %25 = vector.shape_cast %24 : vector<1x1x6x124xf32> to vector<6x124xf32>
      %c30 = arith.constant 30 : index
      %c0_22 = arith.constant 0 : index
      %26 = vector.load %arg5[%c30, %c0_22] : memref<108x124xf32, #tpu.memory_space<vmem>>, vector<6x124xf32>
      tpu.vector_store %arg5[%c30, %c0_22], %25 {strides = array<i32>} : memref<108x124xf32, #tpu.memory_space<vmem>>, vector<6x124xf32>,
      %c0_23 = arith.constant 0 : index
      %c2_24 = arith.constant 2 : index
      %27 = arith.index_cast %2 : i32 to index
      %c0_25 = arith.constant 0 : index
      %28 = vector.load %arg3[%c0_23, %c2_24, %27, %c0_25] : memref<1x6x252x126xf32, #tpu.memory_space<vmem>>, vector<1x1x6x124xf32>
      %29 = vector.shape_cast %28 : vector<1x1x6x124xf32> to vector<6x124xf32>
      %c36 = arith.constant 36 : index
      %c0_26 = arith.constant 0 : index
      %30 = vector.load %arg5[%c36, %c0_26] : memref<108x124xf32, #tpu.memory_space<vmem>>, vector<6x124xf32>
      tpu.vector_store %arg5[%c36, %c0_26], %29 {strides = array<i32>} : memref<108x124xf32, #tpu.memory_space<vmem>>, vector<6x124xf32>,
      %c0_27 = arith.constant 0 : index
      %c2_28 = arith.constant 2 : index
      %31 = arith.index_cast %2 : i32 to index
      %c1_29 = arith.constant 1 : index
      %32 = vector.load %arg3[%c0_27, %c2_28, %31, %c1_29] : memref<1x6x252x126xf32, #tpu.memory_space<vmem>>, vector<1x1x6x124xf32>
      %33 = vector.shape_cast %32 : vector<1x1x6x124xf32> to vector<6x124xf32>
      %c42 = arith.constant 42 : index
      %c0_30 = arith.constant 0 : index
      %34 = vector.load %arg5[%c42, %c0_30] : memref<108x124xf32, #tpu.memory_space<vmem>>, vector<6x124xf32>
      tpu.vector_store %arg5[%c42, %c0_30], %33 {strides = array<i32>} : memref<108x124xf32, #tpu.memory_space<vmem>>, vector<6x124xf32>,
      %c0_31 = arith.constant 0 : index
      %c2_32 = arith.constant 2 : index
      %35 = arith.index_cast %2 : i32 to index
      %c2_33 = arith.constant 2 : index
      %36 = vector.load %arg3[%c0_31, %c2_32, %35, %c2_33] : memref<1x6x252x126xf32, #tpu.memory_space<vmem>>, vector<1x1x6x124xf32>
      %37 = vector.shape_cast %36 : vector<1x1x6x124xf32> to vector<6x124xf32>
      %c48 = arith.constant 48 : index
      %c0_34 = arith.constant 0 : index
      %38 = vector.load %arg5[%c48, %c0_34] : memref<108x124xf32, #tpu.memory_space<vmem>>, vector<6x124xf32>
      tpu.vector_store %arg5[%c48, %c0_34], %37 {strides = array<i32>} : memref<108x124xf32, #tpu.memory_space<vmem>>, vector<6x124xf32>,
      %c0_35 = arith.constant 0 : index
      %c3 = arith.constant 3 : index
      %39 = arith.index_cast %2 : i32 to index
      %c0_36 = arith.constant 0 : index
      %40 = vector.load %arg3[%c0_35, %c3, %39, %c0_36] : memref<1x6x252x126xf32, #tpu.memory_space<vmem>>, vector<1x1x6x124xf32>
      %41 = vector.shape_cast %40 : vector<1x1x6x124xf32> to vector<6x124xf32>
      %c54 = arith.constant 54 : index
      %c0_37 = arith.constant 0 : index
      %42 = vector.load %arg5[%c54, %c0_37] : memref<108x124xf32, #tpu.memory_space<vmem>>, vector<6x124xf32>
      tpu.vector_store %arg5[%c54, %c0_37], %41 {strides = array<i32>} : memref<108x124xf32, #tpu.memory_space<vmem>>, vector<6x124xf32>,
      %c0_38 = arith.constant 0 : index
      %c3_39 = arith.constant 3 : index
      %43 = arith.index_cast %2 : i32 to index
      %c1_40 = arith.constant 1 : index
      %44 = vector.load %arg3[%c0_38, %c3_39, %43, %c1_40] : memref<1x6x252x126xf32, #tpu.memory_space<vmem>>, vector<1x1x6x124xf32>
      %45 = vector.shape_cast %44 : vector<1x1x6x124xf32> to vector<6x124xf32>
      %c60 = arith.constant 60 : index
      %c0_41 = arith.constant 0 : index
      %46 = vector.load %arg5[%c60, %c0_41] : memref<108x124xf32, #tpu.memory_space<vmem>>, vector<6x124xf32>
      tpu.vector_store %arg5[%c60, %c0_41], %45 {strides = array<i32>} : memref<108x124xf32, #tpu.memory_space<vmem>>, vector<6x124xf32>,
      %c0_42 = arith.constant 0 : index
      %c3_43 = arith.constant 3 : index
      %47 = arith.index_cast %2 : i32 to index
      %c2_44 = arith.constant 2 : index
      %48 = vector.load %arg3[%c0_42, %c3_43, %47, %c2_44] : memref<1x6x252x126xf32, #tpu.memory_space<vmem>>, vector<1x1x6x124xf32>
      %49 = vector.shape_cast %48 : vector<1x1x6x124xf32> to vector<6x124xf32>
      %c66 = arith.constant 66 : index
      %c0_45 = arith.constant 0 : index
      %50 = vector.load %arg5[%c66, %c0_45] : memref<108x124xf32, #tpu.memory_space<vmem>>, vector<6x124xf32>
      tpu.vector_store %arg5[%c66, %c0_45], %49 {strides = array<i32>} : memref<108x124xf32, #tpu.memory_space<vmem>>, vector<6x124xf32>,
      %c0_46 = arith.constant 0 : index
      %c4 = arith.constant 4 : index
      %51 = arith.index_cast %2 : i32 to index
      %c0_47 = arith.constant 0 : index
      %52 = vector.load %arg3[%c0_46, %c4, %51, %c0_47] : memref<1x6x252x126xf32, #tpu.memory_space<vmem>>, vector<1x1x6x124xf32>
      %53 = vector.shape_cast %52 : vector<1x1x6x124xf32> to vector<6x124xf32>
      %c72 = arith.constant 72 : index
      %c0_48 = arith.constant 0 : index
      %54 = vector.load %arg5[%c72, %c0_48] : memref<108x124xf32, #tpu.memory_space<vmem>>, vector<6x124xf32>
      tpu.vector_store %arg5[%c72, %c0_48], %53 {strides = array<i32>} : memref<108x124xf32, #tpu.memory_space<vmem>>, vector<6x124xf32>,
      %c0_49 = arith.constant 0 : index
      %c4_50 = arith.constant 4 : index
      %55 = arith.index_cast %2 : i32 to index
      %c1_51 = arith.constant 1 : index
      %56 = vector.load %arg3[%c0_49, %c4_50, %55, %c1_51] : memref<1x6x252x126xf32, #tpu.memory_space<vmem>>, vector<1x1x6x124xf32>
      %57 = vector.shape_cast %56 : vector<1x1x6x124xf32> to vector<6x124xf32>
      %c78 = arith.constant 78 : index
      %c0_52 = arith.constant 0 : index
      %58 = vector.load %arg5[%c78, %c0_52] : memref<108x124xf32, #tpu.memory_space<vmem>>, vector<6x124xf32>
      tpu.vector_store %arg5[%c78, %c0_52], %57 {strides = array<i32>} : memref<108x124xf32, #tpu.memory_space<vmem>>, vector<6x124xf32>,
      %c0_53 = arith.constant 0 : index
      %c4_54 = arith.constant 4 : index
      %59 = arith.index_cast %2 : i32 to index
      %c2_55 = arith.constant 2 : index
      %60 = vector.load %arg3[%c0_53, %c4_54, %59, %c2_55] : memref<1x6x252x126xf32, #tpu.memory_space<vmem>>, vector<1x1x6x124xf32>
      %61 = vector.shape_cast %60 : vector<1x1x6x124xf32> to vector<6x124xf32>
      %c84 = arith.constant 84 : index
      %c0_56 = arith.constant 0 : index
      %62 = vector.load %arg5[%c84, %c0_56] : memref<108x124xf32, #tpu.memory_space<vmem>>, vector<6x124xf32>
      tpu.vector_store %arg5[%c84, %c0_56], %61 {strides = array<i32>} : memref<108x124xf32, #tpu.memory_space<vmem>>, vector<6x124xf32>,
      %c0_57 = arith.constant 0 : index
      %c5 = arith.constant 5 : index
      %63 = arith.index_cast %2 : i32 to index
      %c0_58 = arith.constant 0 : index
      %64 = vector.load %arg3[%c0_57, %c5, %63, %c0_58] : memref<1x6x252x126xf32, #tpu.memory_space<vmem>>, vector<1x1x6x124xf32>
      %65 = vector.shape_cast %64 : vector<1x1x6x124xf32> to vector<6x124xf32>
      %c90 = arith.constant 90 : index
      %c0_59 = arith.constant 0 : index
      %66 = vector.load %arg5[%c90, %c0_59] : memref<108x124xf32, #tpu.memory_space<vmem>>, vector<6x124xf32>
      tpu.vector_store %arg5[%c90, %c0_59], %65 {strides = array<i32>} : memref<108x124xf32, #tpu.memory_space<vmem>>, vector<6x124xf32>,
      %c0_60 = arith.constant 0 : index
      %c5_61 = arith.constant 5 : index
      %67 = arith.index_cast %2 : i32 to index
      %c1_62 = arith.constant 1 : index
      %68 = vector.load %arg3[%c0_60, %c5_61, %67, %c1_62] : memref<1x6x252x126xf32, #tpu.memory_space<vmem>>, vector<1x1x6x124xf32>
      %69 = vector.shape_cast %68 : vector<1x1x6x124xf32> to vector<6x124xf32>
      %c96 = arith.constant 96 : index
      %c0_63 = arith.constant 0 : index
      %70 = vector.load %arg5[%c96, %c0_63] : memref<108x124xf32, #tpu.memory_space<vmem>>, vector<6x124xf32>
      tpu.vector_store %arg5[%c96, %c0_63], %69 {strides = array<i32>} : memref<108x124xf32, #tpu.memory_space<vmem>>, vector<6x124xf32>,
      %c0_64 = arith.constant 0 : index
      %c5_65 = arith.constant 5 : index
      %71 = arith.index_cast %2 : i32 to index
      %c2_66 = arith.constant 2 : index
      %72 = vector.load %arg3[%c0_64, %c5_65, %71, %c2_66] : memref<1x6x252x126xf32, #tpu.memory_space<vmem>>, vector<1x1x6x124xf32>
      %73 = vector.shape_cast %72 : vector<1x1x6x124xf32> to vector<6x124xf32>
      %c102 = arith.constant 102 : index
      %c0_67 = arith.constant 0 : index
      %74 = vector.load %arg5[%c102, %c0_67] : memref<108x124xf32, #tpu.memory_space<vmem>>, vector<6x124xf32>
      tpu.vector_store %arg5[%c102, %c0_67], %73 {strides = array<i32>} : memref<108x124xf32, #tpu.memory_space<vmem>>, vector<6x124xf32>,
      %c0_68 = arith.constant 0 : index
      %c0_69 = arith.constant 0 : index
      %75 = vector.load %arg1[%c0_68, %c0_69] : memref<24x108xf32, #tpu.memory_space<vmem>>, vector<24x108xf32>
      %c0_70 = arith.constant 0 : index
      %c0_71 = arith.constant 0 : index
      %76 = vector.load %arg5[%c0_70, %c0_71] : memref<108x124xf32, #tpu.memory_space<vmem>>, vector<108x124xf32>
      %cst = arith.constant dense<0.000000e+00> : vector<24x124xf32>
      %77 = tpu.matmul %75, %76, %cst {dimension_numbers = #tpu.dot_dimension_numbers<[1], [0], [0], [1], [0, 0, 1, 1], [], []>} : vector<24x108xf32>, vector<108x124xf32>, vector<24x124xf32> -> vector<24x124xf32>
      %78 = vector.extract_strided_slice %77 {offsets = [0, 0], sizes = [6, 124], strides = [1, 1]} : vector<24x124xf32> to vector<6x124xf32>
      %79 = vector.extract_strided_slice %77 {offsets = [6, 0], sizes = [6, 124], strides = [1, 1]} : vector<24x124xf32> to vector<6x124xf32>
      %80 = arith.maximumf %78, %79 : vector<6x124xf32>
      %81 = vector.extract_strided_slice %77 {offsets = [12, 0], sizes = [6, 124], strides = [1, 1]} : vector<24x124xf32> to vector<6x124xf32>
      %82 = vector.extract_strided_slice %77 {offsets = [18, 0], sizes = [6, 124], strides = [1, 1]} : vector<24x124xf32> to vector<6x124xf32>
      %83 = arith.maximumf %81, %82 : vector<6x124xf32>
      %84 = arith.maximumf %80, %83 : vector<6x124xf32>
      %c0_72 = arith.constant 0 : index
      %c0_73 = arith.constant 0 : index
      %85 = vector.load %arg2[%c0_72, %c0_73] : memref<6x1xf32, #tpu.memory_space<vmem>>, vector<6x1xf32>
      %86 = vector.broadcast %85 : vector<6x1xf32> to vector<6x124xf32>
      %87 = arith.addf %84, %86 : vector<6x124xf32>
      %cst_74 = arith.constant 0.000000e+00 : f32
      %88 = vector.broadcast %cst_74 : f32 to vector<6x124xf32>
      %89 = arith.maximumf %87, %88 : vector<6x124xf32>
      %90 = vector.shape_cast %89 : vector<6x124xf32> to vector<1x6x124xf32>
      %c0_75 = arith.constant 0 : index
      %91 = arith.index_cast %arg6 : i32 to index
      %c0_76 = arith.constant 0 : index
      %c0_77 = arith.constant 0 : index
      %92 = vector.load %arg4[%c0_75, %91, %c0_76, %c0_77] : memref<1x124x6x124xf32, #tpu.memory_space<vmem>>, vector<1x1x6x124xf32>
      %93 = vector.shape_cast %92 : vector<1x1x6x124xf32> to vector<1x6x124xf32>
      %94 = vector.shape_cast %90 : vector<1x6x124xf32> to vector<1x1x6x124xf32>
      tpu.vector_store %arg4[%c0_75, %91, %c0_76, %c0_77], %94 {strides = array<i32>} : memref<1x124x6x124xf32, #tpu.memory_space<vmem>>, vector<1x1x6x124xf32>,
    }
    %c124_i32_0 = arith.constant 124 : i32
    return
  }
  func.func @transform_0(%arg0: i32) -> (i32, i32) {
    %c0_i32 = arith.constant 0 : i32
    %c0_i32_0 = arith.constant 0 : i32
    %c0_i32_1 = arith.constant 0 : i32
    return %c0_i32, %c0_i32_0 : i32, i32
  }
  func.func @transform_1(%arg0: i32) -> (i32, i32) {
    %c0_i32 = arith.constant 0 : i32
    %c0_i32_0 = arith.constant 0 : i32
    %c0_i32_1 = arith.constant 0 : i32
    return %c0_i32, %c0_i32_0 : i32, i32
  }
  func.func @transform_2(%arg0: i32) -> (i32, i32, i32, i32) {
    %c0_i32 = arith.constant 0 : i32
    %c0_i32_0 = arith.constant 0 : i32
    %c0_i32_1 = arith.constant 0 : i32
    %c0_i32_2 = arith.constant 0 : i32
    return %arg0, %c0_i32, %c0_i32_0, %c0_i32_1 : i32, i32, i32, i32
  }
  func.func @transform_3(%arg0: i32) -> (i32, i32, i32, i32) {
    %c0_i32 = arith.constant 0 : i32
    %c0_i32_0 = arith.constant 0 : i32
    %c0_i32_1 = arith.constant 0 : i32
    %c0_i32_2 = arith.constant 0 : i32
    return %arg0, %c0_i32, %c0_i32_0, %c0_i32_1 : i32, i32, i32, i32
  }
}

module attributes {stable_mosaic.version = 11 : i64} {
  func.func @_conv_pool_kernel(%arg0: i32, %arg1: memref<64x216xf32, #tpu.memory_space<vmem>>, %arg2: memref<16x1xf32, #tpu.memory_space<vmem>>, %arg3: memref<1x12x124x62xf32, #tpu.memory_space<vmem>>, %arg4: memref<1x60x16x60xf32, #tpu.memory_space<vmem>>, %arg5: memref<216x60xf32, #tpu.memory_space<vmem>>) attributes {dimension_semantics = [#tpu.dimension_semantics<parallel>], iteration_bounds = array<i64: 2>, scalar_prefetch = 0 : i64, scratch_operands = 1 : i64, tpu.core_type = #tpu.core_type<tc>, window_params = [{pipeline_mode = #tpu.pipeline_mode<synchronous>, transform_indices = @transform_0, window_bounds = array<i64: 64, 216>}, {pipeline_mode = #tpu.pipeline_mode<synchronous>, transform_indices = @transform_1, window_bounds = array<i64: 16, 1>}, {transform_indices = @transform_2, window_bounds = array<i64: 1, 12, 124, 62>}, {transform_indices = @transform_3, window_bounds = array<i64: 1, 60, 16, 60>}]} {
    %c0_i32 = arith.constant 0 : i32
    %c60_i32 = arith.constant 60 : i32
    %0 = arith.addi %c0_i32, %c60_i32 : i32
    %c1_i32 = arith.constant 1 : i32
    scf.for %arg6 = %c0_i32 to %0 step %c1_i32  : i32 {
      %c2_i32 = arith.constant 2 : i32
      %1 = arith.muli %c2_i32, %arg6 : i32
      %2 = tpu.assume_multiple %1, 2 : i32
      %c0 = arith.constant 0 : index
      %c0_1 = arith.constant 0 : index
      %3 = arith.index_cast %2 : i32 to index
      %c0_2 = arith.constant 0 : index
      %4 = vector.load %arg3[%c0, %c0_1, %3, %c0_2] : memref<1x12x124x62xf32, #tpu.memory_space<vmem>>, vector<1x1x6x60xf32>
      %5 = vector.shape_cast %4 : vector<1x1x6x60xf32> to vector<6x60xf32>
      %c0_3 = arith.constant 0 : index
      %c0_4 = arith.constant 0 : index
      %6 = vector.load %arg5[%c0_3, %c0_4] : memref<216x60xf32, #tpu.memory_space<vmem>>, vector<6x60xf32>
      tpu.vector_store %arg5[%c0_3, %c0_4], %5 {strides = array<i32>} : memref<216x60xf32, #tpu.memory_space<vmem>>, vector<6x60xf32>,
      %c0_5 = arith.constant 0 : index
      %c0_6 = arith.constant 0 : index
      %7 = arith.index_cast %2 : i32 to index
      %c1 = arith.constant 1 : index
      %8 = vector.load %arg3[%c0_5, %c0_6, %7, %c1] : memref<1x12x124x62xf32, #tpu.memory_space<vmem>>, vector<1x1x6x60xf32>
      %9 = vector.shape_cast %8 : vector<1x1x6x60xf32> to vector<6x60xf32>
      %c6 = arith.constant 6 : index
      %c0_7 = arith.constant 0 : index
      %10 = vector.load %arg5[%c6, %c0_7] : memref<216x60xf32, #tpu.memory_space<vmem>>, vector<6x60xf32>
      tpu.vector_store %arg5[%c6, %c0_7], %9 {strides = array<i32>} : memref<216x60xf32, #tpu.memory_space<vmem>>, vector<6x60xf32>,
      %c0_8 = arith.constant 0 : index
      %c0_9 = arith.constant 0 : index
      %11 = arith.index_cast %2 : i32 to index
      %c2 = arith.constant 2 : index
      %12 = vector.load %arg3[%c0_8, %c0_9, %11, %c2] : memref<1x12x124x62xf32, #tpu.memory_space<vmem>>, vector<1x1x6x60xf32>
      %13 = vector.shape_cast %12 : vector<1x1x6x60xf32> to vector<6x60xf32>
      %c12 = arith.constant 12 : index
      %c0_10 = arith.constant 0 : index
      %14 = vector.load %arg5[%c12, %c0_10] : memref<216x60xf32, #tpu.memory_space<vmem>>, vector<6x60xf32>
      tpu.vector_store %arg5[%c12, %c0_10], %13 {strides = array<i32>} : memref<216x60xf32, #tpu.memory_space<vmem>>, vector<6x60xf32>,
      %c0_11 = arith.constant 0 : index
      %c1_12 = arith.constant 1 : index
      %15 = arith.index_cast %2 : i32 to index
      %c0_13 = arith.constant 0 : index
      %16 = vector.load %arg3[%c0_11, %c1_12, %15, %c0_13] : memref<1x12x124x62xf32, #tpu.memory_space<vmem>>, vector<1x1x6x60xf32>
      %17 = vector.shape_cast %16 : vector<1x1x6x60xf32> to vector<6x60xf32>
      %c18 = arith.constant 18 : index
      %c0_14 = arith.constant 0 : index
      %18 = vector.load %arg5[%c18, %c0_14] : memref<216x60xf32, #tpu.memory_space<vmem>>, vector<6x60xf32>
      tpu.vector_store %arg5[%c18, %c0_14], %17 {strides = array<i32>} : memref<216x60xf32, #tpu.memory_space<vmem>>, vector<6x60xf32>,
      %c0_15 = arith.constant 0 : index
      %c1_16 = arith.constant 1 : index
      %19 = arith.index_cast %2 : i32 to index
      %c1_17 = arith.constant 1 : index
      %20 = vector.load %arg3[%c0_15, %c1_16, %19, %c1_17] : memref<1x12x124x62xf32, #tpu.memory_space<vmem>>, vector<1x1x6x60xf32>
      %21 = vector.shape_cast %20 : vector<1x1x6x60xf32> to vector<6x60xf32>
      %c24 = arith.constant 24 : index
      %c0_18 = arith.constant 0 : index
      %22 = vector.load %arg5[%c24, %c0_18] : memref<216x60xf32, #tpu.memory_space<vmem>>, vector<6x60xf32>
      tpu.vector_store %arg5[%c24, %c0_18], %21 {strides = array<i32>} : memref<216x60xf32, #tpu.memory_space<vmem>>, vector<6x60xf32>,
      %c0_19 = arith.constant 0 : index
      %c1_20 = arith.constant 1 : index
      %23 = arith.index_cast %2 : i32 to index
      %c2_21 = arith.constant 2 : index
      %24 = vector.load %arg3[%c0_19, %c1_20, %23, %c2_21] : memref<1x12x124x62xf32, #tpu.memory_space<vmem>>, vector<1x1x6x60xf32>
      %25 = vector.shape_cast %24 : vector<1x1x6x60xf32> to vector<6x60xf32>
      %c30 = arith.constant 30 : index
      %c0_22 = arith.constant 0 : index
      %26 = vector.load %arg5[%c30, %c0_22] : memref<216x60xf32, #tpu.memory_space<vmem>>, vector<6x60xf32>
      tpu.vector_store %arg5[%c30, %c0_22], %25 {strides = array<i32>} : memref<216x60xf32, #tpu.memory_space<vmem>>, vector<6x60xf32>,
      %c0_23 = arith.constant 0 : index
      %c2_24 = arith.constant 2 : index
      %27 = arith.index_cast %2 : i32 to index
      %c0_25 = arith.constant 0 : index
      %28 = vector.load %arg3[%c0_23, %c2_24, %27, %c0_25] : memref<1x12x124x62xf32, #tpu.memory_space<vmem>>, vector<1x1x6x60xf32>
      %29 = vector.shape_cast %28 : vector<1x1x6x60xf32> to vector<6x60xf32>
      %c36 = arith.constant 36 : index
      %c0_26 = arith.constant 0 : index
      %30 = vector.load %arg5[%c36, %c0_26] : memref<216x60xf32, #tpu.memory_space<vmem>>, vector<6x60xf32>
      tpu.vector_store %arg5[%c36, %c0_26], %29 {strides = array<i32>} : memref<216x60xf32, #tpu.memory_space<vmem>>, vector<6x60xf32>,
      %c0_27 = arith.constant 0 : index
      %c2_28 = arith.constant 2 : index
      %31 = arith.index_cast %2 : i32 to index
      %c1_29 = arith.constant 1 : index
      %32 = vector.load %arg3[%c0_27, %c2_28, %31, %c1_29] : memref<1x12x124x62xf32, #tpu.memory_space<vmem>>, vector<1x1x6x60xf32>
      %33 = vector.shape_cast %32 : vector<1x1x6x60xf32> to vector<6x60xf32>
      %c42 = arith.constant 42 : index
      %c0_30 = arith.constant 0 : index
      %34 = vector.load %arg5[%c42, %c0_30] : memref<216x60xf32, #tpu.memory_space<vmem>>, vector<6x60xf32>
      tpu.vector_store %arg5[%c42, %c0_30], %33 {strides = array<i32>} : memref<216x60xf32, #tpu.memory_space<vmem>>, vector<6x60xf32>,
      %c0_31 = arith.constant 0 : index
      %c2_32 = arith.constant 2 : index
      %35 = arith.index_cast %2 : i32 to index
      %c2_33 = arith.constant 2 : index
      %36 = vector.load %arg3[%c0_31, %c2_32, %35, %c2_33] : memref<1x12x124x62xf32, #tpu.memory_space<vmem>>, vector<1x1x6x60xf32>
      %37 = vector.shape_cast %36 : vector<1x1x6x60xf32> to vector<6x60xf32>
      %c48 = arith.constant 48 : index
      %c0_34 = arith.constant 0 : index
      %38 = vector.load %arg5[%c48, %c0_34] : memref<216x60xf32, #tpu.memory_space<vmem>>, vector<6x60xf32>
      tpu.vector_store %arg5[%c48, %c0_34], %37 {strides = array<i32>} : memref<216x60xf32, #tpu.memory_space<vmem>>, vector<6x60xf32>,
      %c0_35 = arith.constant 0 : index
      %c3 = arith.constant 3 : index
      %39 = arith.index_cast %2 : i32 to index
      %c0_36 = arith.constant 0 : index
      %40 = vector.load %arg3[%c0_35, %c3, %39, %c0_36] : memref<1x12x124x62xf32, #tpu.memory_space<vmem>>, vector<1x1x6x60xf32>
      %41 = vector.shape_cast %40 : vector<1x1x6x60xf32> to vector<6x60xf32>
      %c54 = arith.constant 54 : index
      %c0_37 = arith.constant 0 : index
      %42 = vector.load %arg5[%c54, %c0_37] : memref<216x60xf32, #tpu.memory_space<vmem>>, vector<6x60xf32>
      tpu.vector_store %arg5[%c54, %c0_37], %41 {strides = array<i32>} : memref<216x60xf32, #tpu.memory_space<vmem>>, vector<6x60xf32>,
      %c0_38 = arith.constant 0 : index
      %c3_39 = arith.constant 3 : index
      %43 = arith.index_cast %2 : i32 to index
      %c1_40 = arith.constant 1 : index
      %44 = vector.load %arg3[%c0_38, %c3_39, %43, %c1_40] : memref<1x12x124x62xf32, #tpu.memory_space<vmem>>, vector<1x1x6x60xf32>
      %45 = vector.shape_cast %44 : vector<1x1x6x60xf32> to vector<6x60xf32>
      %c60 = arith.constant 60 : index
      %c0_41 = arith.constant 0 : index
      %46 = vector.load %arg5[%c60, %c0_41] : memref<216x60xf32, #tpu.memory_space<vmem>>, vector<6x60xf32>
      tpu.vector_store %arg5[%c60, %c0_41], %45 {strides = array<i32>} : memref<216x60xf32, #tpu.memory_space<vmem>>, vector<6x60xf32>,
      %c0_42 = arith.constant 0 : index
      %c3_43 = arith.constant 3 : index
      %47 = arith.index_cast %2 : i32 to index
      %c2_44 = arith.constant 2 : index
      %48 = vector.load %arg3[%c0_42, %c3_43, %47, %c2_44] : memref<1x12x124x62xf32, #tpu.memory_space<vmem>>, vector<1x1x6x60xf32>
      %49 = vector.shape_cast %48 : vector<1x1x6x60xf32> to vector<6x60xf32>
      %c66 = arith.constant 66 : index
      %c0_45 = arith.constant 0 : index
      %50 = vector.load %arg5[%c66, %c0_45] : memref<216x60xf32, #tpu.memory_space<vmem>>, vector<6x60xf32>
      tpu.vector_store %arg5[%c66, %c0_45], %49 {strides = array<i32>} : memref<216x60xf32, #tpu.memory_space<vmem>>, vector<6x60xf32>,
      %c0_46 = arith.constant 0 : index
      %c4 = arith.constant 4 : index
      %51 = arith.index_cast %2 : i32 to index
      %c0_47 = arith.constant 0 : index
      %52 = vector.load %arg3[%c0_46, %c4, %51, %c0_47] : memref<1x12x124x62xf32, #tpu.memory_space<vmem>>, vector<1x1x6x60xf32>
      %53 = vector.shape_cast %52 : vector<1x1x6x60xf32> to vector<6x60xf32>
      %c72 = arith.constant 72 : index
      %c0_48 = arith.constant 0 : index
      %54 = vector.load %arg5[%c72, %c0_48] : memref<216x60xf32, #tpu.memory_space<vmem>>, vector<6x60xf32>
      tpu.vector_store %arg5[%c72, %c0_48], %53 {strides = array<i32>} : memref<216x60xf32, #tpu.memory_space<vmem>>, vector<6x60xf32>,
      %c0_49 = arith.constant 0 : index
      %c4_50 = arith.constant 4 : index
      %55 = arith.index_cast %2 : i32 to index
      %c1_51 = arith.constant 1 : index
      %56 = vector.load %arg3[%c0_49, %c4_50, %55, %c1_51] : memref<1x12x124x62xf32, #tpu.memory_space<vmem>>, vector<1x1x6x60xf32>
      %57 = vector.shape_cast %56 : vector<1x1x6x60xf32> to vector<6x60xf32>
      %c78 = arith.constant 78 : index
      %c0_52 = arith.constant 0 : index
      %58 = vector.load %arg5[%c78, %c0_52] : memref<216x60xf32, #tpu.memory_space<vmem>>, vector<6x60xf32>
      tpu.vector_store %arg5[%c78, %c0_52], %57 {strides = array<i32>} : memref<216x60xf32, #tpu.memory_space<vmem>>, vector<6x60xf32>,
      %c0_53 = arith.constant 0 : index
      %c4_54 = arith.constant 4 : index
      %59 = arith.index_cast %2 : i32 to index
      %c2_55 = arith.constant 2 : index
      %60 = vector.load %arg3[%c0_53, %c4_54, %59, %c2_55] : memref<1x12x124x62xf32, #tpu.memory_space<vmem>>, vector<1x1x6x60xf32>
      %61 = vector.shape_cast %60 : vector<1x1x6x60xf32> to vector<6x60xf32>
      %c84 = arith.constant 84 : index
      %c0_56 = arith.constant 0 : index
      %62 = vector.load %arg5[%c84, %c0_56] : memref<216x60xf32, #tpu.memory_space<vmem>>, vector<6x60xf32>
      tpu.vector_store %arg5[%c84, %c0_56], %61 {strides = array<i32>} : memref<216x60xf32, #tpu.memory_space<vmem>>, vector<6x60xf32>,
      %c0_57 = arith.constant 0 : index
      %c5 = arith.constant 5 : index
      %63 = arith.index_cast %2 : i32 to index
      %c0_58 = arith.constant 0 : index
      %64 = vector.load %arg3[%c0_57, %c5, %63, %c0_58] : memref<1x12x124x62xf32, #tpu.memory_space<vmem>>, vector<1x1x6x60xf32>
      %65 = vector.shape_cast %64 : vector<1x1x6x60xf32> to vector<6x60xf32>
      %c90 = arith.constant 90 : index
      %c0_59 = arith.constant 0 : index
      %66 = vector.load %arg5[%c90, %c0_59] : memref<216x60xf32, #tpu.memory_space<vmem>>, vector<6x60xf32>
      tpu.vector_store %arg5[%c90, %c0_59], %65 {strides = array<i32>} : memref<216x60xf32, #tpu.memory_space<vmem>>, vector<6x60xf32>,
      %c0_60 = arith.constant 0 : index
      %c5_61 = arith.constant 5 : index
      %67 = arith.index_cast %2 : i32 to index
      %c1_62 = arith.constant 1 : index
      %68 = vector.load %arg3[%c0_60, %c5_61, %67, %c1_62] : memref<1x12x124x62xf32, #tpu.memory_space<vmem>>, vector<1x1x6x60xf32>
      %69 = vector.shape_cast %68 : vector<1x1x6x60xf32> to vector<6x60xf32>
      %c96 = arith.constant 96 : index
      %c0_63 = arith.constant 0 : index
      %70 = vector.load %arg5[%c96, %c0_63] : memref<216x60xf32, #tpu.memory_space<vmem>>, vector<6x60xf32>
      tpu.vector_store %arg5[%c96, %c0_63], %69 {strides = array<i32>} : memref<216x60xf32, #tpu.memory_space<vmem>>, vector<6x60xf32>,
      %c0_64 = arith.constant 0 : index
      %c5_65 = arith.constant 5 : index
      %71 = arith.index_cast %2 : i32 to index
      %c2_66 = arith.constant 2 : index
      %72 = vector.load %arg3[%c0_64, %c5_65, %71, %c2_66] : memref<1x12x124x62xf32, #tpu.memory_space<vmem>>, vector<1x1x6x60xf32>
      %73 = vector.shape_cast %72 : vector<1x1x6x60xf32> to vector<6x60xf32>
      %c102 = arith.constant 102 : index
      %c0_67 = arith.constant 0 : index
      %74 = vector.load %arg5[%c102, %c0_67] : memref<216x60xf32, #tpu.memory_space<vmem>>, vector<6x60xf32>
      tpu.vector_store %arg5[%c102, %c0_67], %73 {strides = array<i32>} : memref<216x60xf32, #tpu.memory_space<vmem>>, vector<6x60xf32>,
      %c0_68 = arith.constant 0 : index
      %c6_69 = arith.constant 6 : index
      %75 = arith.index_cast %2 : i32 to index
      %c0_70 = arith.constant 0 : index
      %76 = vector.load %arg3[%c0_68, %c6_69, %75, %c0_70] : memref<1x12x124x62xf32, #tpu.memory_space<vmem>>, vector<1x1x6x60xf32>
      %77 = vector.shape_cast %76 : vector<1x1x6x60xf32> to vector<6x60xf32>
      %c108 = arith.constant 108 : index
      %c0_71 = arith.constant 0 : index
      %78 = vector.load %arg5[%c108, %c0_71] : memref<216x60xf32, #tpu.memory_space<vmem>>, vector<6x60xf32>
      tpu.vector_store %arg5[%c108, %c0_71], %77 {strides = array<i32>} : memref<216x60xf32, #tpu.memory_space<vmem>>, vector<6x60xf32>,
      %c0_72 = arith.constant 0 : index
      %c6_73 = arith.constant 6 : index
      %79 = arith.index_cast %2 : i32 to index
      %c1_74 = arith.constant 1 : index
      %80 = vector.load %arg3[%c0_72, %c6_73, %79, %c1_74] : memref<1x12x124x62xf32, #tpu.memory_space<vmem>>, vector<1x1x6x60xf32>
      %81 = vector.shape_cast %80 : vector<1x1x6x60xf32> to vector<6x60xf32>
      %c114 = arith.constant 114 : index
      %c0_75 = arith.constant 0 : index
      %82 = vector.load %arg5[%c114, %c0_75] : memref<216x60xf32, #tpu.memory_space<vmem>>, vector<6x60xf32>
      tpu.vector_store %arg5[%c114, %c0_75], %81 {strides = array<i32>} : memref<216x60xf32, #tpu.memory_space<vmem>>, vector<6x60xf32>,
      %c0_76 = arith.constant 0 : index
      %c6_77 = arith.constant 6 : index
      %83 = arith.index_cast %2 : i32 to index
      %c2_78 = arith.constant 2 : index
      %84 = vector.load %arg3[%c0_76, %c6_77, %83, %c2_78] : memref<1x12x124x62xf32, #tpu.memory_space<vmem>>, vector<1x1x6x60xf32>
      %85 = vector.shape_cast %84 : vector<1x1x6x60xf32> to vector<6x60xf32>
      %c120 = arith.constant 120 : index
      %c0_79 = arith.constant 0 : index
      %86 = vector.load %arg5[%c120, %c0_79] : memref<216x60xf32, #tpu.memory_space<vmem>>, vector<6x60xf32>
      tpu.vector_store %arg5[%c120, %c0_79], %85 {strides = array<i32>} : memref<216x60xf32, #tpu.memory_space<vmem>>, vector<6x60xf32>,
      %c0_80 = arith.constant 0 : index
      %c7 = arith.constant 7 : index
      %87 = arith.index_cast %2 : i32 to index
      %c0_81 = arith.constant 0 : index
      %88 = vector.load %arg3[%c0_80, %c7, %87, %c0_81] : memref<1x12x124x62xf32, #tpu.memory_space<vmem>>, vector<1x1x6x60xf32>
      %89 = vector.shape_cast %88 : vector<1x1x6x60xf32> to vector<6x60xf32>
      %c126 = arith.constant 126 : index
      %c0_82 = arith.constant 0 : index
      %90 = vector.load %arg5[%c126, %c0_82] : memref<216x60xf32, #tpu.memory_space<vmem>>, vector<6x60xf32>
      tpu.vector_store %arg5[%c126, %c0_82], %89 {strides = array<i32>} : memref<216x60xf32, #tpu.memory_space<vmem>>, vector<6x60xf32>,
      %c0_83 = arith.constant 0 : index
      %c7_84 = arith.constant 7 : index
      %91 = arith.index_cast %2 : i32 to index
      %c1_85 = arith.constant 1 : index
      %92 = vector.load %arg3[%c0_83, %c7_84, %91, %c1_85] : memref<1x12x124x62xf32, #tpu.memory_space<vmem>>, vector<1x1x6x60xf32>
      %93 = vector.shape_cast %92 : vector<1x1x6x60xf32> to vector<6x60xf32>
      %c132 = arith.constant 132 : index
      %c0_86 = arith.constant 0 : index
      %94 = vector.load %arg5[%c132, %c0_86] : memref<216x60xf32, #tpu.memory_space<vmem>>, vector<6x60xf32>
      tpu.vector_store %arg5[%c132, %c0_86], %93 {strides = array<i32>} : memref<216x60xf32, #tpu.memory_space<vmem>>, vector<6x60xf32>,
      %c0_87 = arith.constant 0 : index
      %c7_88 = arith.constant 7 : index
      %95 = arith.index_cast %2 : i32 to index
      %c2_89 = arith.constant 2 : index
      %96 = vector.load %arg3[%c0_87, %c7_88, %95, %c2_89] : memref<1x12x124x62xf32, #tpu.memory_space<vmem>>, vector<1x1x6x60xf32>
      %97 = vector.shape_cast %96 : vector<1x1x6x60xf32> to vector<6x60xf32>
      %c138 = arith.constant 138 : index
      %c0_90 = arith.constant 0 : index
      %98 = vector.load %arg5[%c138, %c0_90] : memref<216x60xf32, #tpu.memory_space<vmem>>, vector<6x60xf32>
      tpu.vector_store %arg5[%c138, %c0_90], %97 {strides = array<i32>} : memref<216x60xf32, #tpu.memory_space<vmem>>, vector<6x60xf32>,
      %c0_91 = arith.constant 0 : index
      %c8 = arith.constant 8 : index
      %99 = arith.index_cast %2 : i32 to index
      %c0_92 = arith.constant 0 : index
      %100 = vector.load %arg3[%c0_91, %c8, %99, %c0_92] : memref<1x12x124x62xf32, #tpu.memory_space<vmem>>, vector<1x1x6x60xf32>
      %101 = vector.shape_cast %100 : vector<1x1x6x60xf32> to vector<6x60xf32>
      %c144 = arith.constant 144 : index
      %c0_93 = arith.constant 0 : index
      %102 = vector.load %arg5[%c144, %c0_93] : memref<216x60xf32, #tpu.memory_space<vmem>>, vector<6x60xf32>
      tpu.vector_store %arg5[%c144, %c0_93], %101 {strides = array<i32>} : memref<216x60xf32, #tpu.memory_space<vmem>>, vector<6x60xf32>,
      %c0_94 = arith.constant 0 : index
      %c8_95 = arith.constant 8 : index
      %103 = arith.index_cast %2 : i32 to index
      %c1_96 = arith.constant 1 : index
      %104 = vector.load %arg3[%c0_94, %c8_95, %103, %c1_96] : memref<1x12x124x62xf32, #tpu.memory_space<vmem>>, vector<1x1x6x60xf32>
      %105 = vector.shape_cast %104 : vector<1x1x6x60xf32> to vector<6x60xf32>
      %c150 = arith.constant 150 : index
      %c0_97 = arith.constant 0 : index
      %106 = vector.load %arg5[%c150, %c0_97] : memref<216x60xf32, #tpu.memory_space<vmem>>, vector<6x60xf32>
      tpu.vector_store %arg5[%c150, %c0_97], %105 {strides = array<i32>} : memref<216x60xf32, #tpu.memory_space<vmem>>, vector<6x60xf32>,
      %c0_98 = arith.constant 0 : index
      %c8_99 = arith.constant 8 : index
      %107 = arith.index_cast %2 : i32 to index
      %c2_100 = arith.constant 2 : index
      %108 = vector.load %arg3[%c0_98, %c8_99, %107, %c2_100] : memref<1x12x124x62xf32, #tpu.memory_space<vmem>>, vector<1x1x6x60xf32>
      %109 = vector.shape_cast %108 : vector<1x1x6x60xf32> to vector<6x60xf32>
      %c156 = arith.constant 156 : index
      %c0_101 = arith.constant 0 : index
      %110 = vector.load %arg5[%c156, %c0_101] : memref<216x60xf32, #tpu.memory_space<vmem>>, vector<6x60xf32>
      tpu.vector_store %arg5[%c156, %c0_101], %109 {strides = array<i32>} : memref<216x60xf32, #tpu.memory_space<vmem>>, vector<6x60xf32>,
      %c0_102 = arith.constant 0 : index
      %c9 = arith.constant 9 : index
      %111 = arith.index_cast %2 : i32 to index
      %c0_103 = arith.constant 0 : index
      %112 = vector.load %arg3[%c0_102, %c9, %111, %c0_103] : memref<1x12x124x62xf32, #tpu.memory_space<vmem>>, vector<1x1x6x60xf32>
      %113 = vector.shape_cast %112 : vector<1x1x6x60xf32> to vector<6x60xf32>
      %c162 = arith.constant 162 : index
      %c0_104 = arith.constant 0 : index
      %114 = vector.load %arg5[%c162, %c0_104] : memref<216x60xf32, #tpu.memory_space<vmem>>, vector<6x60xf32>
      tpu.vector_store %arg5[%c162, %c0_104], %113 {strides = array<i32>} : memref<216x60xf32, #tpu.memory_space<vmem>>, vector<6x60xf32>,
      %c0_105 = arith.constant 0 : index
      %c9_106 = arith.constant 9 : index
      %115 = arith.index_cast %2 : i32 to index
      %c1_107 = arith.constant 1 : index
      %116 = vector.load %arg3[%c0_105, %c9_106, %115, %c1_107] : memref<1x12x124x62xf32, #tpu.memory_space<vmem>>, vector<1x1x6x60xf32>
      %117 = vector.shape_cast %116 : vector<1x1x6x60xf32> to vector<6x60xf32>
      %c168 = arith.constant 168 : index
      %c0_108 = arith.constant 0 : index
      %118 = vector.load %arg5[%c168, %c0_108] : memref<216x60xf32, #tpu.memory_space<vmem>>, vector<6x60xf32>
      tpu.vector_store %arg5[%c168, %c0_108], %117 {strides = array<i32>} : memref<216x60xf32, #tpu.memory_space<vmem>>, vector<6x60xf32>,
      %c0_109 = arith.constant 0 : index
      %c9_110 = arith.constant 9 : index
      %119 = arith.index_cast %2 : i32 to index
      %c2_111 = arith.constant 2 : index
      %120 = vector.load %arg3[%c0_109, %c9_110, %119, %c2_111] : memref<1x12x124x62xf32, #tpu.memory_space<vmem>>, vector<1x1x6x60xf32>
      %121 = vector.shape_cast %120 : vector<1x1x6x60xf32> to vector<6x60xf32>
      %c174 = arith.constant 174 : index
      %c0_112 = arith.constant 0 : index
      %122 = vector.load %arg5[%c174, %c0_112] : memref<216x60xf32, #tpu.memory_space<vmem>>, vector<6x60xf32>
      tpu.vector_store %arg5[%c174, %c0_112], %121 {strides = array<i32>} : memref<216x60xf32, #tpu.memory_space<vmem>>, vector<6x60xf32>,
      %c0_113 = arith.constant 0 : index
      %c10 = arith.constant 10 : index
      %123 = arith.index_cast %2 : i32 to index
      %c0_114 = arith.constant 0 : index
      %124 = vector.load %arg3[%c0_113, %c10, %123, %c0_114] : memref<1x12x124x62xf32, #tpu.memory_space<vmem>>, vector<1x1x6x60xf32>
      %125 = vector.shape_cast %124 : vector<1x1x6x60xf32> to vector<6x60xf32>
      %c180 = arith.constant 180 : index
      %c0_115 = arith.constant 0 : index
      %126 = vector.load %arg5[%c180, %c0_115] : memref<216x60xf32, #tpu.memory_space<vmem>>, vector<6x60xf32>
      tpu.vector_store %arg5[%c180, %c0_115], %125 {strides = array<i32>} : memref<216x60xf32, #tpu.memory_space<vmem>>, vector<6x60xf32>,
      %c0_116 = arith.constant 0 : index
      %c10_117 = arith.constant 10 : index
      %127 = arith.index_cast %2 : i32 to index
      %c1_118 = arith.constant 1 : index
      %128 = vector.load %arg3[%c0_116, %c10_117, %127, %c1_118] : memref<1x12x124x62xf32, #tpu.memory_space<vmem>>, vector<1x1x6x60xf32>
      %129 = vector.shape_cast %128 : vector<1x1x6x60xf32> to vector<6x60xf32>
      %c186 = arith.constant 186 : index
      %c0_119 = arith.constant 0 : index
      %130 = vector.load %arg5[%c186, %c0_119] : memref<216x60xf32, #tpu.memory_space<vmem>>, vector<6x60xf32>
      tpu.vector_store %arg5[%c186, %c0_119], %129 {strides = array<i32>} : memref<216x60xf32, #tpu.memory_space<vmem>>, vector<6x60xf32>,
      %c0_120 = arith.constant 0 : index
      %c10_121 = arith.constant 10 : index
      %131 = arith.index_cast %2 : i32 to index
      %c2_122 = arith.constant 2 : index
      %132 = vector.load %arg3[%c0_120, %c10_121, %131, %c2_122] : memref<1x12x124x62xf32, #tpu.memory_space<vmem>>, vector<1x1x6x60xf32>
      %133 = vector.shape_cast %132 : vector<1x1x6x60xf32> to vector<6x60xf32>
      %c192 = arith.constant 192 : index
      %c0_123 = arith.constant 0 : index
      %134 = vector.load %arg5[%c192, %c0_123] : memref<216x60xf32, #tpu.memory_space<vmem>>, vector<6x60xf32>
      tpu.vector_store %arg5[%c192, %c0_123], %133 {strides = array<i32>} : memref<216x60xf32, #tpu.memory_space<vmem>>, vector<6x60xf32>,
      %c0_124 = arith.constant 0 : index
      %c11 = arith.constant 11 : index
      %135 = arith.index_cast %2 : i32 to index
      %c0_125 = arith.constant 0 : index
      %136 = vector.load %arg3[%c0_124, %c11, %135, %c0_125] : memref<1x12x124x62xf32, #tpu.memory_space<vmem>>, vector<1x1x6x60xf32>
      %137 = vector.shape_cast %136 : vector<1x1x6x60xf32> to vector<6x60xf32>
      %c198 = arith.constant 198 : index
      %c0_126 = arith.constant 0 : index
      %138 = vector.load %arg5[%c198, %c0_126] : memref<216x60xf32, #tpu.memory_space<vmem>>, vector<6x60xf32>
      tpu.vector_store %arg5[%c198, %c0_126], %137 {strides = array<i32>} : memref<216x60xf32, #tpu.memory_space<vmem>>, vector<6x60xf32>,
      %c0_127 = arith.constant 0 : index
      %c11_128 = arith.constant 11 : index
      %139 = arith.index_cast %2 : i32 to index
      %c1_129 = arith.constant 1 : index
      %140 = vector.load %arg3[%c0_127, %c11_128, %139, %c1_129] : memref<1x12x124x62xf32, #tpu.memory_space<vmem>>, vector<1x1x6x60xf32>
      %141 = vector.shape_cast %140 : vector<1x1x6x60xf32> to vector<6x60xf32>
      %c204 = arith.constant 204 : index
      %c0_130 = arith.constant 0 : index
      %142 = vector.load %arg5[%c204, %c0_130] : memref<216x60xf32, #tpu.memory_space<vmem>>, vector<6x60xf32>
      tpu.vector_store %arg5[%c204, %c0_130], %141 {strides = array<i32>} : memref<216x60xf32, #tpu.memory_space<vmem>>, vector<6x60xf32>,
      %c0_131 = arith.constant 0 : index
      %c11_132 = arith.constant 11 : index
      %143 = arith.index_cast %2 : i32 to index
      %c2_133 = arith.constant 2 : index
      %144 = vector.load %arg3[%c0_131, %c11_132, %143, %c2_133] : memref<1x12x124x62xf32, #tpu.memory_space<vmem>>, vector<1x1x6x60xf32>
      %145 = vector.shape_cast %144 : vector<1x1x6x60xf32> to vector<6x60xf32>
      %c210 = arith.constant 210 : index
      %c0_134 = arith.constant 0 : index
      %146 = vector.load %arg5[%c210, %c0_134] : memref<216x60xf32, #tpu.memory_space<vmem>>, vector<6x60xf32>
      tpu.vector_store %arg5[%c210, %c0_134], %145 {strides = array<i32>} : memref<216x60xf32, #tpu.memory_space<vmem>>, vector<6x60xf32>,
      %c0_135 = arith.constant 0 : index
      %c0_136 = arith.constant 0 : index
      %147 = vector.load %arg1[%c0_135, %c0_136] : memref<64x216xf32, #tpu.memory_space<vmem>>, vector<64x216xf32>
      %c0_137 = arith.constant 0 : index
      %c0_138 = arith.constant 0 : index
      %148 = vector.load %arg5[%c0_137, %c0_138] : memref<216x60xf32, #tpu.memory_space<vmem>>, vector<216x60xf32>
      %cst = arith.constant dense<0.000000e+00> : vector<64x60xf32>
      %149 = tpu.matmul %147, %148, %cst {dimension_numbers = #tpu.dot_dimension_numbers<[1], [0], [0], [1], [0, 0, 1, 1], [], []>} : vector<64x216xf32>, vector<216x60xf32>, vector<64x60xf32> -> vector<64x60xf32>
      %150 = vector.extract_strided_slice %149 {offsets = [0, 0], sizes = [16, 60], strides = [1, 1]} : vector<64x60xf32> to vector<16x60xf32>
      %151 = vector.extract_strided_slice %149 {offsets = [16, 0], sizes = [16, 60], strides = [1, 1]} : vector<64x60xf32> to vector<16x60xf32>
      %152 = arith.maximumf %150, %151 : vector<16x60xf32>
      %153 = vector.extract_strided_slice %149 {offsets = [32, 0], sizes = [16, 60], strides = [1, 1]} : vector<64x60xf32> to vector<16x60xf32>
      %154 = vector.extract_strided_slice %149 {offsets = [48, 0], sizes = [16, 60], strides = [1, 1]} : vector<64x60xf32> to vector<16x60xf32>
      %155 = arith.maximumf %153, %154 : vector<16x60xf32>
      %156 = arith.maximumf %152, %155 : vector<16x60xf32>
      %c0_139 = arith.constant 0 : index
      %c0_140 = arith.constant 0 : index
      %157 = vector.load %arg2[%c0_139, %c0_140] : memref<16x1xf32, #tpu.memory_space<vmem>>, vector<16x1xf32>
      %158 = vector.broadcast %157 : vector<16x1xf32> to vector<16x60xf32>
      %159 = arith.addf %156, %158 : vector<16x60xf32>
      %cst_141 = arith.constant 0.000000e+00 : f32
      %160 = vector.broadcast %cst_141 : f32 to vector<16x60xf32>
      %161 = arith.maximumf %159, %160 : vector<16x60xf32>
      %162 = vector.shape_cast %161 : vector<16x60xf32> to vector<1x16x60xf32>
      %c0_142 = arith.constant 0 : index
      %163 = arith.index_cast %arg6 : i32 to index
      %c0_143 = arith.constant 0 : index
      %c0_144 = arith.constant 0 : index
      %164 = vector.load %arg4[%c0_142, %163, %c0_143, %c0_144] : memref<1x60x16x60xf32, #tpu.memory_space<vmem>>, vector<1x1x16x60xf32>
      %165 = vector.shape_cast %164 : vector<1x1x16x60xf32> to vector<1x16x60xf32>
      %166 = vector.shape_cast %162 : vector<1x16x60xf32> to vector<1x1x16x60xf32>
      tpu.vector_store %arg4[%c0_142, %163, %c0_143, %c0_144], %166 {strides = array<i32>} : memref<1x60x16x60xf32, #tpu.memory_space<vmem>>, vector<1x1x16x60xf32>,
    }
    %c60_i32_0 = arith.constant 60 : i32
    return
  }
  func.func @transform_0(%arg0: i32) -> (i32, i32) {
    %c0_i32 = arith.constant 0 : i32
    %c0_i32_0 = arith.constant 0 : i32
    %c0_i32_1 = arith.constant 0 : i32
    return %c0_i32, %c0_i32_0 : i32, i32
  }
  func.func @transform_1(%arg0: i32) -> (i32, i32) {
    %c0_i32 = arith.constant 0 : i32
    %c0_i32_0 = arith.constant 0 : i32
    %c0_i32_1 = arith.constant 0 : i32
    return %c0_i32, %c0_i32_0 : i32, i32
  }
  func.func @transform_2(%arg0: i32) -> (i32, i32, i32, i32) {
    %c0_i32 = arith.constant 0 : i32
    %c0_i32_0 = arith.constant 0 : i32
    %c0_i32_1 = arith.constant 0 : i32
    %c0_i32_2 = arith.constant 0 : i32
    return %arg0, %c0_i32, %c0_i32_0, %c0_i32_1 : i32, i32, i32, i32
  }
  func.func @transform_3(%arg0: i32) -> (i32, i32, i32, i32) {
    %c0_i32 = arith.constant 0 : i32
    %c0_i32_0 = arith.constant 0 : i32
    %c0_i32_1 = arith.constant 0 : i32
    %c0_i32_2 = arith.constant 0 : i32
    return %arg0, %c0_i32, %c0_i32_0, %c0_i32_1 : i32, i32, i32, i32
  }
}

module attributes {stable_mosaic.version = 11 : i64} {
  func.func @_matmul_bias_acc_kernel(%arg0: i32, %arg1: memref<2x3840xf32, #tpu.memory_space<vmem>>, %arg2: memref<3840x120xf32, #tpu.memory_space<vmem>>, %arg3: memref<1x120xf32, #tpu.memory_space<vmem>>, %arg4: memref<2x120xf32, #tpu.memory_space<vmem>>, %arg5: memref<2x120xf32, #tpu.memory_space<vmem>>) attributes {dimension_semantics = [#tpu.dimension_semantics<arbitrary>], iteration_bounds = array<i64: 15>, scalar_prefetch = 0 : i64, scratch_operands = 1 : i64, tpu.core_type = #tpu.core_type<tc>, window_params = [{transform_indices = @transform_0, window_bounds = array<i64: 2, 3840>}, {transform_indices = @transform_1, window_bounds = array<i64: 3840, 120>}, {pipeline_mode = #tpu.pipeline_mode<synchronous>, transform_indices = @transform_2, window_bounds = array<i64: 1, 120>}, {pipeline_mode = #tpu.pipeline_mode<synchronous>, transform_indices = @transform_3, window_bounds = array<i64: 2, 120>}]} {
    %c0_i32 = arith.constant 0 : i32
    %0 = arith.cmpi eq, %arg0, %c0_i32 : i32
    %1 = arith.extui %0 : i1 to i32
    %c0_i32_0 = arith.constant 0 : i32
    %2 = arith.cmpi ne, %1, %c0_i32_0 : i32
    scf.if %2 {
      %cst_9 = arith.constant 0.000000e+00 : f32
      %12 = vector.broadcast %cst_9 : f32 to vector<2x120xf32>
      %c0_10 = arith.constant 0 : index
      %c0_11 = arith.constant 0 : index
      %13 = vector.load %arg5[%c0_10, %c0_11] : memref<2x120xf32, #tpu.memory_space<vmem>>, vector<2x120xf32>
      tpu.vector_store %arg5[%c0_10, %c0_11], %12 {strides = array<i32>} : memref<2x120xf32, #tpu.memory_space<vmem>>, vector<2x120xf32>,
    } else {
    }
    %c0 = arith.constant 0 : index
    %c0_1 = arith.constant 0 : index
    %3 = vector.load %arg5[%c0, %c0_1] : memref<2x120xf32, #tpu.memory_space<vmem>>, vector<2x120xf32>
    %c0_2 = arith.constant 0 : index
    %c0_3 = arith.constant 0 : index
    %4 = vector.load %arg1[%c0_2, %c0_3] : memref<2x3840xf32, #tpu.memory_space<vmem>>, vector<2x3840xf32>
    %c0_4 = arith.constant 0 : index
    %c0_5 = arith.constant 0 : index
    %5 = vector.load %arg2[%c0_4, %c0_5] : memref<3840x120xf32, #tpu.memory_space<vmem>>, vector<3840x120xf32>
    %cst = arith.constant dense<0.000000e+00> : vector<2x120xf32>
    %6 = tpu.matmul %4, %5, %cst {dimension_numbers = #tpu.dot_dimension_numbers<[1], [0], [0], [1], [0, 0, 1, 1], [], []>} : vector<2x3840xf32>, vector<3840x120xf32>, vector<2x120xf32> -> vector<2x120xf32>
    %7 = arith.addf %3, %6 : vector<2x120xf32>
    %c0_6 = arith.constant 0 : index
    %c0_7 = arith.constant 0 : index
    %8 = vector.load %arg5[%c0_6, %c0_7] : memref<2x120xf32, #tpu.memory_space<vmem>>, vector<2x120xf32>
    tpu.vector_store %arg5[%c0_6, %c0_7], %7 {strides = array<i32>} : memref<2x120xf32, #tpu.memory_space<vmem>>, vector<2x120xf32>,
    %c14_i32 = arith.constant 14 : i32
    %9 = arith.cmpi eq, %arg0, %c14_i32 : i32
    %10 = arith.extui %9 : i1 to i32
    %c0_i32_8 = arith.constant 0 : i32
    %11 = arith.cmpi ne, %10, %c0_i32_8 : i32
    scf.if %11 {
      %c0_9 = arith.constant 0 : index
      %c0_10 = arith.constant 0 : index
      %12 = vector.load %arg5[%c0_9, %c0_10] : memref<2x120xf32, #tpu.memory_space<vmem>>, vector<2x120xf32>
      %c0_11 = arith.constant 0 : index
      %c0_12 = arith.constant 0 : index
      %13 = vector.load %arg3[%c0_11, %c0_12] : memref<1x120xf32, #tpu.memory_space<vmem>>, vector<1x120xf32>
      %14 = vector.broadcast %13 : vector<1x120xf32> to vector<2x120xf32>
      %15 = arith.addf %12, %14 : vector<2x120xf32>
      %cst_13 = arith.constant 0.000000e+00 : f32
      %16 = vector.broadcast %cst_13 : f32 to vector<2x120xf32>
      %17 = arith.maximumf %15, %16 : vector<2x120xf32>
      %c0_14 = arith.constant 0 : index
      %c0_15 = arith.constant 0 : index
      %18 = vector.load %arg4[%c0_14, %c0_15] : memref<2x120xf32, #tpu.memory_space<vmem>>, vector<2x120xf32>
      tpu.vector_store %arg4[%c0_14, %c0_15], %17 {strides = array<i32>} : memref<2x120xf32, #tpu.memory_space<vmem>>, vector<2x120xf32>,
    } else {
    }
    return
  }
  func.func @transform_0(%arg0: i32) -> (i32, i32) {
    %c0_i32 = arith.constant 0 : i32
    %c0_i32_0 = arith.constant 0 : i32
    return %c0_i32, %arg0 : i32, i32
  }
  func.func @transform_1(%arg0: i32) -> (i32, i32) {
    %c0_i32 = arith.constant 0 : i32
    %c0_i32_0 = arith.constant 0 : i32
    return %arg0, %c0_i32 : i32, i32
  }
  func.func @transform_2(%arg0: i32) -> (i32, i32) {
    %c0_i32 = arith.constant 0 : i32
    %c0_i32_0 = arith.constant 0 : i32
    %c0_i32_1 = arith.constant 0 : i32
    return %c0_i32, %c0_i32_0 : i32, i32
  }
  func.func @transform_3(%arg0: i32) -> (i32, i32) {
    %c0_i32 = arith.constant 0 : i32
    %c0_i32_0 = arith.constant 0 : i32
    %c0_i32_1 = arith.constant 0 : i32
    return %c0_i32, %c0_i32_0 : i32, i32
  }
}

module attributes {stable_mosaic.version = 11 : i64} {
  func.func @_matmul_bias_single_kernel(%arg0: i32, %arg1: memref<2x120xf32, #tpu.memory_space<vmem>>, %arg2: memref<120x32xf32, #tpu.memory_space<vmem>>, %arg3: memref<1x32xf32, #tpu.memory_space<vmem>>, %arg4: memref<2x32xf32, #tpu.memory_space<vmem>>) attributes {dimension_semantics = [#tpu.dimension_semantics<arbitrary>], iteration_bounds = array<i64: 1>, scalar_prefetch = 0 : i64, scratch_operands = 0 : i64, tpu.core_type = #tpu.core_type<tc>, window_params = [{pipeline_mode = #tpu.pipeline_mode<synchronous>, transform_indices = @transform_0, window_bounds = array<i64: 2, 120>}, {pipeline_mode = #tpu.pipeline_mode<synchronous>, transform_indices = @transform_1, window_bounds = array<i64: 120, 32>}, {pipeline_mode = #tpu.pipeline_mode<synchronous>, transform_indices = @transform_2, window_bounds = array<i64: 1, 32>}, {pipeline_mode = #tpu.pipeline_mode<synchronous>, transform_indices = @transform_3, window_bounds = array<i64: 2, 32>}]} {
    %c0 = arith.constant 0 : index
    %c0_0 = arith.constant 0 : index
    %0 = vector.load %arg1[%c0, %c0_0] : memref<2x120xf32, #tpu.memory_space<vmem>>, vector<2x120xf32>
    %c0_1 = arith.constant 0 : index
    %c0_2 = arith.constant 0 : index
    %1 = vector.load %arg2[%c0_1, %c0_2] : memref<120x32xf32, #tpu.memory_space<vmem>>, vector<120x32xf32>
    %cst = arith.constant dense<0.000000e+00> : vector<2x32xf32>
    %2 = tpu.matmul %0, %1, %cst {dimension_numbers = #tpu.dot_dimension_numbers<[1], [0], [0], [1], [0, 0, 1, 1], [], []>} : vector<2x120xf32>, vector<120x32xf32>, vector<2x32xf32> -> vector<2x32xf32>
    %c0_3 = arith.constant 0 : index
    %c0_4 = arith.constant 0 : index
    %3 = vector.load %arg3[%c0_3, %c0_4] : memref<1x32xf32, #tpu.memory_space<vmem>>, vector<1x32xf32>
    %4 = vector.broadcast %3 : vector<1x32xf32> to vector<2x32xf32>
    %5 = arith.addf %2, %4 : vector<2x32xf32>
    %cst_5 = arith.constant 0.000000e+00 : f32
    %6 = vector.broadcast %cst_5 : f32 to vector<2x32xf32>
    %7 = arith.maximumf %5, %6 : vector<2x32xf32>
    %c0_6 = arith.constant 0 : index
    %c0_7 = arith.constant 0 : index
    %8 = vector.load %arg4[%c0_6, %c0_7] : memref<2x32xf32, #tpu.memory_space<vmem>>, vector<2x32xf32>
    tpu.vector_store %arg4[%c0_6, %c0_7], %7 {strides = array<i32>} : memref<2x32xf32, #tpu.memory_space<vmem>>, vector<2x32xf32>,
    return
  }
  func.func @transform_0(%arg0: i32) -> (i32, i32) {
    %c0_i32 = arith.constant 0 : i32
    %c0_i32_0 = arith.constant 0 : i32
    %c0_i32_1 = arith.constant 0 : i32
    return %c0_i32, %c0_i32_0 : i32, i32
  }
  func.func @transform_1(%arg0: i32) -> (i32, i32) {
    %c0_i32 = arith.constant 0 : i32
    %c0_i32_0 = arith.constant 0 : i32
    %c0_i32_1 = arith.constant 0 : i32
    return %c0_i32, %c0_i32_0 : i32, i32
  }
  func.func @transform_2(%arg0: i32) -> (i32, i32) {
    %c0_i32 = arith.constant 0 : i32
    %c0_i32_0 = arith.constant 0 : i32
    %c0_i32_1 = arith.constant 0 : i32
    return %c0_i32, %c0_i32_0 : i32, i32
  }
  func.func @transform_3(%arg0: i32) -> (i32, i32) {
    %c0_i32 = arith.constant 0 : i32
    %c0_i32_0 = arith.constant 0 : i32
    %c0_i32_1 = arith.constant 0 : i32
    return %c0_i32, %c0_i32_0 : i32, i32
  }
}

module attributes {stable_mosaic.version = 11 : i64} {
  func.func @_matmul_bias_single_kernel(%arg0: i32, %arg1: memref<2x32xf32, #tpu.memory_space<vmem>>, %arg2: memref<32x5xf32, #tpu.memory_space<vmem>>, %arg3: memref<1x5xf32, #tpu.memory_space<vmem>>, %arg4: memref<2x5xf32, #tpu.memory_space<vmem>>) attributes {dimension_semantics = [#tpu.dimension_semantics<arbitrary>], iteration_bounds = array<i64: 1>, scalar_prefetch = 0 : i64, scratch_operands = 0 : i64, tpu.core_type = #tpu.core_type<tc>, window_params = [{pipeline_mode = #tpu.pipeline_mode<synchronous>, transform_indices = @transform_0, window_bounds = array<i64: 2, 32>}, {pipeline_mode = #tpu.pipeline_mode<synchronous>, transform_indices = @transform_1, window_bounds = array<i64: 32, 5>}, {pipeline_mode = #tpu.pipeline_mode<synchronous>, transform_indices = @transform_2, window_bounds = array<i64: 1, 5>}, {pipeline_mode = #tpu.pipeline_mode<synchronous>, transform_indices = @transform_3, window_bounds = array<i64: 2, 5>}]} {
    %c0 = arith.constant 0 : index
    %c0_0 = arith.constant 0 : index
    %0 = vector.load %arg1[%c0, %c0_0] : memref<2x32xf32, #tpu.memory_space<vmem>>, vector<2x32xf32>
    %c0_1 = arith.constant 0 : index
    %c0_2 = arith.constant 0 : index
    %1 = vector.load %arg2[%c0_1, %c0_2] : memref<32x5xf32, #tpu.memory_space<vmem>>, vector<32x5xf32>
    %cst = arith.constant dense<0.000000e+00> : vector<2x5xf32>
    %2 = tpu.matmul %0, %1, %cst {dimension_numbers = #tpu.dot_dimension_numbers<[1], [0], [0], [1], [0, 0, 1, 1], [], []>} : vector<2x32xf32>, vector<32x5xf32>, vector<2x5xf32> -> vector<2x5xf32>
    %c0_3 = arith.constant 0 : index
    %c0_4 = arith.constant 0 : index
    %3 = vector.load %arg3[%c0_3, %c0_4] : memref<1x5xf32, #tpu.memory_space<vmem>>, vector<1x5xf32>
    %4 = vector.broadcast %3 : vector<1x5xf32> to vector<2x5xf32>
    %5 = arith.addf %2, %4 : vector<2x5xf32>
    %c0_5 = arith.constant 0 : index
    %c0_6 = arith.constant 0 : index
    %6 = vector.load %arg4[%c0_5, %c0_6] : memref<2x5xf32, #tpu.memory_space<vmem>>, vector<2x5xf32>
    tpu.vector_store %arg4[%c0_5, %c0_6], %5 {strides = array<i32>} : memref<2x5xf32, #tpu.memory_space<vmem>>, vector<2x5xf32>,
    return
  }
  func.func @transform_0(%arg0: i32) -> (i32, i32) {
    %c0_i32 = arith.constant 0 : i32
    %c0_i32_0 = arith.constant 0 : i32
    %c0_i32_1 = arith.constant 0 : i32
    return %c0_i32, %c0_i32_0 : i32, i32
  }
  func.func @transform_1(%arg0: i32) -> (i32, i32) {
    %c0_i32 = arith.constant 0 : i32
    %c0_i32_0 = arith.constant 0 : i32
    %c0_i32_1 = arith.constant 0 : i32
    return %c0_i32, %c0_i32_0 : i32, i32
  }
  func.func @transform_2(%arg0: i32) -> (i32, i32) {
    %c0_i32 = arith.constant 0 : i32
    %c0_i32_0 = arith.constant 0 : i32
    %c0_i32_1 = arith.constant 0 : i32
    return %c0_i32, %c0_i32_0 : i32, i32
  }
  func.func @transform_3(%arg0: i32) -> (i32, i32) {
    %c0_i32 = arith.constant 0 : i32
    %c0_i32_0 = arith.constant 0 : i32
    %c0_i32_1 = arith.constant 0 : i32
    return %c0_i32, %c0_i32_0 : i32, i32
  }
}

</mosaic_0001>

<llo_original>
// kernel: cnn_forward.5
$region0: #{cnn_forward.5}
  #allocation0 [shape = 'u32[]', space=smem, size = 0x4, offset = 0x4, fixed_abs, tag = 'smem constant byte address 0x4 - core index']
  #allocation1 [shape = 'u32[72,128]{1,0:T(1,128)}', space=vmem, size = 0x9000, scoped, tag = 'internal scratch']
  #allocation2 [shape = 'f32[108,124]{1,0:T(8,128)}', space=vmem, size = 0xe000, scoped, tag = 'scratch operand']
  %s0 = inlined_call_operand.vmem [shape: f32[24,108], index: 0, kind: input, shape index: {}]
  %s1 = inlined_call_operand.vmem [shape: f32[6,1], index: 1, kind: input, shape index: {}]
  %s2 = inlined_call_operand.vmem [shape: f32[2,6,252,126], index: 2, kind: input, shape index: {}]
  %s3 = inlined_call_operand.vmem [shape: f32[2,124,6,124], index: 3, kind: output, shape index: {}]
  %s4 = sld [smem:[#allocation0]]
  $region52: #{cnn_forward.5} parent=0
    _
  %s6 = ssub.s32 1, %s4
  %s7 = scalar_select 0, %s6, %s4
  loop: start=0, step=1, limit=4
  $region2: #{cnn_forward.5} parent=0 // loop_pre_header
    _
  $region3: #{cnn_forward.5} parent=0 // loop_header
    %s9 = sphi 0, %s13
    %p10 = scmp.ge.s32.totalorder %s9, 4
    %s17 = sphi 0, %s17
    %s19 = sphi 0, %s17
    %s20 = sphi 0, %s19
    %s34 = sphi 0, %s20
    %s38 = sphi 0, %s38
    %s40 = sphi 0, %s38
    %s41 = sphi 0, %s40
    %s55 = sphi 0, %s41
    %s61 = sphi 0, %s63
    %s64 = sphi 0, %s61
    %s65 = sphi 0, %s64
    %s81 = sphi 0, %s65
    %s87 = sphi 0, %s89
    %s90 = sphi 0, %s87
    %s91 = sphi 0, %s90
    %s107 = sphi 0, %s91
  $region4: #{cnn_forward.5} parent=0 // loop_header_branch
    %12 = sbr.rel (%p10) target = $region8
  $region5: #{cnn_forward.5} parent=0 // loop_body
    %s14 = ssub.s32 %s9, 1
    %s15 = ssub.s32 %s9, 2
    %s16 = sadd.s32 %s9, 1
    %s18 = sadd.s32 %s17, 1
    %p21 = scmp.eq.s32.totalorder %s9, 1
    %p22 = scmp.ne.s32.totalorder %s17, %s19
    %p23 = scmp.eq.s32.totalorder %s9, 0
    %p24 = por %p22, %p23
    %p25 = scmp.ne.s32.totalorder %s17, %s19
    %p26 = scmp.eq.s32.totalorder %s14, 1
    %p27 = por %p25, %p26
    %p28 = scmp.ne.s32.totalorder %s19, %s20
    %p29 = scmp.eq.s32.totalorder %s14, 0
    %p30 = por %p28, %p29
    %p31 = scmp.ne.s32.totalorder %s19, %s20
    %p32 = scmp.eq.s32.totalorder %s15, 1
    %p33 = por %p31, %p32
    %p35 = scmp.ne.s32.totalorder %s20, %s34
    %p36 = scmp.eq.s32.totalorder %s15, 0
    %p37 = por %p35, %p36
    %s39 = sadd.s32 %s38, 1
    %p42 = scmp.eq.s32.totalorder %s9, 1
    %p43 = scmp.ne.s32.totalorder %s38, %s40
    %p44 = scmp.eq.s32.totalorder %s9, 0
    %p45 = por %p43, %p44
    %p46 = scmp.ne.s32.totalorder %s38, %s40
    %p47 = scmp.eq.s32.totalorder %s14, 1
    %p48 = por %p46, %p47
    %p49 = scmp.ne.s32.totalorder %s40, %s41
    %p50 = scmp.eq.s32.totalorder %s14, 0
    %p51 = por %p49, %p50
    %p52 = scmp.ne.s32.totalorder %s40, %s41
    %p53 = scmp.eq.s32.totalorder %s15, 1
    %p54 = por %p52, %p53
    %p56 = scmp.ne.s32.totalorder %s41, %s55
    %p57 = scmp.eq.s32.totalorder %s15, 0
    %p58 = por %p56, %p57
    %s59 = ssub.s32 %s9, %s16
    %p60 = scmp.eq.s32.totalorder %s59, 0
    %s62 = sadd.s32 %s61, 1
    %s63 = scalar_select %p60, %s61, %s62
    %p66 = pneg %p60
    %p67 = scmp.eq.s32.totalorder %s9, 1
    %p68 = por %p66, %p67
    %p69 = scmp.ne.s32.totalorder %s61, %s64
    %p70 = scmp.eq.s32.totalorder %s9, 0
    %p71 = por %p69, %p70
    %p72 = scmp.ne.s32.totalorder %s61, %s64
    %p73 = scmp.eq.s32.totalorder %s14, 1
    %p74 = por %p72, %p73
    %p75 = scmp.ne.s32.totalorder %s64, %s65
    %p76 = scmp.eq.s32.totalorder %s14, 0
    %p77 = por %p75, %p76
    %p78 = scmp.ne.s32.totalorder %s64, %s65
    %p79 = scmp.eq.s32.totalorder %s15, 1
    %p80 = por %p78, %p79
    %p82 = scmp.ne.s32.totalorder %s65, %s81
    %p83 = scmp.eq.s32.totalorder %s15, 0
    %p84 = por %p82, %p83
    %s85 = ssub.s32 %s9, %s16
    %p86 = scmp.eq.s32.totalorder %s85, 0
    %s88 = sadd.s32 %s87, 1
    %s89 = scalar_select %p86, %s87, %s88
    %p92 = pneg %p86
    %p93 = scmp.eq.s32.totalorder %s9, 1
    %p94 = por %p92, %p93
    %p95 = scmp.ne.s32.totalorder %s87, %s90
    %p96 = scmp.eq.s32.totalorder %s9, 0
    %p97 = por %p95, %p96
    %p98 = scmp.ne.s32.totalorder %s87, %s90
    %p99 = scmp.eq.s32.totalorder %s14, 1
    %p100 = por %p98, %p99
    %p101 = scmp.ne.s32.totalorder %s90, %s91
    %p102 = scmp.eq.s32.totalorder %s14, 0
    %p103 = por %p101, %p102
    %p104 = scmp.ne.s32.totalorder %s90, %s91
    %p105 = scmp.eq.s32.totalorder %s15, 1
    %p106 = por %p104, %p105
    %p108 = scmp.ne.s32.totalorder %s91, %s107
    %p109 = scmp.eq.s32.totalorder %s15, 0
    %p110 = por %p108, %p109
    %p111 = scmp.le.s32.totalorder 1, %s9
    %p112 = scmp.lt.s32.totalorder %s9, 3
    %p113 = pnand %p111, %p112
    %p114 = pneg %p113
    // Predicated region
    $region9: #{cnn_forward.5} parent=5 // pred_check
      _
    $region10: #{cnn_forward.5} parent=5 // pred_check_branch
      %116 = sbr.rel (%p113) target = $region12
    $region11: #{cnn_forward.5} parent=5 // pred_region
      %s117 = ssub.s32 %s9, 1
      // Predicated region
      $region13: #{cnn_forward.5} parent=11 // pred_check
        %p118 = pneg %p30
      $region14: #{cnn_forward.5} parent=11 // pred_check_branch
        %120 = sbr.rel (%p118) target = $region16
      $region15: #{cnn_forward.5} parent=11 // pred_region
        _
      $region16: #{cnn_forward.5} parent=11 // pred_fallthru
        _
      // Predicated region
      $region17: #{cnn_forward.5} parent=11 // pred_check
        %p121 = pneg %p51
      $region18: #{cnn_forward.5} parent=11 // pred_check_branch
        %123 = sbr.rel (%p121) target = $region20
      $region19: #{cnn_forward.5} parent=11 // pred_region
        _
      $region20: #{cnn_forward.5} parent=11 // pred_fallthru
        _
    $region12: #{cnn_forward.5} parent=5 // pred_fallthru
      _
    %p124 = scmp.lt.s32.totalorder %s9, 2
    // Predicated region
    $region21: #{cnn_forward.5} parent=5 // pred_check
      %p125 = pneg %p124
    $region22: #{cnn_forward.5} parent=5 // pred_check_branch
      %127 = sbr.rel (%p125) target = $region24
    $region23: #{cnn_forward.5} parent=5 // pred_region
      // Predicated region
      $region25: #{cnn_forward.5} parent=23 // pred_check
        %p128 = pneg %p71
      $region26: #{cnn_forward.5} parent=23 // pred_check_branch
        %130 = sbr.rel (%p128) target = $region28
      $region27: #{cnn_forward.5} parent=23 // pred_region
        %p131 = scmp.lt.s32.totalorder %s9, 1
        %s132 = scalar_select %p131, %s9, 1
        %s133 = smul.addr %s132, 192
        %s134 = smul.addr %s133, 8
        %s135 = scalar_lea.vmem %s2, %s134
      $region28: #{cnn_forward.5} parent=23 // pred_fallthru
        _
    $region24: #{cnn_forward.5} parent=5 // pred_fallthru
      _
    %p136 = scmp.le.s32.totalorder 1, %s9
    %p137 = scmp.lt.s32.totalorder %s9, 3
    %p138 = pnand %p136, %p137
    %p139 = pneg %p138
    // Predicated region
    $region29: #{cnn_forward.5} parent=5 // pred_check
      _
    $region30: #{cnn_forward.5} parent=5 // pred_check_branch
      %141 = sbr.rel (%p138) target = $region32
    $region31: #{cnn_forward.5} parent=5 // pred_region
      %s142 = ssub.s32 %s9, 1
      %p143 = pneg %p30
      %p144 = pneg %p27
      %p145 = pneg %p51
      %p146 = pneg %p48
      %p147 = scmp.lt.s32.totalorder %s14, 1
      %s148 = scalar_select %p147, %s14, 1
      %s149 = smul.addr %s148, 192
      %s150 = smul.addr %s149, 8
      %s151 = scalar_lea.vmem %s2, %s150
      %p152 = pneg %p77
      %p153 = pneg %p74
      %p154 = pneg %p103
      %p155 = pneg %p100
      %p156 = scmp.lt.s32.totalorder %s14, 1
      %s157 = scalar_select %p156, %s14, 1
      %s158 = smul.addr %s157, 124
      %s159 = smul.addr %s158, 8
      %s160 = scalar_lea.vmem %s3, %s159
      %p161 = scmp.lt.s32.totalorder %s14, 1
      %s162 = scalar_select %p161, %s14, 1
      %s163 = smul.addr %s162, 192
      %s164 = smul.addr %s163, 8
      %s165 = scalar_lea.vmem %s2, %s164
      %p166 = scmp.lt.s32.totalorder %s14, 1
      %s167 = scalar_select %p166, %s14, 1
      %s168 = smul.addr %s167, 124
      %s169 = smul.addr %s168, 8
      %s170 = scalar_lea.vmem %s3, %s169
      loop: start=0, step=1, limit=124
      $region33: #{cnn_forward.5} parent=31 // loop_pre_header
        _
      $region34: #{cnn_forward.5} parent=31 // loop_header
        %s172 = sphi 0, %s176
        %p173 = scmp.ge.s32.totalorder %s172, 124
      $region35: #{cnn_forward.5} parent=31 // loop_header_branch
        %175 = sbr.rel (%p173) target = $region39
      $region36: #{cnn_forward.5} parent=31 // loop_body
        %s177 = smul.u32 %s172, 2
        %s178 = scalar_lea.vmem %s165, %s177
        %v179 = vld [vmem:[%s178] sm:$0x3f]
        %vm180 = vcmask 1012736
        %181 = vst.msk [vmem:[#allocation2] sm:$0x3f] %vm180, %v179
        %v182 = vld [vmem:[%s178] sm:$0x3f]
        %184 = vrot.lane.b32.xlu0 %v182, 127
        %v185 = vpop.permute.xlu0 %184
        %187 = vst.msk [vmem:[#allocation2 + $0x6] sm:$0x3f] %vm180, %v185
        %v188 = vld [vmem:[%s178] sm:$0x3f]
        %190 = vrot.lane.b32.xlu0 %v188, 126
        %v191 = vpop.permute.xlu0 %190
        %193 = vst.msk [vmem:[#allocation2 + $0xc] sm:$0x3f] %vm180, %v191
        %s194 = sadd.s32 %s177, 256
        %s195 = scalar_lea.vmem %s165, %s194
        %v196 = vld [vmem:[%s195] sm:$0x3f]
        %197 = vst.msk [vmem:[#allocation2 + $0x12] sm:$0x3f] %vm180, %v196
        %v198 = vld [vmem:[%s195] sm:$0x3f]
        %200 = vrot.lane.b32.xlu0 %v198, 127
        %v201 = vpop.permute.xlu0 %200
        %203 = vst.msk [vmem:[#allocation2 + $0x18] sm:$0x3f] %vm180, %v201
        %v204 = vld [vmem:[%s195] sm:$0x3f]
        %206 = vrot.lane.b32.xlu0 %v204, 126
        %v207 = vpop.permute.xlu0 %206
        %209 = vst.msk [vmem:[#allocation2 + $0x1e] sm:$0x3f] %vm180, %v207
        %s210 = sadd.s32 %s177, 512
        %s211 = scalar_lea.vmem %s165, %s210
        %v212 = vld [vmem:[%s211] sm:$0x3f]
        %213 = vst.msk [vmem:[#allocation2 + $0x24] sm:$0x3f] %vm180, %v212
        %v214 = vld [vmem:[%s211] sm:$0x3f]
        %216 = vrot.lane.b32.xlu0 %v214, 127
        %v217 = vpop.permute.xlu0 %216
        %219 = vst.msk [vmem:[#allocation2 + $0x2a] sm:$0x3f] %vm180, %v217
        %v220 = vld [vmem:[%s211] sm:$0x3f]
        %222 = vrot.lane.b32.xlu0 %v220, 126
        %v223 = vpop.permute.xlu0 %222
        %225 = vst.msk [vmem:[#allocation2 + $0x30] sm:$0x3f] %vm180, %v223
        %s226 = sadd.s32 %s177, 768
        %s227 = scalar_lea.vmem %s165, %s226
        %v228 = vld [vmem:[%s227] sm:$0x3f]
        %229 = vst.msk [vmem:[#allocation2 + $0x36] sm:$0x3f] %vm180, %v228
        %v230 = vld [vmem:[%s227] sm:$0x3f]
        %232 = vrot.lane.b32.xlu0 %v230, 127
        %v233 = vpop.permute.xlu0 %232
        %235 = vst.msk [vmem:[#allocation2 + $0x3c] sm:$0x3f] %vm180, %v233
        %v236 = vld [vmem:[%s227] sm:$0x3f]
        %238 = vrot.lane.b32.xlu0 %v236, 126
        %v239 = vpop.permute.xlu0 %238
        %241 = vst.msk [vmem:[#allocation2 + $0x42] sm:$0x3f] %vm180, %v239
        %s242 = sadd.s32 %s177, 1024
        %s243 = scalar_lea.vmem %s165, %s242
        %v244 = vld [vmem:[%s243] sm:$0x3f]
        %245 = vst.msk [vmem:[#allocation2 + $0x48] sm:$0x3f] %vm180, %v244
        %v246 = vld [vmem:[%s243] sm:$0x3f]
        %248 = vrot.lane.b32.xlu0 %v246, 127
        %v249 = vpop.permute.xlu0 %248
        %251 = vst.msk [vmem:[#allocation2 + $0x4e] sm:$0x3f] %vm180, %v249
        %v252 = vld [vmem:[%s243] sm:$0x3f]
        %254 = vrot.lane.b32.xlu0 %v252, 126
        %v255 = vpop.permute.xlu0 %254
        %257 = vst.msk [vmem:[#allocation2 + $0x54] sm:$0x3f] %vm180, %v255
        %s258 = sadd.s32 %s177, 1280
        %s259 = scalar_lea.vmem %s165, %s258
        %v260 = vld [vmem:[%s259] sm:$0x3f]
        %261 = vst.msk [vmem:[#allocation2 + $0x5a] sm:$0x3f] %vm180, %v260
        %v262 = vld [vmem:[%s259] sm:$0x3f]
        %264 = vrot.lane.b32.xlu0 %v262, 127
        %v265 = vpop.permute.xlu0 %264
        %267 = vst.msk [vmem:[#allocation2 + $0x60] sm:$0x3f] %vm180, %v265
        %v268 = vld [vmem:[%s259] sm:$0x3f]
        %270 = vrot.lane.b32.xlu0 %v268, 126
        %v271 = vpop.permute.xlu0 %270
        %273 = vst.msk [vmem:[#allocation2 + $0x66] sm:$0x3f] %vm180, %v271
        %v274 = vld [vmem:[%s0] sm:$0xff]
        %v275 = vld [vmem:[%s0 + $0x8] sm:$0xff]
        %v276 = vld [vmem:[%s0 + $0x10] sm:$0xff]
        %v277 = vld [vmem:[#allocation2] sm:$0xff]
        %v278 = vld [vmem:[#allocation2 + $0x8] sm:$0xff]
        %v279 = vld [vmem:[#allocation2 + $0x10] sm:$0xff]
        %v280 = vld [vmem:[#allocation2 + $0x18] sm:$0xff]
        %v281 = vld [vmem:[#allocation2 + $0x20] sm:$0xff]
        %v282 = vld [vmem:[#allocation2 + $0x28] sm:$0xff]
        %v283 = vld [vmem:[#allocation2 + $0x30] sm:$0xff]
        %v284 = vld [vmem:[#allocation2 + $0x38] sm:$0xff]
        %v285 = vld [vmem:[#allocation2 + $0x40] sm:$0xff]
        %v286 = vld [vmem:[#allocation2 + $0x48] sm:$0xff]
        %v287 = vld [vmem:[#allocation2 + $0x50] sm:$0xff]
        %v288 = vld [vmem:[#allocation2 + $0x58] sm:$0xff]
        %v289 = vld [vmem:[#allocation2 + $0x60] sm:$0xff]
        %v290 = vld [vmem:[#allocation2 + $0x68] sm:$0xf]
        %vm291 = vcmask 883712
        %v293 = vsel %vm291, %v274, 0
        %v296 = vsel %vm291, %v275, 0
        %v299 = vsel %vm291, %v276, 0
        %vm301 = vcmask 1043456
        %v303 = vsel %vm301, %v290, 0
        %305 = vmatpush.msra.mxu0 0.0
        %306 = vmatpush.msra.mxu0 0.0
        %307 = vmatpush.msra.mxu0 %v303
        %308 = vmatpush.msra.mxu0 %v289
        %309 = vmatpush.msra.mxu0 %v288
        %310 = vmatpush.msra.mxu0 %v287
        %311 = vmatpush.msra.mxu0 %v286
        %312 = vmatpush.msra.mxu0 %v285
        %313 = vmatpush.msra.mxu0 %v284
        %314 = vmatpush.msra.mxu0 %v283
        %315 = vmatpush.msra.mxu0 %v282
        %316 = vmatpush.msra.mxu0 %v281
        %317 = vmatpush.msra.mxu0 %v280
        %318 = vmatpush.msra.mxu0 %v279
        %319 = vmatpush.msra.mxu0 %v278
        %320 = vmatpush.msra.mxu0 %v277
        %321 = vmatmul.f32.gmra.mxu0 %v293
        %v322 = vpop.f32.mrf.mxu0
        %v323 = vadd.f32 0.0, %v322
        %324 = vmatmul.f32.gmra.mxu0 %v296
        %v325 = vpop.f32.mrf.mxu0
        %v326 = vadd.f32 0.0, %v325
        %327 = vmatmul.f32.gmra.mxu0 %v299
        %v328 = vpop.f32.mrf.mxu0
        %v329 = vadd.f32 0.0, %v328
        %330 = vdwg.mxu0
        %vm333 = vcmask 1041408
        %v334 = vrot.slane %v323, 6
        %v335 = vrot.slane %v326, 6
        %v336 = vsel %vm333, %v334, %v335
        %v338 = vmax.f32 %v323, %v336
        %v340 = vrot.slane %v329, 6
        %v342 = vmax.f32 %v326, %v340
        %v343 = vmax.f32 %v329, %v340
        %v346 = vrot.slane %v342, 4
        %v347 = vrot.slane %v343, 4
        %v348 = vsel %vm301, %v346, %v347
        %v350 = vmax.f32 %v338, %v348
        %v351 = vld [vmem:[%s1] sm:$0x3f]
        %353 = vset.pattern.permute.xlu0 0
        %354 = vperm.xlu0 %353, %v351
        %v355 = vpop.permute.xlu0 %354
        %v357 = vadd.f32 %v350, %v355
        %v358 = vmax.f32 %v357, 0.0
        %s359 = smul.u32 %s172, 8
        %s360 = scalar_lea.vmem %s170, %s359
        %361 = vst.msk [vmem:[%s360] sm:$0x3f] %vm180, %v358
      $region37: #{cnn_forward.5} parent=31 // loop_footer
        %s176 = sadd.s32 1, %s172
      $region38: #{cnn_forward.5} parent=31 // loop_footer_branch
        %171 = sbr.rel target = $region34
      $region39: #{cnn_forward.5} parent=31 // loop_exit
        _
      %p362 = scmp.lt.s32.totalorder %s14, 1
      %s363 = scalar_select %p362, %s14, 1
      %s364 = smul.addr %s363, 124
      %s365 = smul.addr %s364, 8
      %s366 = scalar_lea.vmem %s3, %s365
      // Predicated region
      $region40: #{cnn_forward.5} parent=31 // pred_check
        %p367 = pneg %p100
      $region41: #{cnn_forward.5} parent=31 // pred_check_branch
        %369 = sbr.rel (%p367) target = $region43
      $region42: #{cnn_forward.5} parent=31 // pred_region
        _
      $region43: #{cnn_forward.5} parent=31 // pred_fallthru
        _
    $region32: #{cnn_forward.5} parent=5 // pred_fallthru
      _
    %p370 = scmp.le.s32.totalorder 2, %s9
    // Predicated region
    $region44: #{cnn_forward.5} parent=5 // pred_check
      %p371 = pneg %p370
    $region45: #{cnn_forward.5} parent=5 // pred_check_branch
      %373 = sbr.rel (%p371) target = $region47
    $region46: #{cnn_forward.5} parent=5 // pred_region
      %s374 = ssub.s32 %s9, 2
      // Predicated region
      $region48: #{cnn_forward.5} parent=46 // pred_check
        %p375 = pneg %p106
      $region49: #{cnn_forward.5} parent=46 // pred_check_branch
        %377 = sbr.rel (%p375) target = $region51
      $region50: #{cnn_forward.5} parent=46 // pred_region
        %p378 = scmp.lt.s32.totalorder %s15, 1
        %s379 = scalar_select %p378, %s15, 1
        %s380 = smul.addr %s379, 124
        %s381 = smul.addr %s380, 8
        %s382 = scalar_lea.vmem %s3, %s381
      $region51: #{cnn_forward.5} parent=46 // pred_fallthru
        _
    $region47: #{cnn_forward.5} parent=5 // pred_fallthru
      _
  $region6: #{cnn_forward.5} parent=0 // loop_footer
    %s13 = sadd.s32 1, %s9
  $region7: #{cnn_forward.5} parent=0 // loop_footer_branch
    %8 = sbr.rel target = $region3
  $region8: #{cnn_forward.5} parent=0 // loop_exit
    _

// kernel: cnn_forward.6
$region0: #{cnn_forward.6}
  #allocation0 [shape = 'u32[]', space=smem, size = 0x4, offset = 0x4, fixed_abs, tag = 'smem constant byte address 0x4 - core index']
  #allocation1 [shape = 'u32[72,128]{1,0:T(1,128)}', space=vmem, size = 0x9000, scoped, tag = 'internal scratch']
  #allocation2 [shape = 'f32[216,60]{1,0:T(8,128)}', space=vmem, size = 0x1b000, scoped, tag = 'scratch operand']
  %s0 = inlined_call_operand.vmem [shape: f32[64,216], index: 0, kind: input, shape index: {}]
  %s1 = inlined_call_operand.vmem [shape: f32[16,1], index: 1, kind: input, shape index: {}]
  %s2 = inlined_call_operand.vmem [shape: f32[2,12,124,62], index: 2, kind: input, shape index: {}]
  %s3 = inlined_call_operand.vmem [shape: f32[2,60,16,60], index: 3, kind: output, shape index: {}]
  %s4 = sld [smem:[#allocation0]]
  $region52: #{cnn_forward.6} parent=0
    _
  %s6 = ssub.s32 1, %s4
  %s7 = scalar_select 0, %s6, %s4
  loop: start=0, step=1, limit=4
  $region2: #{cnn_forward.6} parent=0 // loop_pre_header
    _
  $region3: #{cnn_forward.6} parent=0 // loop_header
    %s9 = sphi 0, %s13
    %p10 = scmp.ge.s32.totalorder %s9, 4
    %s17 = sphi 0, %s17
    %s19 = sphi 0, %s17
    %s20 = sphi 0, %s19
    %s34 = sphi 0, %s20
    %s38 = sphi 0, %s38
    %s40 = sphi 0, %s38
    %s41 = sphi 0, %s40
    %s55 = sphi 0, %s41
    %s61 = sphi 0, %s63
    %s64 = sphi 0, %s61
    %s65 = sphi 0, %s64
    %s81 = sphi 0, %s65
    %s87 = sphi 0, %s89
    %s90 = sphi 0, %s87
    %s91 = sphi 0, %s90
    %s107 = sphi 0, %s91
  $region4: #{cnn_forward.6} parent=0 // loop_header_branch
    %12 = sbr.rel (%p10) target = $region8
  $region5: #{cnn_forward.6} parent=0 // loop_body
    %s14 = ssub.s32 %s9, 1
    %s15 = ssub.s32 %s9, 2
    %s16 = sadd.s32 %s9, 1
    %s18 = sadd.s32 %s17, 1
    %p21 = scmp.eq.s32.totalorder %s9, 1
    %p22 = scmp.ne.s32.totalorder %s17, %s19
    %p23 = scmp.eq.s32.totalorder %s9, 0
    %p24 = por %p22, %p23
    %p25 = scmp.ne.s32.totalorder %s17, %s19
    %p26 = scmp.eq.s32.totalorder %s14, 1
    %p27 = por %p25, %p26
    %p28 = scmp.ne.s32.totalorder %s19, %s20
    %p29 = scmp.eq.s32.totalorder %s14, 0
    %p30 = por %p28, %p29
    %p31 = scmp.ne.s32.totalorder %s19, %s20
    %p32 = scmp.eq.s32.totalorder %s15, 1
    %p33 = por %p31, %p32
    %p35 = scmp.ne.s32.totalorder %s20, %s34
    %p36 = scmp.eq.s32.totalorder %s15, 0
    %p37 = por %p35, %p36
    %s39 = sadd.s32 %s38, 1
    %p42 = scmp.eq.s32.totalorder %s9, 1
    %p43 = scmp.ne.s32.totalorder %s38, %s40
    %p44 = scmp.eq.s32.totalorder %s9, 0
    %p45 = por %p43, %p44
    %p46 = scmp.ne.s32.totalorder %s38, %s40
    %p47 = scmp.eq.s32.totalorder %s14, 1
    %p48 = por %p46, %p47
    %p49 = scmp.ne.s32.totalorder %s40, %s41
    %p50 = scmp.eq.s32.totalorder %s14, 0
    %p51 = por %p49, %p50
    %p52 = scmp.ne.s32.totalorder %s40, %s41
    %p53 = scmp.eq.s32.totalorder %s15, 1
    %p54 = por %p52, %p53
    %p56 = scmp.ne.s32.totalorder %s41, %s55
    %p57 = scmp.eq.s32.totalorder %s15, 0
    %p58 = por %p56, %p57
    %s59 = ssub.s32 %s9, %s16
    %p60 = scmp.eq.s32.totalorder %s59, 0
    %s62 = sadd.s32 %s61, 1
    %s63 = scalar_select %p60, %s61, %s62
    %p66 = pneg %p60
    %p67 = scmp.eq.s32.totalorder %s9, 1
    %p68 = por %p66, %p67
    %p69 = scmp.ne.s32.totalorder %s61, %s64
    %p70 = scmp.eq.s32.totalorder %s9, 0
    %p71 = por %p69, %p70
    %p72 = scmp.ne.s32.totalorder %s61, %s64
    %p73 = scmp.eq.s32.totalorder %s14, 1
    %p74 = por %p72, %p73
    %p75 = scmp.ne.s32.totalorder %s64, %s65
    %p76 = scmp.eq.s32.totalorder %s14, 0
    %p77 = por %p75, %p76
    %p78 = scmp.ne.s32.totalorder %s64, %s65
    %p79 = scmp.eq.s32.totalorder %s15, 1
    %p80 = por %p78, %p79
    %p82 = scmp.ne.s32.totalorder %s65, %s81
    %p83 = scmp.eq.s32.totalorder %s15, 0
    %p84 = por %p82, %p83
    %s85 = ssub.s32 %s9, %s16
    %p86 = scmp.eq.s32.totalorder %s85, 0
    %s88 = sadd.s32 %s87, 1
    %s89 = scalar_select %p86, %s87, %s88
    %p92 = pneg %p86
    %p93 = scmp.eq.s32.totalorder %s9, 1
    %p94 = por %p92, %p93
    %p95 = scmp.ne.s32.totalorder %s87, %s90
    %p96 = scmp.eq.s32.totalorder %s9, 0
    %p97 = por %p95, %p96
    %p98 = scmp.ne.s32.totalorder %s87, %s90
    %p99 = scmp.eq.s32.totalorder %s14, 1
    %p100 = por %p98, %p99
    %p101 = scmp.ne.s32.totalorder %s90, %s91
    %p102 = scmp.eq.s32.totalorder %s14, 0
    %p103 = por %p101, %p102
    %p104 = scmp.ne.s32.totalorder %s90, %s91
    %p105 = scmp.eq.s32.totalorder %s15, 1
    %p106 = por %p104, %p105
    %p108 = scmp.ne.s32.totalorder %s91, %s107
    %p109 = scmp.eq.s32.totalorder %s15, 0
    %p110 = por %p108, %p109
    %p111 = scmp.le.s32.totalorder 1, %s9
    %p112 = scmp.lt.s32.totalorder %s9, 3
    %p113 = pnand %p111, %p112
    %p114 = pneg %p113
    // Predicated region
    $region9: #{cnn_forward.6} parent=5 // pred_check
      _
    $region10: #{cnn_forward.6} parent=5 // pred_check_branch
      %116 = sbr.rel (%p113) target = $region12
    $region11: #{cnn_forward.6} parent=5 // pred_region
      %s117 = ssub.s32 %s9, 1
      // Predicated region
      $region13: #{cnn_forward.6} parent=11 // pred_check
        %p118 = pneg %p30
      $region14: #{cnn_forward.6} parent=11 // pred_check_branch
        %120 = sbr.rel (%p118) target = $region16
      $region15: #{cnn_forward.6} parent=11 // pred_region
        _
      $region16: #{cnn_forward.6} parent=11 // pred_fallthru
        _
      // Predicated region
      $region17: #{cnn_forward.6} parent=11 // pred_check
        %p121 = pneg %p51
      $region18: #{cnn_forward.6} parent=11 // pred_check_branch
        %123 = sbr.rel (%p121) target = $region20
      $region19: #{cnn_forward.6} parent=11 // pred_region
        _
      $region20: #{cnn_forward.6} parent=11 // pred_fallthru
        _
    $region12: #{cnn_forward.6} parent=5 // pred_fallthru
      _
    %p124 = scmp.lt.s32.totalorder %s9, 2
    // Predicated region
    $region21: #{cnn_forward.6} parent=5 // pred_check
      %p125 = pneg %p124
    $region22: #{cnn_forward.6} parent=5 // pred_check_branch
      %127 = sbr.rel (%p125) target = $region24
    $region23: #{cnn_forward.6} parent=5 // pred_region
      // Predicated region
      $region25: #{cnn_forward.6} parent=23 // pred_check
        %p128 = pneg %p71
      $region26: #{cnn_forward.6} parent=23 // pred_check_branch
        %130 = sbr.rel (%p128) target = $region28
      $region27: #{cnn_forward.6} parent=23 // pred_region
        %p131 = scmp.lt.s32.totalorder %s9, 1
        %s132 = scalar_select %p131, %s9, 1
        %s133 = smul.addr %s132, 192
        %s134 = smul.addr %s133, 8
        %s135 = scalar_lea.vmem %s2, %s134
      $region28: #{cnn_forward.6} parent=23 // pred_fallthru
        _
    $region24: #{cnn_forward.6} parent=5 // pred_fallthru
      _
    %p136 = scmp.le.s32.totalorder 1, %s9
    %p137 = scmp.lt.s32.totalorder %s9, 3
    %p138 = pnand %p136, %p137
    %p139 = pneg %p138
    // Predicated region
    $region29: #{cnn_forward.6} parent=5 // pred_check
      _
    $region30: #{cnn_forward.6} parent=5 // pred_check_branch
      %141 = sbr.rel (%p138) target = $region32
    $region31: #{cnn_forward.6} parent=5 // pred_region
      %s142 = ssub.s32 %s9, 1
      %p143 = pneg %p30
      %p144 = pneg %p27
      %p145 = pneg %p51
      %p146 = pneg %p48
      %p147 = scmp.lt.s32.totalorder %s14, 1
      %s148 = scalar_select %p147, %s14, 1
      %s149 = smul.addr %s148, 192
      %s150 = smul.addr %s149, 8
      %s151 = scalar_lea.vmem %s2, %s150
      %p152 = pneg %p77
      %p153 = pneg %p74
      %p154 = pneg %p103
      %p155 = pneg %p100
      %p156 = scmp.lt.s32.totalorder %s14, 1
      %s157 = scalar_select %p156, %s14, 1
      %s158 = smul.addr %s157, 120
      %s159 = smul.addr %s158, 8
      %s160 = scalar_lea.vmem %s3, %s159
      %p161 = scmp.lt.s32.totalorder %s14, 1
      %s162 = scalar_select %p161, %s14, 1
      %s163 = smul.addr %s162, 192
      %s164 = smul.addr %s163, 8
      %s165 = scalar_lea.vmem %s2, %s164
      %p166 = scmp.lt.s32.totalorder %s14, 1
      %s167 = scalar_select %p166, %s14, 1
      %s168 = smul.addr %s167, 120
      %s169 = smul.addr %s168, 8
      %s170 = scalar_lea.vmem %s3, %s169
      loop: start=0, step=1, limit=60
      $region33: #{cnn_forward.6} parent=31 // loop_pre_header
        _
      $region34: #{cnn_forward.6} parent=31 // loop_header
        %s172 = sphi 0, %s176
        %p173 = scmp.ge.s32.totalorder %s172, 60
      $region35: #{cnn_forward.6} parent=31 // loop_header_branch
        %175 = sbr.rel (%p173) target = $region39
      $region36: #{cnn_forward.6} parent=31 // loop_body
        %s177 = smul.u32 %s172, 2
        %s178 = scalar_lea.vmem %s165, %s177
        %v179 = vld [vmem:[%s178] sm:$0x3f]
        %vm180 = vcmask 488448
        %181 = vst.msk [vmem:[#allocation2] sm:$0x3f] %vm180, %v179
        %v182 = vld [vmem:[%s178] sm:$0x3f]
        %184 = vrot.lane.b32.xlu0 %v182, 127
        %v185 = vpop.permute.xlu0 %184
        %187 = vst.msk [vmem:[#allocation2 + $0x6] sm:$0x3f] %vm180, %v185
        %v188 = vld [vmem:[%s178] sm:$0x3f]
        %190 = vrot.lane.b32.xlu0 %v188, 126
        %v191 = vpop.permute.xlu0 %190
        %193 = vst.msk [vmem:[#allocation2 + $0xc] sm:$0x3f] %vm180, %v191
        %s194 = sadd.s32 %s177, 128
        %s195 = scalar_lea.vmem %s165, %s194
        %v196 = vld [vmem:[%s195] sm:$0x3f]
        %197 = vst.msk [vmem:[#allocation2 + $0x12] sm:$0x3f] %vm180, %v196
        %v198 = vld [vmem:[%s195] sm:$0x3f]
        %200 = vrot.lane.b32.xlu0 %v198, 127
        %v201 = vpop.permute.xlu0 %200
        %203 = vst.msk [vmem:[#allocation2 + $0x18] sm:$0x3f] %vm180, %v201
        %v204 = vld [vmem:[%s195] sm:$0x3f]
        %206 = vrot.lane.b32.xlu0 %v204, 126
        %v207 = vpop.permute.xlu0 %206
        %209 = vst.msk [vmem:[#allocation2 + $0x1e] sm:$0x3f] %vm180, %v207
        %s210 = sadd.s32 %s177, 256
        %s211 = scalar_lea.vmem %s165, %s210
        %v212 = vld [vmem:[%s211] sm:$0x3f]
        %213 = vst.msk [vmem:[#allocation2 + $0x24] sm:$0x3f] %vm180, %v212
        %v214 = vld [vmem:[%s211] sm:$0x3f]
        %216 = vrot.lane.b32.xlu0 %v214, 127
        %v217 = vpop.permute.xlu0 %216
        %219 = vst.msk [vmem:[#allocation2 + $0x2a] sm:$0x3f] %vm180, %v217
        %v220 = vld [vmem:[%s211] sm:$0x3f]
        %222 = vrot.lane.b32.xlu0 %v220, 126
        %v223 = vpop.permute.xlu0 %222
        %225 = vst.msk [vmem:[#allocation2 + $0x30] sm:$0x3f] %vm180, %v223
        %s226 = sadd.s32 %s177, 384
        %s227 = scalar_lea.vmem %s165, %s226
        %v228 = vld [vmem:[%s227] sm:$0x3f]
        %229 = vst.msk [vmem:[#allocation2 + $0x36] sm:$0x3f] %vm180, %v228
        %v230 = vld [vmem:[%s227] sm:$0x3f]
        %232 = vrot.lane.b32.xlu0 %v230, 127
        %v233 = vpop.permute.xlu0 %232
        %235 = vst.msk [vmem:[#allocation2 + $0x3c] sm:$0x3f] %vm180, %v233
        %v236 = vld [vmem:[%s227] sm:$0x3f]
        %238 = vrot.lane.b32.xlu0 %v236, 126
        %v239 = vpop.permute.xlu0 %238
        %241 = vst.msk [vmem:[#allocation2 + $0x42] sm:$0x3f] %vm180, %v239
        %s242 = sadd.s32 %s177, 512
        %s243 = scalar_lea.vmem %s165, %s242
        %v244 = vld [vmem:[%s243] sm:$0x3f]
        %245 = vst.msk [vmem:[#allocation2 + $0x48] sm:$0x3f] %vm180, %v244
        %v246 = vld [vmem:[%s243] sm:$0x3f]
        %248 = vrot.lane.b32.xlu0 %v246, 127
        %v249 = vpop.permute.xlu0 %248
        %251 = vst.msk [vmem:[#allocation2 + $0x4e] sm:$0x3f] %vm180, %v249
        %v252 = vld [vmem:[%s243] sm:$0x3f]
        %254 = vrot.lane.b32.xlu0 %v252, 126
        %v255 = vpop.permute.xlu0 %254
        %257 = vst.msk [vmem:[#allocation2 + $0x54] sm:$0x3f] %vm180, %v255
        %s258 = sadd.s32 %s177, 640
        %s259 = scalar_lea.vmem %s165, %s258
        %v260 = vld [vmem:[%s259] sm:$0x3f]
        %261 = vst.msk [vmem:[#allocation2 + $0x5a] sm:$0x3f] %vm180, %v260
        %v262 = vld [vmem:[%s259] sm:$0x3f]
        %264 = vrot.lane.b32.xlu0 %v262, 127
        %v265 = vpop.permute.xlu0 %264
        %267 = vst.msk [vmem:[#allocation2 + $0x60] sm:$0x3f] %vm180, %v265
        %v268 = vld [vmem:[%s259] sm:$0x3f]
        %270 = vrot.lane.b32.xlu0 %v268, 126
        %v271 = vpop.permute.xlu0 %270
        %273 = vst.msk [vmem:[#allocation2 + $0x66] sm:$0x3f] %vm180, %v271
        %s274 = sadd.s32 %s177, 768
        %s275 = scalar_lea.vmem %s165, %s274
        %v276 = vld [vmem:[%s275] sm:$0x3f]
        %277 = vst.msk [vmem:[#allocation2 + $0x6c] sm:$0x3f] %vm180, %v276
        %v278 = vld [vmem:[%s275] sm:$0x3f]
        %280 = vrot.lane.b32.xlu0 %v278, 127
        %v281 = vpop.permute.xlu0 %280
        %283 = vst.msk [vmem:[#allocation2 + $0x72] sm:$0x3f] %vm180, %v281
        %v284 = vld [vmem:[%s275] sm:$0x3f]
        %286 = vrot.lane.b32.xlu0 %v284, 126
        %v287 = vpop.permute.xlu0 %286
        %289 = vst.msk [vmem:[#allocation2 + $0x78] sm:$0x3f] %vm180, %v287
        %s290 = sadd.s32 %s177, 896
        %s291 = scalar_lea.vmem %s165, %s290
        %v292 = vld [vmem:[%s291] sm:$0x3f]
        %293 = vst.msk [vmem:[#allocation2 + $0x7e] sm:$0x3f] %vm180, %v292
        %v294 = vld [vmem:[%s291] sm:$0x3f]
        %296 = vrot.lane.b32.xlu0 %v294, 127
        %v297 = vpop.permute.xlu0 %296
        %299 = vst.msk [vmem:[#allocation2 + $0x84] sm:$0x3f] %vm180, %v297
        %v300 = vld [vmem:[%s291] sm:$0x3f]
        %302 = vrot.lane.b32.xlu0 %v300, 126
        %v303 = vpop.permute.xlu0 %302
        %305 = vst.msk [vmem:[#allocation2 + $0x8a] sm:$0x3f] %vm180, %v303
        %s306 = sadd.s32 %s177, 1024
        %s307 = scalar_lea.vmem %s165, %s306
        %v308 = vld [vmem:[%s307] sm:$0x3f]
        %309 = vst.msk [vmem:[#allocation2 + $0x90] sm:$0x3f] %vm180, %v308
        %v310 = vld [vmem:[%s307] sm:$0x3f]
        %312 = vrot.lane.b32.xlu0 %v310, 127
        %v313 = vpop.permute.xlu0 %312
        %315 = vst.msk [vmem:[#allocation2 + $0x96] sm:$0x3f] %vm180, %v313
        %v316 = vld [vmem:[%s307] sm:$0x3f]
        %318 = vrot.lane.b32.xlu0 %v316, 126
        %v319 = vpop.permute.xlu0 %318
        %321 = vst.msk [vmem:[#allocation2 + $0x9c] sm:$0x3f] %vm180, %v319
        %s322 = sadd.s32 %s177, 1152
        %s323 = scalar_lea.vmem %s165, %s322
        %v324 = vld [vmem:[%s323] sm:$0x3f]
        %325 = vst.msk [vmem:[#allocation2 + $0xa2] sm:$0x3f] %vm180, %v324
        %v326 = vld [vmem:[%s323] sm:$0x3f]
        %328 = vrot.lane.b32.xlu0 %v326, 127
        %v329 = vpop.permute.xlu0 %328
        %331 = vst.msk [vmem:[#allocation2 + $0xa8] sm:$0x3f] %vm180, %v329
        %v332 = vld [vmem:[%s323] sm:$0x3f]
        %334 = vrot.lane.b32.xlu0 %v332, 126
        %v335 = vpop.permute.xlu0 %334
        %337 = vst.msk [vmem:[#allocation2 + $0xae] sm:$0x3f] %vm180, %v335
        %s338 = sadd.s32 %s177, 1280
        %s339 = scalar_lea.vmem %s165, %s338
        %v340 = vld [vmem:[%s339] sm:$0x3f]
        %341 = vst.msk [vmem:[#allocation2 + $0xb4] sm:$0x3f] %vm180, %v340
        %v342 = vld [vmem:[%s339] sm:$0x3f]
        %344 = vrot.lane.b32.xlu0 %v342, 127
        %v345 = vpop.permute.xlu0 %344
        %347 = vst.msk [vmem:[#allocation2 + $0xba] sm:$0x3f] %vm180, %v345
        %v348 = vld [vmem:[%s339] sm:$0x3f]
        %350 = vrot.lane.b32.xlu0 %v348, 126
        %v351 = vpop.permute.xlu0 %350
        %353 = vst.msk [vmem:[#allocation2 + $0xc0] sm:$0x3f] %vm180, %v351
        %s354 = sadd.s32 %s177, 1408
        %s355 = scalar_lea.vmem %s165, %s354
        %v356 = vld [vmem:[%s355] sm:$0x3f]
        %357 = vst.msk [vmem:[#allocation2 + $0xc6] sm:$0x3f] %vm180, %v356
        %v358 = vld [vmem:[%s355] sm:$0x3f]
        %360 = vrot.lane.b32.xlu0 %v358, 127
        %v361 = vpop.permute.xlu0 %360
        %363 = vst.msk [vmem:[#allocation2 + $0xcc] sm:$0x3f] %vm180, %v361
        %v364 = vld [vmem:[%s355] sm:$0x3f]
        %366 = vrot.lane.b32.xlu0 %v364, 126
        %v367 = vpop.permute.xlu0 %366
        %369 = vst.msk [vmem:[#allocation2 + $0xd2] sm:$0x3f] %vm180, %v367
        %v370 = vld [vmem:[%s0] sm:$0xff]
        %v371 = vld [vmem:[%s0 + $0x8] sm:$0xff]
        %v372 = vld [vmem:[%s0 + $0x10] sm:$0xff]
        %v373 = vld [vmem:[%s0 + $0x18] sm:$0xff]
        %v374 = vld [vmem:[%s0 + $0x20] sm:$0xff]
        %v375 = vld [vmem:[%s0 + $0x28] sm:$0xff]
        %v376 = vld [vmem:[%s0 + $0x30] sm:$0xff]
        %v377 = vld [vmem:[%s0 + $0x38] sm:$0xff]
        %v378 = vld [vmem:[%s0 + $0x40] sm:$0xff]
        %v379 = vld [vmem:[%s0 + $0x48] sm:$0xff]
        %v380 = vld [vmem:[%s0 + $0x50] sm:$0xff]
        %v381 = vld [vmem:[%s0 + $0x58] sm:$0xff]
        %v382 = vld [vmem:[%s0 + $0x60] sm:$0xff]
        %v383 = vld [vmem:[%s0 + $0x68] sm:$0xff]
        %v384 = vld [vmem:[%s0 + $0x70] sm:$0xff]
        %v385 = vld [vmem:[%s0 + $0x78] sm:$0xff]
        %v386 = vld [vmem:[#allocation2] sm:$0xff]
        %v387 = vld [vmem:[#allocation2 + $0x8] sm:$0xff]
        %v388 = vld [vmem:[#allocation2 + $0x10] sm:$0xff]
        %v389 = vld [vmem:[#allocation2 + $0x18] sm:$0xff]
        %v390 = vld [vmem:[#allocation2 + $0x20] sm:$0xff]
        %v391 = vld [vmem:[#allocation2 + $0x28] sm:$0xff]
        %v392 = vld [vmem:[#allocation2 + $0x30] sm:$0xff]
        %v393 = vld [vmem:[#allocation2 + $0x38] sm:$0xff]
        %v394 = vld [vmem:[#allocation2 + $0x40] sm:$0xff]
        %v395 = vld [vmem:[#allocation2 + $0x48] sm:$0xff]
        %v396 = vld [vmem:[#allocation2 + $0x50] sm:$0xff]
        %v397 = vld [vmem:[#allocation2 + $0x58] sm:$0xff]
        %v398 = vld [vmem:[#allocation2 + $0x60] sm:$0xff]
        %v399 = vld [vmem:[#allocation2 + $0x68] sm:$0xff]
        %v400 = vld [vmem:[#allocation2 + $0x70] sm:$0xff]
        %v401 = vld [vmem:[#allocation2 + $0x78] sm:$0xff]
        %v402 = vld [vmem:[#allocation2 + $0x80] sm:$0xff]
        %v403 = vld [vmem:[#allocation2 + $0x88] sm:$0xff]
        %v404 = vld [vmem:[#allocation2 + $0x90] sm:$0xff]
        %v405 = vld [vmem:[#allocation2 + $0x98] sm:$0xff]
        %v406 = vld [vmem:[#allocation2 + $0xa0] sm:$0xff]
        %v407 = vld [vmem:[#allocation2 + $0xa8] sm:$0xff]
        %v408 = vld [vmem:[#allocation2 + $0xb0] sm:$0xff]
        %v409 = vld [vmem:[#allocation2 + $0xb8] sm:$0xff]
        %v410 = vld [vmem:[#allocation2 + $0xc0] sm:$0xff]
        %v411 = vld [vmem:[#allocation2 + $0xc8] sm:$0xff]
        %v412 = vld [vmem:[#allocation2 + $0xd0] sm:$0xff]
        %vm413 = vcmask 719872
        %v415 = vsel %vm413, %v371, 0
        %v418 = vsel %vm413, %v373, 0
        %v421 = vsel %vm413, %v375, 0
        %v424 = vsel %vm413, %v377, 0
        %v427 = vsel %vm413, %v379, 0
        %v430 = vsel %vm413, %v381, 0
        %v433 = vsel %vm413, %v383, 0
        %v436 = vsel %vm413, %v385, 0
        %438 = vmatpush.msra.mxu0 %v401
        %439 = vmatpush.msra.mxu0 %v400
        %440 = vmatpush.msra.mxu0 %v399
        %441 = vmatpush.msra.mxu0 %v398
        %442 = vmatpush.msra.mxu0 %v397
        %443 = vmatpush.msra.mxu0 %v396
        %444 = vmatpush.msra.mxu0 %v395
        %445 = vmatpush.msra.mxu0 %v394
        %446 = vmatpush.msra.mxu0 %v393
        %447 = vmatpush.msra.mxu0 %v392
        %448 = vmatpush.msra.mxu0 %v391
        %449 = vmatpush.msra.mxu0 %v390
        %450 = vmatpush.msra.mxu0 %v389
        %451 = vmatpush.msra.mxu0 %v388
        %452 = vmatpush.msra.mxu0 %v387
        %453 = vmatpush.msra.mxu0 %v386
        %454 = vmatmul.f32.gmra.mxu0 %v370
        %v455 = vpop.f32.mrf.mxu0
        %v456 = vadd.f32 0.0, %v455
        %457 = vmatmul.f32.gmra.mxu0 %v372
        %v458 = vpop.f32.mrf.mxu0
        %v459 = vadd.f32 0.0, %v458
        %460 = vmatmul.f32.gmra.mxu0 %v374
        %v461 = vpop.f32.mrf.mxu0
        %v462 = vadd.f32 0.0, %v461
        %463 = vmatmul.f32.gmra.mxu0 %v376
        %v464 = vpop.f32.mrf.mxu0
        %v465 = vadd.f32 0.0, %v464
        %466 = vmatmul.f32.gmra.mxu0 %v378
        %v467 = vpop.f32.mrf.mxu0
        %v468 = vadd.f32 0.0, %v467
        %469 = vmatmul.f32.gmra.mxu0 %v380
        %v470 = vpop.f32.mrf.mxu0
        %v471 = vadd.f32 0.0, %v470
        %472 = vmatmul.f32.gmra.mxu0 %v382
        %v473 = vpop.f32.mrf.mxu0
        %v474 = vadd.f32 0.0, %v473
        %475 = vmatmul.f32.gmra.mxu0 %v384
        %v476 = vpop.f32.mrf.mxu0
        %v477 = vadd.f32 0.0, %v476
        %478 = vdwg.mxu0
        %479 = vmatpush.msra.mxu0 0.0
        %480 = vmatpush.msra.mxu0 0.0
        %481 = vmatpush.msra.mxu0 0.0
        %482 = vmatpush.msra.mxu0 0.0
        %483 = vmatpush.msra.mxu0 0.0
        %484 = vmatpush.msra.mxu0 %v412
        %485 = vmatpush.msra.mxu0 %v411
        %486 = vmatpush.msra.mxu0 %v410
        %487 = vmatpush.msra.mxu0 %v409
        %488 = vmatpush.msra.mxu0 %v408
        %489 = vmatpush.msra.mxu0 %v407
        %490 = vmatpush.msra.mxu0 %v406
        %491 = vmatpush.msra.mxu0 %v405
        %492 = vmatpush.msra.mxu0 %v404
        %493 = vmatpush.msra.mxu0 %v403
        %494 = vmatpush.msra.mxu0 %v402
        %495 = vmatmul.f32.gmra.mxu0 %v415
        %v496 = vpop.f32.mrf.mxu0
        %v497 = vadd.f32 %v456, %v496
        %498 = vmatmul.f32.gmra.mxu0 %v418
        %v499 = vpop.f32.mrf.mxu0
        %v500 = vadd.f32 %v459, %v499
        %501 = vmatmul.f32.gmra.mxu0 %v421
        %v502 = vpop.f32.mrf.mxu0
        %v503 = vadd.f32 %v462, %v502
        %504 = vmatmul.f32.gmra.mxu0 %v424
        %v505 = vpop.f32.mrf.mxu0
        %v506 = vadd.f32 %v465, %v505
        %507 = vmatmul.f32.gmra.mxu0 %v427
        %v508 = vpop.f32.mrf.mxu0
        %v509 = vadd.f32 %v468, %v508
        %510 = vmatmul.f32.gmra.mxu0 %v430
        %v511 = vpop.f32.mrf.mxu0
        %v512 = vadd.f32 %v471, %v511
        %513 = vmatmul.f32.gmra.mxu0 %v433
        %v514 = vpop.f32.mrf.mxu0
        %v515 = vadd.f32 %v474, %v514
        %516 = vmatmul.f32.gmra.mxu0 %v436
        %v517 = vpop.f32.mrf.mxu0
        %v518 = vadd.f32 %v477, %v517
        %519 = vdwg.mxu0
        %v520 = vmax.f32 %v497, %v503
        %v521 = vmax.f32 %v500, %v506
        %v522 = vmax.f32 %v509, %v515
        %v523 = vmax.f32 %v512, %v518
        %v524 = vmax.f32 %v520, %v522
        %v525 = vmax.f32 %v521, %v523
        %v526 = vld [vmem:[%s1] sm:$0xff]
        %v527 = vld [vmem:[%s1 + $0x8] sm:$0xff]
        %529 = vset.pattern.permute.xlu0 0
        %530 = vperm.xlu0 %529, %v526
        %v531 = vpop.permute.xlu0 %530
        %534 = vset.pattern.permute.xlu0 0
        %535 = vperm.xlu0 %534, %v527
        %v536 = vpop.permute.xlu0 %535
        %v538 = vadd.f32 %v524, %v531
        %v539 = vadd.f32 %v525, %v536
        %v540 = vmax.f32 %v538, 0.0
        %v541 = vmax.f32 %v539, 0.0
        %s542 = smul.u32 %s172, 16
        %s543 = scalar_lea.vmem %s170, %s542
        %vm544 = vcmask 490496
        %545 = vst.msk [vmem:[%s543] sm:$0xff] %vm544, %v540
        %546 = vst.msk [vmem:[%s543 + $0x8] sm:$0xff] %vm544, %v541
      $region37: #{cnn_forward.6} parent=31 // loop_footer
        %s176 = sadd.s32 1, %s172
      $region38: #{cnn_forward.6} parent=31 // loop_footer_branch
        %171 = sbr.rel target = $region34
      $region39: #{cnn_forward.6} parent=31 // loop_exit
        _
      %p547 = scmp.lt.s32.totalorder %s14, 1
      %s548 = scalar_select %p547, %s14, 1
      %s549 = smul.addr %s548, 120
      %s550 = smul.addr %s549, 8
      %s551 = scalar_lea.vmem %s3, %s550
      // Predicated region
      $region40: #{cnn_forward.6} parent=31 // pred_check
        %p552 = pneg %p100
      $region41: #{cnn_forward.6} parent=31 // pred_check_branch
        %554 = sbr.rel (%p552) target = $region43
      $region42: #{cnn_forward.6} parent=31 // pred_region
        _
      $region43: #{cnn_forward.6} parent=31 // pred_fallthru
        _
    $region32: #{cnn_forward.6} parent=5 // pred_fallthru
      _
    %p555 = scmp.le.s32.totalorder 2, %s9
    // Predicated region
    $region44: #{cnn_forward.6} parent=5 // pred_check
      %p556 = pneg %p555
    $region45: #{cnn_forward.6} parent=5 // pred_check_branch
      %558 = sbr.rel (%p556) target = $region47
    $region46: #{cnn_forward.6} parent=5 // pred_region
      %s559 = ssub.s32 %s9, 2
      // Predicated region
      $region48: #{cnn_forward.6} parent=46 // pred_check
        %p560 = pneg %p106
      $region49: #{cnn_forward.6} parent=46 // pred_check_branch
        %562 = sbr.rel (%p560) target = $region51
      $region50: #{cnn_forward.6} parent=46 // pred_region
        %p563 = scmp.lt.s32.totalorder %s15, 1
        %s564 = scalar_select %p563, %s15, 1
        %s565 = smul.addr %s564, 120
        %s566 = smul.addr %s565, 8
        %s567 = scalar_lea.vmem %s3, %s566
      $region51: #{cnn_forward.6} parent=46 // pred_fallthru
        _
    $region47: #{cnn_forward.6} parent=5 // pred_fallthru
      _
  $region6: #{cnn_forward.6} parent=0 // loop_footer
    %s13 = sadd.s32 1, %s9
  $region7: #{cnn_forward.6} parent=0 // loop_footer_branch
    %8 = sbr.rel target = $region3
  $region8: #{cnn_forward.6} parent=0 // loop_exit
    _

// kernel: cnn_forward.7
$region0: #{cnn_forward.7}
  #allocation0 [shape = 'u32[]', space=smem, size = 0x4, offset = 0x4, fixed_abs, tag = 'smem constant byte address 0x4 - core index']
  #allocation1 [shape = 'u32[72,128]{1,0:T(1,128)}', space=vmem, size = 0x9000, scoped, tag = 'internal scratch']
  #allocation2 [shape = 'f32[2,120]{1,0:T(2,128)}', space=vmem, size = 0x400, scoped, tag = 'scratch operand']
  %s0 = inlined_call_operand.vmem [shape: f32[2,57600], index: 0, kind: input, shape index: {}]
  %s1 = inlined_call_operand.vmem [shape: f32[57600,120], index: 1, kind: input, shape index: {}]
  %s2 = inlined_call_operand.vmem [shape: f32[1,120], index: 2, kind: input, shape index: {}]
  %s3 = inlined_call_operand.vmem [shape: f32[2,120], index: 3, kind: output, shape index: {}]
  %s4 = sld [smem:[#allocation0]]
  $region53: #{cnn_forward.7} parent=0
    _
  %s6 = ssub.s32 1, %s4
  %s7 = scalar_select 0, %s6, %s4
  loop: start=0, step=1, limit=17
  $region2: #{cnn_forward.7} parent=0 // loop_pre_header
    _
  $region3: #{cnn_forward.7} parent=0 // loop_header
    %s9 = sphi 0, %s13
    %p10 = scmp.ge.s32.totalorder %s9, 17
    %s19 = sphi 0, %s21
    %s22 = sphi 0, %s19
    %s23 = sphi 0, %s22
    %s39 = sphi 0, %s23
    %s45 = sphi 0, %s47
    %s48 = sphi 0, %s45
    %s49 = sphi 0, %s48
    %s65 = sphi 0, %s49
    %s69 = sphi 0, %s69
    %s71 = sphi 0, %s69
    %s72 = sphi 0, %s71
    %s86 = sphi 0, %s72
    %s90 = sphi 0, %s90
    %s92 = sphi 0, %s90
    %s93 = sphi 0, %s92
    %s107 = sphi 0, %s93
  $region4: #{cnn_forward.7} parent=0 // loop_header_branch
    %12 = sbr.rel (%p10) target = $region8
  $region5: #{cnn_forward.7} parent=0 // loop_body
    %s14 = ssub.s32 %s9, 1
    %s15 = ssub.s32 %s9, 2
    %s16 = sadd.s32 %s9, 1
    %s17 = ssub.s32 %s9, %s16
    %p18 = scmp.eq.s32.totalorder %s17, 0
    %s20 = sadd.s32 %s19, 1
    %s21 = scalar_select %p18, %s19, %s20
    %p24 = pneg %p18
    %p25 = scmp.eq.s32.totalorder %s9, 14
    %p26 = por %p24, %p25
    %p27 = scmp.ne.s32.totalorder %s19, %s22
    %p28 = scmp.eq.s32.totalorder %s9, 0
    %p29 = por %p27, %p28
    %p30 = scmp.ne.s32.totalorder %s19, %s22
    %p31 = scmp.eq.s32.totalorder %s14, 14
    %p32 = por %p30, %p31
    %p33 = scmp.ne.s32.totalorder %s22, %s23
    %p34 = scmp.eq.s32.totalorder %s14, 0
    %p35 = por %p33, %p34
    %p36 = scmp.ne.s32.totalorder %s22, %s23
    %p37 = scmp.eq.s32.totalorder %s15, 14
    %p38 = por %p36, %p37
    %p40 = scmp.ne.s32.totalorder %s23, %s39
    %p41 = scmp.eq.s32.totalorder %s15, 0
    %p42 = por %p40, %p41
    %s43 = ssub.s32 %s9, %s16
    %p44 = scmp.eq.s32.totalorder %s43, 0
    %s46 = sadd.s32 %s45, 1
    %s47 = scalar_select %p44, %s45, %s46
    %p50 = pneg %p44
    %p51 = scmp.eq.s32.totalorder %s9, 14
    %p52 = por %p50, %p51
    %p53 = scmp.ne.s32.totalorder %s45, %s48
    %p54 = scmp.eq.s32.totalorder %s9, 0
    %p55 = por %p53, %p54
    %p56 = scmp.ne.s32.totalorder %s45, %s48
    %p57 = scmp.eq.s32.totalorder %s14, 14
    %p58 = por %p56, %p57
    %p59 = scmp.ne.s32.totalorder %s48, %s49
    %p60 = scmp.eq.s32.totalorder %s14, 0
    %p61 = por %p59, %p60
    %p62 = scmp.ne.s32.totalorder %s48, %s49
    %p63 = scmp.eq.s32.totalorder %s15, 14
    %p64 = por %p62, %p63
    %p66 = scmp.ne.s32.totalorder %s49, %s65
    %p67 = scmp.eq.s32.totalorder %s15, 0
    %p68 = por %p66, %p67
    %s70 = sadd.s32 %s69, 1
    %p73 = scmp.eq.s32.totalorder %s9, 14
    %p74 = scmp.ne.s32.totalorder %s69, %s71
    %p75 = scmp.eq.s32.totalorder %s9, 0
    %p76 = por %p74, %p75
    %p77 = scmp.ne.s32.totalorder %s69, %s71
    %p78 = scmp.eq.s32.totalorder %s14, 14
    %p79 = por %p77, %p78
    %p80 = scmp.ne.s32.totalorder %s71, %s72
    %p81 = scmp.eq.s32.totalorder %s14, 0
    %p82 = por %p80, %p81
    %p83 = scmp.ne.s32.totalorder %s71, %s72
    %p84 = scmp.eq.s32.totalorder %s15, 14
    %p85 = por %p83, %p84
    %p87 = scmp.ne.s32.totalorder %s72, %s86
    %p88 = scmp.eq.s32.totalorder %s15, 0
    %p89 = por %p87, %p88
    %s91 = sadd.s32 %s90, 1
    %p94 = scmp.eq.s32.totalorder %s9, 14
    %p95 = scmp.ne.s32.totalorder %s90, %s92
    %p96 = scmp.eq.s32.totalorder %s9, 0
    %p97 = por %p95, %p96
    %p98 = scmp.ne.s32.totalorder %s90, %s92
    %p99 = scmp.eq.s32.totalorder %s14, 14
    %p100 = por %p98, %p99
    %p101 = scmp.ne.s32.totalorder %s92, %s93
    %p102 = scmp.eq.s32.totalorder %s14, 0
    %p103 = por %p101, %p102
    %p104 = scmp.ne.s32.totalorder %s92, %s93
    %p105 = scmp.eq.s32.totalorder %s15, 14
    %p106 = por %p104, %p105
    %p108 = scmp.ne.s32.totalorder %s93, %s107
    %p109 = scmp.eq.s32.totalorder %s15, 0
    %p110 = por %p108, %p109
    %p111 = scmp.le.s32.totalorder 1, %s9
    %p112 = scmp.lt.s32.totalorder %s9, 16
    %p113 = pnand %p111, %p112
    %p114 = pneg %p113
    // Predicated region
    $region9: #{cnn_forward.7} parent=5 // pred_check
      _
    $region10: #{cnn_forward.7} parent=5 // pred_check_branch
      %116 = sbr.rel (%p113) target = $region12
    $region11: #{cnn_forward.7} parent=5 // pred_region
      %s117 = ssub.s32 %s9, 1
      // Predicated region
      $region13: #{cnn_forward.7} parent=11 // pred_check
        %p118 = pneg %p82
      $region14: #{cnn_forward.7} parent=11 // pred_check_branch
        %120 = sbr.rel (%p118) target = $region16
      $region15: #{cnn_forward.7} parent=11 // pred_region
        _
      $region16: #{cnn_forward.7} parent=11 // pred_fallthru
        _
    $region12: #{cnn_forward.7} parent=5 // pred_fallthru
      _
    %p121 = scmp.lt.s32.totalorder %s9, 15
    // Predicated region
    $region17: #{cnn_forward.7} parent=5 // pred_check
      %p122 = pneg %p121
    $region18: #{cnn_forward.7} parent=5 // pred_check_branch
      %124 = sbr.rel (%p122) target = $region20
    $region19: #{cnn_forward.7} parent=5 // pred_region
      // Predicated region
      $region21: #{cnn_forward.7} parent=19 // pred_check
        %p125 = pneg %p29
      $region22: #{cnn_forward.7} parent=19 // pred_check_branch
        %127 = sbr.rel (%p125) target = $region24
      $region23: #{cnn_forward.7} parent=19 // pred_region
        %s128 = smul.u32 30, %s9
        %p129 = scmp.lt.s32.totalorder %s128, 449
        %s130 = scalar_select %p129, %s128, 449
        %s131 = smul.addr %s130, 2
        %s132 = scalar_lea.vmem %s0, %s131
        %s133 = smul.u32 30, %s9
      $region24: #{cnn_forward.7} parent=19 // pred_fallthru
        _
      // Predicated region
      $region25: #{cnn_forward.7} parent=19 // pred_check
        %p134 = pneg %p55
      $region26: #{cnn_forward.7} parent=19 // pred_check_branch
        %136 = sbr.rel (%p134) target = $region28
      $region27: #{cnn_forward.7} parent=19 // pred_region
        %s137 = smul.u32 480, %s9
        %p138 = scmp.lt.s32.totalorder %s137, 7199
        %s139 = scalar_select %p138, %s137, 7199
        %s140 = smul.addr %s139, 8
        %s141 = scalar_lea.vmem %s1, %s140
        %s142 = smul.u32 480, %s9
      $region28: #{cnn_forward.7} parent=19 // pred_fallthru
        _
    $region20: #{cnn_forward.7} parent=5 // pred_fallthru
      _
    %p143 = scmp.le.s32.totalorder 1, %s9
    %p144 = scmp.lt.s32.totalorder %s9, 16
    %p145 = pnand %p143, %p144
    %p146 = pneg %p145
    // Predicated region
    $region29: #{cnn_forward.7} parent=5 // pred_check
      _
    $region30: #{cnn_forward.7} parent=5 // pred_check_branch
      %148 = sbr.rel (%p145) target = $region32
    $region31: #{cnn_forward.7} parent=5 // pred_region
      %s149 = ssub.s32 %s9, 1
      %s150 = smul.u32 30, %s14
      %p151 = scmp.lt.s32.totalorder %s150, 449
      %s152 = scalar_select %p151, %s150, 449
      %s153 = smul.addr %s152, 2
      %s154 = scalar_lea.vmem %s0, %s153
      %p155 = pneg %p35
      %p156 = pneg %p32
      %s157 = smul.u32 480, %s14
      %p158 = scmp.lt.s32.totalorder %s157, 7199
      %s159 = scalar_select %p158, %s157, 7199
      %s160 = smul.addr %s159, 8
      %s161 = scalar_lea.vmem %s1, %s160
      %p162 = pneg %p61
      %p163 = pneg %p58
      %p164 = pneg %p82
      %p165 = pneg %p79
      %p166 = pneg %p103
      %p167 = pneg %p100
      %s168 = smul.u32 30, %s14
      %p169 = scmp.lt.s32.totalorder %s168, 449
      %s170 = scalar_select %p169, %s168, 449
      %s171 = smul.addr %s170, 2
      %s172 = scalar_lea.vmem %s0, %s171
      %s173 = smul.u32 30, %s14
      %s174 = smul.u32 480, %s14
      %p175 = scmp.lt.s32.totalorder %s174, 7199
      %s176 = scalar_select %p175, %s174, 7199
      %s177 = smul.addr %s176, 8
      %s178 = scalar_lea.vmem %s1, %s177
      %s179 = smul.u32 480, %s14
      %p180 = scmp.eq.s32.totalorder %s14, 0
      // Predicated region
      $region33: #{cnn_forward.7} parent=31 // pred_check
        %p181 = pneg %p180
      $region34: #{cnn_forward.7} parent=31 // pred_check_branch
        %183 = sbr.rel (%p181) target = $region36
      $region35: #{cnn_forward.7} parent=31 // pred_region
        %vm184 = vcmask 975872
        %185 = vst.msk [vmem:[#allocation2] sm:$0x3] %vm184, 0.0
      $region36: #{cnn_forward.7} parent=31 // pred_fallthru
        _
      %v186 = vld [vmem:[#allocation2] sm:$0x3]
      %v187 = vld [vmem:[%s172] sm:$0xff]
      %v188 = vld [vmem:[%s172 + $0x8] sm:$0xff]
      %v189 = vld [vmem:[%s172 + $0x10] sm:$0xff]
      %v190 = vld [vmem:[%s172 + $0x18] sm:$0xff]
      %v191 = vld [vmem:[%s172 + $0x20] sm:$0xff]
      %v192 = vld [vmem:[%s172 + $0x28] sm:$0xff]
      %v193 = vld [vmem:[%s172 + $0x30] sm:$0xff]
      %v194 = vld [vmem:[%s172 + $0x38] sm:$0xf]
      %v195 = vld [vmem:[%s178] sm:$0xff]
      %v196 = vld [vmem:[%s178 + $0x8] sm:$0xff]
      %v197 = vld [vmem:[%s178 + $0x10] sm:$0xff]
      %v198 = vld [vmem:[%s178 + $0x18] sm:$0xff]
      %v199 = vld [vmem:[%s178 + $0x20] sm:$0xff]
      %v200 = vld [vmem:[%s178 + $0x28] sm:$0xff]
      %v201 = vld [vmem:[%s178 + $0x30] sm:$0xff]
      %v202 = vld [vmem:[%s178 + $0x38] sm:$0xff]
      %v203 = vld [vmem:[%s178 + $0x40] sm:$0xff]
      %v204 = vld [vmem:[%s178 + $0x48] sm:$0xff]
      %v205 = vld [vmem:[%s178 + $0x50] sm:$0xff]
      %v206 = vld [vmem:[%s178 + $0x58] sm:$0xff]
      %v207 = vld [vmem:[%s178 + $0x60] sm:$0xff]
      %v208 = vld [vmem:[%s178 + $0x68] sm:$0xff]
      %v209 = vld [vmem:[%s178 + $0x70] sm:$0xff]
      %v210 = vld [vmem:[%s178 + $0x78] sm:$0xff]
      %v211 = vld [vmem:[%s178 + $0x80] sm:$0xff]
      %v212 = vld [vmem:[%s178 + $0x88] sm:$0xff]
      %v213 = vld [vmem:[%s178 + $0x90] sm:$0xff]
      %v214 = vld [vmem:[%s178 + $0x98] sm:$0xff]
      %v215 = vld [vmem:[%s178 + $0xa0] sm:$0xff]
      %v216 = vld [vmem:[%s178 + $0xa8] sm:$0xff]
      %v217 = vld [vmem:[%s178 + $0xb0] sm:$0xff]
      %v218 = vld [vmem:[%s178 + $0xb8] sm:$0xff]
      %v219 = vld [vmem:[%s178 + $0xc0] sm:$0xff]
      %v220 = vld [vmem:[%s178 + $0xc8] sm:$0xff]
      %v221 = vld [vmem:[%s178 + $0xd0] sm:$0xff]
      %v222 = vld [vmem:[%s178 + $0xd8] sm:$0xff]
      %v223 = vld [vmem:[%s178 + $0xe0] sm:$0xff]
      %v224 = vld [vmem:[%s178 + $0xe8] sm:$0xff]
      %v225 = vld [vmem:[%s178 + $0xf0] sm:$0xff]
      %v226 = vld [vmem:[%s178 + $0xf8] sm:$0xff]
      %v227 = vld [vmem:[%s178 + $0x100] sm:$0xff]
      %v228 = vld [vmem:[%s178 + $0x108] sm:$0xff]
      %v229 = vld [vmem:[%s178 + $0x110] sm:$0xff]
      %v230 = vld [vmem:[%s178 + $0x118] sm:$0xff]
      %v231 = vld [vmem:[%s178 + $0x120] sm:$0xff]
      %v232 = vld [vmem:[%s178 + $0x128] sm:$0xff]
      %v233 = vld [vmem:[%s178 + $0x130] sm:$0xff]
      %v234 = vld [vmem:[%s178 + $0x138] sm:$0xff]
      %v235 = vld [vmem:[%s178 + $0x140] sm:$0xff]
      %v236 = vld [vmem:[%s178 + $0x148] sm:$0xff]
      %v237 = vld [vmem:[%s178 + $0x150] sm:$0xff]
      %v238 = vld [vmem:[%s178 + $0x158] sm:$0xff]
      %v239 = vld [vmem:[%s178 + $0x160] sm:$0xff]
      %v240 = vld [vmem:[%s178 + $0x168] sm:$0xff]
      %v241 = vld [vmem:[%s178 + $0x170] sm:$0xff]
      %v242 = vld [vmem:[%s178 + $0x178] sm:$0xff]
      %v243 = vld [vmem:[%s178 + $0x180] sm:$0xff]
      %v244 = vld [vmem:[%s178 + $0x188] sm:$0xff]
      %v245 = vld [vmem:[%s178 + $0x190] sm:$0xff]
      %v246 = vld [vmem:[%s178 + $0x198] sm:$0xff]
      %v247 = vld [vmem:[%s178 + $0x1a0] sm:$0xff]
      %v248 = vld [vmem:[%s178 + $0x1a8] sm:$0xff]
      %v249 = vld [vmem:[%s178 + $0x1b0] sm:$0xff]
      %v250 = vld [vmem:[%s178 + $0x1b8] sm:$0xff]
      %v251 = vld [vmem:[%s178 + $0x1c0] sm:$0xff]
      %v252 = vld [vmem:[%s178 + $0x1c8] sm:$0xff]
      %v253 = vld [vmem:[%s178 + $0x1d0] sm:$0xff]
      %v254 = vld [vmem:[%s178 + $0x1d8] sm:$0xff]
      %v255 = vld [vmem:[%s178 + $0x1e0] sm:$0xff]
      %v256 = vld [vmem:[%s178 + $0x1e8] sm:$0xff]
      %v257 = vld [vmem:[%s178 + $0x1f0] sm:$0xff]
      %v258 = vld [vmem:[%s178 + $0x1f8] sm:$0xff]
      %v259 = vld [vmem:[%s178 + $0x200] sm:$0xff]
      %v260 = vld [vmem:[%s178 + $0x208] sm:$0xff]
      %v261 = vld [vmem:[%s178 + $0x210] sm:$0xff]
      %v262 = vld [vmem:[%s178 + $0x218] sm:$0xff]
      %v263 = vld [vmem:[%s178 + $0x220] sm:$0xff]
      %v264 = vld [vmem:[%s178 + $0x228] sm:$0xff]
      %v265 = vld [vmem:[%s178 + $0x230] sm:$0xff]
      %v266 = vld [vmem:[%s178 + $0x238] sm:$0xff]
      %v267 = vld [vmem:[%s178 + $0x240] sm:$0xff]
      %v268 = vld [vmem:[%s178 + $0x248] sm:$0xff]
      %v269 = vld [vmem:[%s178 + $0x250] sm:$0xff]
      %v270 = vld [vmem:[%s178 + $0x258] sm:$0xff]
      %v271 = vld [vmem:[%s178 + $0x260] sm:$0xff]
      %v272 = vld [vmem:[%s178 + $0x268] sm:$0xff]
      %v273 = vld [vmem:[%s178 + $0x270] sm:$0xff]
      %v274 = vld [vmem:[%s178 + $0x278] sm:$0xff]
      %v275 = vld [vmem:[%s178 + $0x280] sm:$0xff]
      %v276 = vld [vmem:[%s178 + $0x288] sm:$0xff]
      %v277 = vld [vmem:[%s178 + $0x290] sm:$0xff]
      %v278 = vld [vmem:[%s178 + $0x298] sm:$0xff]
      %v279 = vld [vmem:[%s178 + $0x2a0] sm:$0xff]
      %v280 = vld [vmem:[%s178 + $0x2a8] sm:$0xff]
      %v281 = vld [vmem:[%s178 + $0x2b0] sm:$0xff]
      %v282 = vld [vmem:[%s178 + $0x2b8] sm:$0xff]
      %v283 = vld [vmem:[%s178 + $0x2c0] sm:$0xff]
      %v284 = vld [vmem:[%s178 + $0x2c8] sm:$0xff]
      %v285 = vld [vmem:[%s178 + $0x2d0] sm:$0xff]
      %v286 = vld [vmem:[%s178 + $0x2d8] sm:$0xff]
      %v287 = vld [vmem:[%s178 + $0x2e0] sm:$0xff]
      %v288 = vld [vmem:[%s178 + $0x2e8] sm:$0xff]
      %v289 = vld [vmem:[%s178 + $0x2f0] sm:$0xff]
      %v290 = vld [vmem:[%s178 + $0x2f8] sm:$0xff]
      %v291 = vld [vmem:[%s178 + $0x300] sm:$0xff]
      %v292 = vld [vmem:[%s178 + $0x308] sm:$0xff]
      %v293 = vld [vmem:[%s178 + $0x310] sm:$0xff]
      %v294 = vld [vmem:[%s178 + $0x318] sm:$0xff]
      %v295 = vld [vmem:[%s178 + $0x320] sm:$0xff]
      %v296 = vld [vmem:[%s178 + $0x328] sm:$0xff]
      %v297 = vld [vmem:[%s178 + $0x330] sm:$0xff]
      %v298 = vld [vmem:[%s178 + $0x338] sm:$0xff]
      %v299 = vld [vmem:[%s178 + $0x340] sm:$0xff]
      %v300 = vld [vmem:[%s178 + $0x348] sm:$0xff]
      %v301 = vld [vmem:[%s178 + $0x350] sm:$0xff]
      %v302 = vld [vmem:[%s178 + $0x358] sm:$0xff]
      %v303 = vld [vmem:[%s178 + $0x360] sm:$0xff]
      %v304 = vld [vmem:[%s178 + $0x368] sm:$0xff]
      %v305 = vld [vmem:[%s178 + $0x370] sm:$0xff]
      %v306 = vld [vmem:[%s178 + $0x378] sm:$0xff]
      %v307 = vld [vmem:[%s178 + $0x380] sm:$0xff]
      %v308 = vld [vmem:[%s178 + $0x388] sm:$0xff]
      %v309 = vld [vmem:[%s178 + $0x390] sm:$0xff]
      %v310 = vld [vmem:[%s178 + $0x398] sm:$0xff]
      %v311 = vld [vmem:[%s178 + $0x3a0] sm:$0xff]
      %v312 = vld [vmem:[%s178 + $0x3a8] sm:$0xff]
      %v313 = vld [vmem:[%s178 + $0x3b0] sm:$0xff]
      %v314 = vld [vmem:[%s178 + $0x3b8] sm:$0xff]
      %v315 = vld [vmem:[%s178 + $0x3c0] sm:$0xff]
      %v316 = vld [vmem:[%s178 + $0x3c8] sm:$0xff]
      %v317 = vld [vmem:[%s178 + $0x3d0] sm:$0xff]
      %v318 = vld [vmem:[%s178 + $0x3d8] sm:$0xff]
      %v319 = vld [vmem:[%s178 + $0x3e0] sm:$0xff]
      %v320 = vld [vmem:[%s178 + $0x3e8] sm:$0xff]
      %v321 = vld [vmem:[%s178 + $0x3f0] sm:$0xff]
      %v322 = vld [vmem:[%s178 + $0x3f8] sm:$0xff]
      %v323 = vld [vmem:[%s178 + $0x400] sm:$0xff]
      %v324 = vld [vmem:[%s178 + $0x408] sm:$0xff]
      %v325 = vld [vmem:[%s178 + $0x410] sm:$0xff]
      %v326 = vld [vmem:[%s178 + $0x418] sm:$0xff]
      %v327 = vld [vmem:[%s178 + $0x420] sm:$0xff]
      %v328 = vld [vmem:[%s178 + $0x428] sm:$0xff]
      %v329 = vld [vmem:[%s178 + $0x430] sm:$0xff]
      %v330 = vld [vmem:[%s178 + $0x438] sm:$0xff]
      %v331 = vld [vmem:[%s178 + $0x440] sm:$0xff]
      %v332 = vld [vmem:[%s178 + $0x448] sm:$0xff]
      %v333 = vld [vmem:[%s178 + $0x450] sm:$0xff]
      %v334 = vld [vmem:[%s178 + $0x458] sm:$0xff]
      %v335 = vld [vmem:[%s178 + $0x460] sm:$0xff]
      %v336 = vld [vmem:[%s178 + $0x468] sm:$0xff]
      %v337 = vld [vmem:[%s178 + $0x470] sm:$0xff]
      %v338 = vld [vmem:[%s178 + $0x478] sm:$0xff]
      %v339 = vld [vmem:[%s178 + $0x480] sm:$0xff]
      %v340 = vld [vmem:[%s178 + $0x488] sm:$0xff]
      %v341 = vld [vmem:[%s178 + $0x490] sm:$0xff]
      %v342 = vld [vmem:[%s178 + $0x498] sm:$0xff]
      %v343 = vld [vmem:[%s178 + $0x4a0] sm:$0xff]
      %v344 = vld [vmem:[%s178 + $0x4a8] sm:$0xff]
      %v345 = vld [vmem:[%s178 + $0x4b0] sm:$0xff]
      %v346 = vld [vmem:[%s178 + $0x4b8] sm:$0xff]
      %v347 = vld [vmem:[%s178 + $0x4c0] sm:$0xff]
      %v348 = vld [vmem:[%s178 + $0x4c8] sm:$0xff]
      %v349 = vld [vmem:[%s178 + $0x4d0] sm:$0xff]
      %v350 = vld [vmem:[%s178 + $0x4d8] sm:$0xff]
      %v351 = vld [vmem:[%s178 + $0x4e0] sm:$0xff]
      %v352 = vld [vmem:[%s178 + $0x4e8] sm:$0xff]
      %v353 = vld [vmem:[%s178 + $0x4f0] sm:$0xff]
      %v354 = vld [vmem:[%s178 + $0x4f8] sm:$0xff]
      %v355 = vld [vmem:[%s178 + $0x500] sm:$0xff]
      %v356 = vld [vmem:[%s178 + $0x508] sm:$0xff]
      %v357 = vld [vmem:[%s178 + $0x510] sm:$0xff]
      %v358 = vld [vmem:[%s178 + $0x518] sm:$0xff]
      %v359 = vld [vmem:[%s178 + $0x520] sm:$0xff]
      %v360 = vld [vmem:[%s178 + $0x528] sm:$0xff]
      %v361 = vld [vmem:[%s178 + $0x530] sm:$0xff]
      %v362 = vld [vmem:[%s178 + $0x538] sm:$0xff]
      %v363 = vld [vmem:[%s178 + $0x540] sm:$0xff]
      %v364 = vld [vmem:[%s178 + $0x548] sm:$0xff]
      %v365 = vld [vmem:[%s178 + $0x550] sm:$0xff]
      %v366 = vld [vmem:[%s178 + $0x558] sm:$0xff]
      %v367 = vld [vmem:[%s178 + $0x560] sm:$0xff]
      %v368 = vld [vmem:[%s178 + $0x568] sm:$0xff]
      %v369 = vld [vmem:[%s178 + $0x570] sm:$0xff]
      %v370 = vld [vmem:[%s178 + $0x578] sm:$0xff]
      %v371 = vld [vmem:[%s178 + $0x580] sm:$0xff]
      %v372 = vld [vmem:[%s178 + $0x588] sm:$0xff]
      %v373 = vld [vmem:[%s178 + $0x590] sm:$0xff]
      %v374 = vld [vmem:[%s178 + $0x598] sm:$0xff]
      %v375 = vld [vmem:[%s178 + $0x5a0] sm:$0xff]
      %v376 = vld [vmem:[%s178 + $0x5a8] sm:$0xff]
      %v377 = vld [vmem:[%s178 + $0x5b0] sm:$0xff]
      %v378 = vld [vmem:[%s178 + $0x5b8] sm:$0xff]
      %v379 = vld [vmem:[%s178 + $0x5c0] sm:$0xff]
      %v380 = vld [vmem:[%s178 + $0x5c8] sm:$0xff]
      %v381 = vld [vmem:[%s178 + $0x5d0] sm:$0xff]
      %v382 = vld [vmem:[%s178 + $0x5d8] sm:$0xff]
      %v383 = vld [vmem:[%s178 + $0x5e0] sm:$0xff]
      %v384 = vld [vmem:[%s178 + $0x5e8] sm:$0xff]
      %v385 = vld [vmem:[%s178 + $0x5f0] sm:$0xff]
      %v386 = vld [vmem:[%s178 + $0x5f8] sm:$0xff]
      %v387 = vld [vmem:[%s178 + $0x600] sm:$0xff]
      %v388 = vld [vmem:[%s178 + $0x608] sm:$0xff]
      %v389 = vld [vmem:[%s178 + $0x610] sm:$0xff]
      %v390 = vld [vmem:[%s178 + $0x618] sm:$0xff]
      %v391 = vld [vmem:[%s178 + $0x620] sm:$0xff]
      %v392 = vld [vmem:[%s178 + $0x628] sm:$0xff]
      %v393 = vld [vmem:[%s178 + $0x630] sm:$0xff]
      %v394 = vld [vmem:[%s178 + $0x638] sm:$0xff]
      %v395 = vld [vmem:[%s178 + $0x640] sm:$0xff]
      %v396 = vld [vmem:[%s178 + $0x648] sm:$0xff]
      %v397 = vld [vmem:[%s178 + $0x650] sm:$0xff]
      %v398 = vld [vmem:[%s178 + $0x658] sm:$0xff]
      %v399 = vld [vmem:[%s178 + $0x660] sm:$0xff]
      %v400 = vld [vmem:[%s178 + $0x668] sm:$0xff]
      %v401 = vld [vmem:[%s178 + $0x670] sm:$0xff]
      %v402 = vld [vmem:[%s178 + $0x678] sm:$0xff]
      %v403 = vld [vmem:[%s178 + $0x680] sm:$0xff]
      %v404 = vld [vmem:[%s178 + $0x688] sm:$0xff]
      %v405 = vld [vmem:[%s178 + $0x690] sm:$0xff]
      %v406 = vld [vmem:[%s178 + $0x698] sm:$0xff]
      %v407 = vld [vmem:[%s178 + $0x6a0] sm:$0xff]
      %v408 = vld [vmem:[%s178 + $0x6a8] sm:$0xff]
      %v409 = vld [vmem:[%s178 + $0x6b0] sm:$0xff]
      %v410 = vld [vmem:[%s178 + $0x6b8] sm:$0xff]
      %v411 = vld [vmem:[%s178 + $0x6c0] sm:$0xff]
      %v412 = vld [vmem:[%s178 + $0x6c8] sm:$0xff]
      %v413 = vld [vmem:[%s178 + $0x6d0] sm:$0xff]
      %v414 = vld [vmem:[%s178 + $0x6d8] sm:$0xff]
      %v415 = vld [vmem:[%s178 + $0x6e0] sm:$0xff]
      %v416 = vld [vmem:[%s178 + $0x6e8] sm:$0xff]
      %v417 = vld [vmem:[%s178 + $0x6f0] sm:$0xff]
      %v418 = vld [vmem:[%s178 + $0x6f8] sm:$0xff]
      %v419 = vld [vmem:[%s178 + $0x700] sm:$0xff]
      %v420 = vld [vmem:[%s178 + $0x708] sm:$0xff]
      %v421 = vld [vmem:[%s178 + $0x710] sm:$0xff]
      %v422 = vld [vmem:[%s178 + $0x718] sm:$0xff]
      %v423 = vld [vmem:[%s178 + $0x720] sm:$0xff]
      %v424 = vld [vmem:[%s178 + $0x728] sm:$0xff]
      %v425 = vld [vmem:[%s178 + $0x730] sm:$0xff]
      %v426 = vld [vmem:[%s178 + $0x738] sm:$0xff]
      %v427 = vld [vmem:[%s178 + $0x740] sm:$0xff]
      %v428 = vld [vmem:[%s178 + $0x748] sm:$0xff]
      %v429 = vld [vmem:[%s178 + $0x750] sm:$0xff]
      %v430 = vld [vmem:[%s178 + $0x758] sm:$0xff]
      %v431 = vld [vmem:[%s178 + $0x760] sm:$0xff]
      %v432 = vld [vmem:[%s178 + $0x768] sm:$0xff]
      %v433 = vld [vmem:[%s178 + $0x770] sm:$0xff]
      %v434 = vld [vmem:[%s178 + $0x778] sm:$0xff]
      %v435 = vld [vmem:[%s178 + $0x780] sm:$0xff]
      %v436 = vld [vmem:[%s178 + $0x788] sm:$0xff]
      %v437 = vld [vmem:[%s178 + $0x790] sm:$0xff]
      %v438 = vld [vmem:[%s178 + $0x798] sm:$0xff]
      %v439 = vld [vmem:[%s178 + $0x7a0] sm:$0xff]
      %v440 = vld [vmem:[%s178 + $0x7a8] sm:$0xff]
      %v441 = vld [vmem:[%s178 + $0x7b0] sm:$0xff]
      %v442 = vld [vmem:[%s178 + $0x7b8] sm:$0xff]
      %v443 = vld [vmem:[%s178 + $0x7c0] sm:$0xff]
      %v444 = vld [vmem:[%s178 + $0x7c8] sm:$0xff]
      %v445 = vld [vmem:[%s178 + $0x7d0] sm:$0xff]
      %v446 = vld [vmem:[%s178 + $0x7d8] sm:$0xff]
      %v447 = vld [vmem:[%s178 + $0x7e0] sm:$0xff]
      %v448 = vld [vmem:[%s178 + $0x7e8] sm:$0xff]
      %v449 = vld [vmem:[%s178 + $0x7f0] sm:$0xff]
      %v450 = vld [vmem:[%s178 + $0x7f8] sm:$0xff]
      %v451 = vld [vmem:[%s178 + $0x800] sm:$0xff]
      %v452 = vld [vmem:[%s178 + $0x808] sm:$0xff]
      %v453 = vld [vmem:[%s178 + $0x810] sm:$0xff]
      %v454 = vld [vmem:[%s178 + $0x818] sm:$0xff]
      %v455 = vld [vmem:[%s178 + $0x820] sm:$0xff]
      %v456 = vld [vmem:[%s178 + $0x828] sm:$0xff]
      %v457 = vld [vmem:[%s178 + $0x830] sm:$0xff]
      %v458 = vld [vmem:[%s178 + $0x838] sm:$0xff]
      %v459 = vld [vmem:[%s178 + $0x840] sm:$0xff]
      %v460 = vld [vmem:[%s178 + $0x848] sm:$0xff]
      %v461 = vld [vmem:[%s178 + $0x850] sm:$0xff]
      %v462 = vld [vmem:[%s178 + $0x858] sm:$0xff]
      %v463 = vld [vmem:[%s178 + $0x860] sm:$0xff]
      %v464 = vld [vmem:[%s178 + $0x868] sm:$0xff]
      %v465 = vld [vmem:[%s178 + $0x870] sm:$0xff]
      %v466 = vld [vmem:[%s178 + $0x878] sm:$0xff]
      %v467 = vld [vmem:[%s178 + $0x880] sm:$0xff]
      %v468 = vld [vmem:[%s178 + $0x888] sm:$0xff]
      %v469 = vld [vmem:[%s178 + $0x890] sm:$0xff]
      %v470 = vld [vmem:[%s178 + $0x898] sm:$0xff]
      %v471 = vld [vmem:[%s178 + $0x8a0] sm:$0xff]
      %v472 = vld [vmem:[%s178 + $0x8a8] sm:$0xff]
      %v473 = vld [vmem:[%s178 + $0x8b0] sm:$0xff]
      %v474 = vld [vmem:[%s178 + $0x8b8] sm:$0xff]
      %v475 = vld [vmem:[%s178 + $0x8c0] sm:$0xff]
      %v476 = vld [vmem:[%s178 + $0x8c8] sm:$0xff]
      %v477 = vld [vmem:[%s178 + $0x8d0] sm:$0xff]
      %v478 = vld [vmem:[%s178 + $0x8d8] sm:$0xff]
      %v479 = vld [vmem:[%s178 + $0x8e0] sm:$0xff]
      %v480 = vld [vmem:[%s178 + $0x8e8] sm:$0xff]
      %v481 = vld [vmem:[%s178 + $0x8f0] sm:$0xff]
      %v482 = vld [vmem:[%s178 + $0x8f8] sm:$0xff]
      %v483 = vld [vmem:[%s178 + $0x900] sm:$0xff]
      %v484 = vld [vmem:[%s178 + $0x908] sm:$0xff]
      %v485 = vld [vmem:[%s178 + $0x910] sm:$0xff]
      %v486 = vld [vmem:[%s178 + $0x918] sm:$0xff]
      %v487 = vld [vmem:[%s178 + $0x920] sm:$0xff]
      %v488 = vld [vmem:[%s178 + $0x928] sm:$0xff]
      %v489 = vld [vmem:[%s178 + $0x930] sm:$0xff]
      %v490 = vld [vmem:[%s178 + $0x938] sm:$0xff]
      %v491 = vld [vmem:[%s178 + $0x940] sm:$0xff]
      %v492 = vld [vmem:[%s178 + $0x948] sm:$0xff]
      %v493 = vld [vmem:[%s178 + $0x950] sm:$0xff]
      %v494 = vld [vmem:[%s178 + $0x958] sm:$0xff]
      %v495 = vld [vmem:[%s178 + $0x960] sm:$0xff]
      %v496 = vld [vmem:[%s178 + $0x968] sm:$0xff]
      %v497 = vld [vmem:[%s178 + $0x970] sm:$0xff]
      %v498 = vld [vmem:[%s178 + $0x978] sm:$0xff]
      %v499 = vld [vmem:[%s178 + $0x980] sm:$0xff]
      %v500 = vld [vmem:[%s178 + $0x988] sm:$0xff]
      %v501 = vld [vmem:[%s178 + $0x990] sm:$0xff]
      %v502 = vld [vmem:[%s178 + $0x998] sm:$0xff]
      %v503 = vld [vmem:[%s178 + $0x9a0] sm:$0xff]
      %v504 = vld [vmem:[%s178 + $0x9a8] sm:$0xff]
      %v505 = vld [vmem:[%s178 + $0x9b0] sm:$0xff]
      %v506 = vld [vmem:[%s178 + $0x9b8] sm:$0xff]
      %v507 = vld [vmem:[%s178 + $0x9c0] sm:$0xff]
      %v508 = vld [vmem:[%s178 + $0x9c8] sm:$0xff]
      %v509 = vld [vmem:[%s178 + $0x9d0] sm:$0xff]
      %v510 = vld [vmem:[%s178 + $0x9d8] sm:$0xff]
      %v511 = vld [vmem:[%s178 + $0x9e0] sm:$0xff]
      %v512 = vld [vmem:[%s178 + $0x9e8] sm:$0xff]
      %v513 = vld [vmem:[%s178 + $0x9f0] sm:$0xff]
      %v514 = vld [vmem:[%s178 + $0x9f8] sm:$0xff]
      %v515 = vld [vmem:[%s178 + $0xa00] sm:$0xff]
      %v516 = vld [vmem:[%s178 + $0xa08] sm:$0xff]
      %v517 = vld [vmem:[%s178 + $0xa10] sm:$0xff]
      %v518 = vld [vmem:[%s178 + $0xa18] sm:$0xff]
      %v519 = vld [vmem:[%s178 + $0xa20] sm:$0xff]
      %v520 = vld [vmem:[%s178 + $0xa28] sm:$0xff]
      %v521 = vld [vmem:[%s178 + $0xa30] sm:$0xff]
      %v522 = vld [vmem:[%s178 + $0xa38] sm:$0xff]
      %v523 = vld [vmem:[%s178 + $0xa40] sm:$0xff]
      %v524 = vld [vmem:[%s178 + $0xa48] sm:$0xff]
      %v525 = vld [vmem:[%s178 + $0xa50] sm:$0xff]
      %v526 = vld [vmem:[%s178 + $0xa58] sm:$0xff]
      %v527 = vld [vmem:[%s178 + $0xa60] sm:$0xff]
      %v528 = vld [vmem:[%s178 + $0xa68] sm:$0xff]
      %v529 = vld [vmem:[%s178 + $0xa70] sm:$0xff]
      %v530 = vld [vmem:[%s178 + $0xa78] sm:$0xff]
      %v531 = vld [vmem:[%s178 + $0xa80] sm:$0xff]
      %v532 = vld [vmem:[%s178 + $0xa88] sm:$0xff]
      %v533 = vld [vmem:[%s178 + $0xa90] sm:$0xff]
      %v534 = vld [vmem:[%s178 + $0xa98] sm:$0xff]
      %v535 = vld [vmem:[%s178 + $0xaa0] sm:$0xff]
      %v536 = vld [vmem:[%s178 + $0xaa8] sm:$0xff]
      %v537 = vld [vmem:[%s178 + $0xab0] sm:$0xff]
      %v538 = vld [vmem:[%s178 + $0xab8] sm:$0xff]
      %v539 = vld [vmem:[%s178 + $0xac0] sm:$0xff]
      %v540 = vld [vmem:[%s178 + $0xac8] sm:$0xff]
      %v541 = vld [vmem:[%s178 + $0xad0] sm:$0xff]
      %v542 = vld [vmem:[%s178 + $0xad8] sm:$0xff]
      %v543 = vld [vmem:[%s178 + $0xae0] sm:$0xff]
      %v544 = vld [vmem:[%s178 + $0xae8] sm:$0xff]
      %v545 = vld [vmem:[%s178 + $0xaf0] sm:$0xff]
      %v546 = vld [vmem:[%s178 + $0xaf8] sm:$0xff]
      %v547 = vld [vmem:[%s178 + $0xb00] sm:$0xff]
      %v548 = vld [vmem:[%s178 + $0xb08] sm:$0xff]
      %v549 = vld [vmem:[%s178 + $0xb10] sm:$0xff]
      %v550 = vld [vmem:[%s178 + $0xb18] sm:$0xff]
      %v551 = vld [vmem:[%s178 + $0xb20] sm:$0xff]
      %v552 = vld [vmem:[%s178 + $0xb28] sm:$0xff]
      %v553 = vld [vmem:[%s178 + $0xb30] sm:$0xff]
      %v554 = vld [vmem:[%s178 + $0xb38] sm:$0xff]
      %v555 = vld [vmem:[%s178 + $0xb40] sm:$0xff]
      %v556 = vld [vmem:[%s178 + $0xb48] sm:$0xff]
      %v557 = vld [vmem:[%s178 + $0xb50] sm:$0xff]
      %v558 = vld [vmem:[%s178 + $0xb58] sm:$0xff]
      %v559 = vld [vmem:[%s178 + $0xb60] sm:$0xff]
      %v560 = vld [vmem:[%s178 + $0xb68] sm:$0xff]
      %v561 = vld [vmem:[%s178 + $0xb70] sm:$0xff]
      %v562 = vld [vmem:[%s178 + $0xb78] sm:$0xff]
      %v563 = vld [vmem:[%s178 + $0xb80] sm:$0xff]
      %v564 = vld [vmem:[%s178 + $0xb88] sm:$0xff]
      %v565 = vld [vmem:[%s178 + $0xb90] sm:$0xff]
      %v566 = vld [vmem:[%s178 + $0xb98] sm:$0xff]
      %v567 = vld [vmem:[%s178 + $0xba0] sm:$0xff]
      %v568 = vld [vmem:[%s178 + $0xba8] sm:$0xff]
      %v569 = vld [vmem:[%s178 + $0xbb0] sm:$0xff]
      %v570 = vld [vmem:[%s178 + $0xbb8] sm:$0xff]
      %v571 = vld [vmem:[%s178 + $0xbc0] sm:$0xff]
      %v572 = vld [vmem:[%s178 + $0xbc8] sm:$0xff]
      %v573 = vld [vmem:[%s178 + $0xbd0] sm:$0xff]
      %v574 = vld [vmem:[%s178 + $0xbd8] sm:$0xff]
      %v575 = vld [vmem:[%s178 + $0xbe0] sm:$0xff]
      %v576 = vld [vmem:[%s178 + $0xbe8] sm:$0xff]
      %v577 = vld [vmem:[%s178 + $0xbf0] sm:$0xff]
      %v578 = vld [vmem:[%s178 + $0xbf8] sm:$0xff]
      %v579 = vld [vmem:[%s178 + $0xc00] sm:$0xff]
      %v580 = vld [vmem:[%s178 + $0xc08] sm:$0xff]
      %v581 = vld [vmem:[%s178 + $0xc10] sm:$0xff]
      %v582 = vld [vmem:[%s178 + $0xc18] sm:$0xff]
      %v583 = vld [vmem:[%s178 + $0xc20] sm:$0xff]
      %v584 = vld [vmem:[%s178 + $0xc28] sm:$0xff]
      %v585 = vld [vmem:[%s178 + $0xc30] sm:$0xff]
      %v586 = vld [vmem:[%s178 + $0xc38] sm:$0xff]
      %v587 = vld [vmem:[%s178 + $0xc40] sm:$0xff]
      %v588 = vld [vmem:[%s178 + $0xc48] sm:$0xff]
      %v589 = vld [vmem:[%s178 + $0xc50] sm:$0xff]
      %v590 = vld [vmem:[%s178 + $0xc58] sm:$0xff]
      %v591 = vld [vmem:[%s178 + $0xc60] sm:$0xff]
      %v592 = vld [vmem:[%s178 + $0xc68] sm:$0xff]
      %v593 = vld [vmem:[%s178 + $0xc70] sm:$0xff]
      %v594 = vld [vmem:[%s178 + $0xc78] sm:$0xff]
      %v595 = vld [vmem:[%s178 + $0xc80] sm:$0xff]
      %v596 = vld [vmem:[%s178 + $0xc88] sm:$0xff]
      %v597 = vld [vmem:[%s178 + $0xc90] sm:$0xff]
      %v598 = vld [vmem:[%s178 + $0xc98] sm:$0xff]
      %v599 = vld [vmem:[%s178 + $0xca0] sm:$0xff]
      %v600 = vld [vmem:[%s178 + $0xca8] sm:$0xff]
      %v601 = vld [vmem:[%s178 + $0xcb0] sm:$0xff]
      %v602 = vld [vmem:[%s178 + $0xcb8] sm:$0xff]
      %v603 = vld [vmem:[%s178 + $0xcc0] sm:$0xff]
      %v604 = vld [vmem:[%s178 + $0xcc8] sm:$0xff]
      %v605 = vld [vmem:[%s178 + $0xcd0] sm:$0xff]
      %v606 = vld [vmem:[%s178 + $0xcd8] sm:$0xff]
      %v607 = vld [vmem:[%s178 + $0xce0] sm:$0xff]
      %v608 = vld [vmem:[%s178 + $0xce8] sm:$0xff]
      %v609 = vld [vmem:[%s178 + $0xcf0] sm:$0xff]
      %v610 = vld [vmem:[%s178 + $0xcf8] sm:$0xff]
      %v611 = vld [vmem:[%s178 + $0xd00] sm:$0xff]
      %v612 = vld [vmem:[%s178 + $0xd08] sm:$0xff]
      %v613 = vld [vmem:[%s178 + $0xd10] sm:$0xff]
      %v614 = vld [vmem:[%s178 + $0xd18] sm:$0xff]
      %v615 = vld [vmem:[%s178 + $0xd20] sm:$0xff]
      %v616 = vld [vmem:[%s178 + $0xd28] sm:$0xff]
      %v617 = vld [vmem:[%s178 + $0xd30] sm:$0xff]
      %v618 = vld [vmem:[%s178 + $0xd38] sm:$0xff]
      %v619 = vld [vmem:[%s178 + $0xd40] sm:$0xff]
      %v620 = vld [vmem:[%s178 + $0xd48] sm:$0xff]
      %v621 = vld [vmem:[%s178 + $0xd50] sm:$0xff]
      %v622 = vld [vmem:[%s178 + $0xd58] sm:$0xff]
      %v623 = vld [vmem:[%s178 + $0xd60] sm:$0xff]
      %v624 = vld [vmem:[%s178 + $0xd68] sm:$0xff]
      %v625 = vld [vmem:[%s178 + $0xd70] sm:$0xff]
      %v626 = vld [vmem:[%s178 + $0xd78] sm:$0xff]
      %v627 = vld [vmem:[%s178 + $0xd80] sm:$0xff]
      %v628 = vld [vmem:[%s178 + $0xd88] sm:$0xff]
      %v629 = vld [vmem:[%s178 + $0xd90] sm:$0xff]
      %v630 = vld [vmem:[%s178 + $0xd98] sm:$0xff]
      %v631 = vld [vmem:[%s178 + $0xda0] sm:$0xff]
      %v632 = vld [vmem:[%s178 + $0xda8] sm:$0xff]
      %v633 = vld [vmem:[%s178 + $0xdb0] sm:$0xff]
      %v634 = vld [vmem:[%s178 + $0xdb8] sm:$0xff]
      %v635 = vld [vmem:[%s178 + $0xdc0] sm:$0xff]
      %v636 = vld [vmem:[%s178 + $0xdc8] sm:$0xff]
      %v637 = vld [vmem:[%s178 + $0xdd0] sm:$0xff]
      %v638 = vld [vmem:[%s178 + $0xdd8] sm:$0xff]
      %v639 = vld [vmem:[%s178 + $0xde0] sm:$0xff]
      %v640 = vld [vmem:[%s178 + $0xde8] sm:$0xff]
      %v641 = vld [vmem:[%s178 + $0xdf0] sm:$0xff]
      %v642 = vld [vmem:[%s178 + $0xdf8] sm:$0xff]
      %v643 = vld [vmem:[%s178 + $0xe00] sm:$0xff]
      %v644 = vld [vmem:[%s178 + $0xe08] sm:$0xff]
      %v645 = vld [vmem:[%s178 + $0xe10] sm:$0xff]
      %v646 = vld [vmem:[%s178 + $0xe18] sm:$0xff]
      %v647 = vld [vmem:[%s178 + $0xe20] sm:$0xff]
      %v648 = vld [vmem:[%s178 + $0xe28] sm:$0xff]
      %v649 = vld [vmem:[%s178 + $0xe30] sm:$0xff]
      %v650 = vld [vmem:[%s178 + $0xe38] sm:$0xff]
      %v651 = vld [vmem:[%s178 + $0xe40] sm:$0xff]
      %v652 = vld [vmem:[%s178 + $0xe48] sm:$0xff]
      %v653 = vld [vmem:[%s178 + $0xe50] sm:$0xff]
      %v654 = vld [vmem:[%s178 + $0xe58] sm:$0xff]
      %v655 = vld [vmem:[%s178 + $0xe60] sm:$0xff]
      %v656 = vld [vmem:[%s178 + $0xe68] sm:$0xff]
      %v657 = vld [vmem:[%s178 + $0xe70] sm:$0xff]
      %v658 = vld [vmem:[%s178 + $0xe78] sm:$0xff]
      %v659 = vld [vmem:[%s178 + $0xe80] sm:$0xff]
      %v660 = vld [vmem:[%s178 + $0xe88] sm:$0xff]
      %v661 = vld [vmem:[%s178 + $0xe90] sm:$0xff]
      %v662 = vld [vmem:[%s178 + $0xe98] sm:$0xff]
      %v663 = vld [vmem:[%s178 + $0xea0] sm:$0xff]
      %v664 = vld [vmem:[%s178 + $0xea8] sm:$0xff]
      %v665 = vld [vmem:[%s178 + $0xeb0] sm:$0xff]
      %v666 = vld [vmem:[%s178 + $0xeb8] sm:$0xff]
      %v667 = vld [vmem:[%s178 + $0xec0] sm:$0xff]
      %v668 = vld [vmem:[%s178 + $0xec8] sm:$0xff]
      %v669 = vld [vmem:[%s178 + $0xed0] sm:$0xff]
      %v670 = vld [vmem:[%s178 + $0xed8] sm:$0xff]
      %v671 = vld [vmem:[%s178 + $0xee0] sm:$0xff]
      %v672 = vld [vmem:[%s178 + $0xee8] sm:$0xff]
      %v673 = vld [vmem:[%s178 + $0xef0] sm:$0xff]
      %v674 = vld [vmem:[%s178 + $0xef8] sm:$0xff]
      %683 = vst [vmem:[#allocation1] ss:$4 sm:$0xff] %v187
      %s684 = scalar_lea.vmem [#allocation1], 32
      %685 = vst [vmem:[%s684] ss:$4 sm:$0xff] %v188
      %v686 = vld.sshfl [vmem:[#allocation1] sm:$0xff pattern:$0x73625140]
      %v687 = vld.sshfl [vmem:[#allocation1 + $0x8] sm:$0xff pattern:$0x73625140]
      %v688 = vld.sshfl [vmem:[#allocation1 + $0x10] sm:$0xff pattern:$0x73625140]
      %v689 = vld.sshfl [vmem:[#allocation1 + $0x18] sm:$0xff pattern:$0x73625140]
      %v690 = vld.sshfl [vmem:[#allocation1 + $0x20] sm:$0xff pattern:$0x73625140]
      %v691 = vld.sshfl [vmem:[#allocation1 + $0x28] sm:$0xff pattern:$0x73625140]
      %v692 = vld.sshfl [vmem:[#allocation1 + $0x30] sm:$0xff pattern:$0x73625140]
      %v693 = vld.sshfl [vmem:[#allocation1 + $0x38] sm:$0xff pattern:$0x73625140]
      %694 = vst [vmem:[#allocation1] ss:$4 sm:$0xff] %v189
      %695 = vst [vmem:[%s684] ss:$4 sm:$0xff] %v190
      %v696 = vld.sshfl [vmem:[#allocation1] sm:$0xff pattern:$0x73625140]
      %v697 = vld.sshfl [vmem:[#allocation1 + $0x8] sm:$0xff pattern:$0x73625140]
      %v698 = vld.sshfl [vmem:[#allocation1 + $0x10] sm:$0xff pattern:$0x73625140]
      %v699 = vld.sshfl [vmem:[#allocation1 + $0x18] sm:$0xff pattern:$0x73625140]
      %v700 = vld.sshfl [vmem:[#allocation1 + $0x20] sm:$0xff pattern:$0x73625140]
      %v701 = vld.sshfl [vmem:[#allocation1 + $0x28] sm:$0xff pattern:$0x73625140]
      %v702 = vld.sshfl [vmem:[#allocation1 + $0x30] sm:$0xff pattern:$0x73625140]
      %v703 = vld.sshfl [vmem:[#allocation1 + $0x38] sm:$0xff pattern:$0x73625140]
      %704 = vst [vmem:[#allocation1] ss:$4 sm:$0xff] %v191
      %705 = vst [vmem:[%s684] ss:$4 sm:$0xff] %v192
      %v706 = vld.sshfl [vmem:[#allocation1] sm:$0xff pattern:$0x73625140]
      %v707 = vld.sshfl [vmem:[#allocation1 + $0x8] sm:$0xff pattern:$0x73625140]
      %v708 = vld.sshfl [vmem:[#allocation1 + $0x10] sm:$0xff pattern:$0x73625140]
      %v709 = vld.sshfl [vmem:[#allocation1 + $0x18] sm:$0xff pattern:$0x73625140]
      %v710 = vld.sshfl [vmem:[#allocation1 + $0x20] sm:$0xff pattern:$0x73625140]
      %v711 = vld.sshfl [vmem:[#allocation1 + $0x28] sm:$0xff pattern:$0x73625140]
      %v712 = vld.sshfl [vmem:[#allocation1 + $0x30] sm:$0xff pattern:$0x73625140]
      %v713 = vld.sshfl [vmem:[#allocation1 + $0x38] sm:$0xff pattern:$0x73625140]
      %714 = vst [vmem:[#allocation1] ss:$4 sm:$0xff] %v193
      %715 = vst [vmem:[%s684] ss:$4 sm:$0xff] %v194
      %v716 = vld.sshfl [vmem:[#allocation1] sm:$0xff pattern:$0x73625140]
      %v717 = vld.sshfl [vmem:[#allocation1 + $0x8] sm:$0xff pattern:$0x73625140]
      %v718 = vld.sshfl [vmem:[#allocation1 + $0x10] sm:$0xff pattern:$0x73625140]
      %v719 = vld.sshfl [vmem:[#allocation1 + $0x18] sm:$0xff pattern:$0x73625140]
      %v720 = vld.sshfl [vmem:[#allocation1 + $0x20] sm:$0xff pattern:$0x73625140]
      %v721 = vld.sshfl [vmem:[#allocation1 + $0x28] sm:$0xff pattern:$0x73625140]
      %752 = vmatpush.msra.mxu0 %v210
      %753 = vmatpush.msra.mxu0 %v209
      %754 = vmatpush.msra.mxu0 %v208
      %755 = vmatpush.msra.mxu0 %v207
      %756 = vmatpush.msra.mxu0 %v206
      %757 = vmatpush.msra.mxu0 %v205
      %758 = vmatpush.msra.mxu0 %v204
      %759 = vmatpush.msra.mxu0 %v203
      %760 = vmatpush.msra.mxu0 %v202
      %761 = vmatpush.msra.mxu0 %v201
      %762 = vmatpush.msra.mxu0 %v200
      %763 = vmatpush.msra.mxu0 %v199
      %764 = vmatpush.msra.mxu0 %v198
      %765 = vmatpush.msra.mxu0 %v197
      %766 = vmatpush.msra.mxu0 %v196
      %767 = vmatpush.msra.mxu0 %v195
      %768 = vmatmul.f32.gmra.mxu0 %v686
      %v769 = vpop.f32.mrf.mxu0
      %v770 = vadd.f32 0.0, %v769
      %771 = vdwg.mxu0
      %772 = vmatpush.msra.mxu0 %v226
      %773 = vmatpush.msra.mxu0 %v225
      %774 = vmatpush.msra.mxu0 %v224
      %775 = vmatpush.msra.mxu0 %v223
      %776 = vmatpush.msra.mxu0 %v222
      %777 = vmatpush.msra.mxu0 %v221
      %778 = vmatpush.msra.mxu0 %v220
      %779 = vmatpush.msra.mxu0 %v219
      %780 = vmatpush.msra.mxu0 %v218
      %781 = vmatpush.msra.mxu0 %v217
      %782 = vmatpush.msra.mxu0 %v216
      %783 = vmatpush.msra.mxu0 %v215
      %784 = vmatpush.msra.mxu0 %v214
      %785 = vmatpush.msra.mxu0 %v213
      %786 = vmatpush.msra.mxu0 %v212
      %787 = vmatpush.msra.mxu0 %v211
      %788 = vmatmul.f32.gmra.mxu0 %v687
      %v789 = vpop.f32.mrf.mxu0
      %v790 = vadd.f32 %v770, %v789
      %791 = vdwg.mxu0
      %792 = vmatpush.msra.mxu0 %v242
      %793 = vmatpush.msra.mxu0 %v241
      %794 = vmatpush.msra.mxu0 %v240
      %795 = vmatpush.msra.mxu0 %v239
      %796 = vmatpush.msra.mxu0 %v238
      %797 = vmatpush.msra.mxu0 %v237
      %798 = vmatpush.msra.mxu0 %v236
      %799 = vmatpush.msra.mxu0 %v235
      %800 = vmatpush.msra.mxu0 %v234
      %801 = vmatpush.msra.mxu0 %v233
      %802 = vmatpush.msra.mxu0 %v232
      %803 = vmatpush.msra.mxu0 %v231
      %804 = vmatpush.msra.mxu0 %v230
      %805 = vmatpush.msra.mxu0 %v229
      %806 = vmatpush.msra.mxu0 %v228
      %807 = vmatpush.msra.mxu0 %v227
      %808 = vmatmul.f32.gmra.mxu0 %v688
      %v809 = vpop.f32.mrf.mxu0
      %v810 = vadd.f32 %v790, %v809
      %811 = vdwg.mxu0
      %812 = vmatpush.msra.mxu0 %v258
      %813 = vmatpush.msra.mxu0 %v257
      %814 = vmatpush.msra.mxu0 %v256
      %815 = vmatpush.msra.mxu0 %v255
      %816 = vmatpush.msra.mxu0 %v254
      %817 = vmatpush.msra.mxu0 %v253
      %818 = vmatpush.msra.mxu0 %v252
      %819 = vmatpush.msra.mxu0 %v251
      %820 = vmatpush.msra.mxu0 %v250
      %821 = vmatpush.msra.mxu0 %v249
      %822 = vmatpush.msra.mxu0 %v248
      %823 = vmatpush.msra.mxu0 %v247
      %824 = vmatpush.msra.mxu0 %v246
      %825 = vmatpush.msra.mxu0 %v245
      %826 = vmatpush.msra.mxu0 %v244
      %827 = vmatpush.msra.mxu0 %v243
      %828 = vmatmul.f32.gmra.mxu0 %v689
      %v829 = vpop.f32.mrf.mxu0
      %v830 = vadd.f32 %v810, %v829
      %831 = vdwg.mxu0
      %832 = vmatpush.msra.mxu0 %v274
      %833 = vmatpush.msra.mxu0 %v273
      %834 = vmatpush.msra.mxu0 %v272
      %835 = vmatpush.msra.mxu0 %v271
      %836 = vmatpush.msra.mxu0 %v270
      %837 = vmatpush.msra.mxu0 %v269
      %838 = vmatpush.msra.mxu0 %v268
      %839 = vmatpush.msra.mxu0 %v267
      %840 = vmatpush.msra.mxu0 %v266
      %841 = vmatpush.msra.mxu0 %v265
      %842 = vmatpush.msra.mxu0 %v264
      %843 = vmatpush.msra.mxu0 %v263
      %844 = vmatpush.msra.mxu0 %v262
      %845 = vmatpush.msra.mxu0 %v261
      %846 = vmatpush.msra.mxu0 %v260
      %847 = vmatpush.msra.mxu0 %v259
      %848 = vmatmul.f32.gmra.mxu0 %v690
      %v849 = vpop.f32.mrf.mxu0
      %v850 = vadd.f32 %v830, %v849
      %851 = vdwg.mxu0
      %852 = vmatpush.msra.mxu0 %v290
      %853 = vmatpush.msra.mxu0 %v289
      %854 = vmatpush.msra.mxu0 %v288
      %855 = vmatpush.msra.mxu0 %v287
      %856 = vmatpush.msra.mxu0 %v286
      %857 = vmatpush.msra.mxu0 %v285
      %858 = vmatpush.msra.mxu0 %v284
      %859 = vmatpush.msra.mxu0 %v283
      %860 = vmatpush.msra.mxu0 %v282
      %861 = vmatpush.msra.mxu0 %v281
      %862 = vmatpush.msra.mxu0 %v280
      %863 = vmatpush.msra.mxu0 %v279
      %864 = vmatpush.msra.mxu0 %v278
      %865 = vmatpush.msra.mxu0 %v277
      %866 = vmatpush.msra.mxu0 %v276
      %867 = vmatpush.msra.mxu0 %v275
      %868 = vmatmul.f32.gmra.mxu0 %v691
      %v869 = vpop.f32.mrf.mxu0
      %v870 = vadd.f32 %v850, %v869
      %871 = vdwg.mxu0
      %872 = vmatpush.msra.mxu0 %v306
      %873 = vmatpush.msra.mxu0 %v305
      %874 = vmatpush.msra.mxu0 %v304
      %875 = vmatpush.msra.mxu0 %v303
      %876 = vmatpush.msra.mxu0 %v302
      %877 = vmatpush.msra.mxu0 %v301
      %878 = vmatpush.msra.mxu0 %v300
      %879 = vmatpush.msra.mxu0 %v299
      %880 = vmatpush.msra.mxu0 %v298
      %881 = vmatpush.msra.mxu0 %v297
      %882 = vmatpush.msra.mxu0 %v296
      %883 = vmatpush.msra.mxu0 %v295
      %884 = vmatpush.msra.mxu0 %v294
      %885 = vmatpush.msra.mxu0 %v293
      %886 = vmatpush.msra.mxu0 %v292
      %887 = vmatpush.msra.mxu0 %v291
      %888 = vmatmul.f32.gmra.mxu0 %v692
      %v889 = vpop.f32.mrf.mxu0
      %v890 = vadd.f32 %v870, %v889
      %891 = vdwg.mxu0
      %892 = vmatpush.msra.mxu0 %v322
      %893 = vmatpush.msra.mxu0 %v321
      %894 = vmatpush.msra.mxu0 %v320
      %895 = vmatpush.msra.mxu0 %v319
      %896 = vmatpush.msra.mxu0 %v318
      %897 = vmatpush.msra.mxu0 %v317
      %898 = vmatpush.msra.mxu0 %v316
      %899 = vmatpush.msra.mxu0 %v315
      %900 = vmatpush.msra.mxu0 %v314
      %901 = vmatpush.msra.mxu0 %v313
      %902 = vmatpush.msra.mxu0 %v312
      %903 = vmatpush.msra.mxu0 %v311
      %904 = vmatpush.msra.mxu0 %v310
      %905 = vmatpush.msra.mxu0 %v309
      %906 = vmatpush.msra.mxu0 %v308
      %907 = vmatpush.msra.mxu0 %v307
      %908 = vmatmul.f32.gmra.mxu0 %v693
      %v909 = vpop.f32.mrf.mxu0
      %v910 = vadd.f32 %v890, %v909
      %911 = vdwg.mxu0
      %912 = vmatpush.msra.mxu0 %v338
      %913 = vmatpush.msra.mxu0 %v337
      %914 = vmatpush.msra.mxu0 %v336
      %915 = vmatpush.msra.mxu0 %v335
      %916 = vmatpush.msra.mxu0 %v334
      %917 = vmatpush.msra.mxu0 %v333
      %918 = vmatpush.msra.mxu0 %v332
      %919 = vmatpush.msra.mxu0 %v331
      %920 = vmatpush.msra.mxu0 %v330
      %921 = vmatpush.msra.mxu0 %v329
      %922 = vmatpush.msra.mxu0 %v328
      %923 = vmatpush.msra.mxu0 %v327
      %924 = vmatpush.msra.mxu0 %v326
      %925 = vmatpush.msra.mxu0 %v325
      %926 = vmatpush.msra.mxu0 %v324
      %927 = vmatpush.msra.mxu0 %v323
      %928 = vmatmul.f32.gmra.mxu0 %v696
      %v929 = vpop.f32.mrf.mxu0
      %v930 = vadd.f32 %v910, %v929
      %931 = vdwg.mxu0
      %932 = vmatpush.msra.mxu0 %v354
      %933 = vmatpush.msra.mxu0 %v353
      %934 = vmatpush.msra.mxu0 %v352
      %935 = vmatpush.msra.mxu0 %v351
      %936 = vmatpush.msra.mxu0 %v350
      %937 = vmatpush.msra.mxu0 %v349
      %938 = vmatpush.msra.mxu0 %v348
      %939 = vmatpush.msra.mxu0 %v347
      %940 = vmatpush.msra.mxu0 %v346
      %941 = vmatpush.msra.mxu0 %v345
      %942 = vmatpush.msra.mxu0 %v344
      %943 = vmatpush.msra.mxu0 %v343
      %944 = vmatpush.msra.mxu0 %v342
      %945 = vmatpush.msra.mxu0 %v341
      %946 = vmatpush.msra.mxu0 %v340
      %947 = vmatpush.msra.mxu0 %v339
      %948 = vmatmul.f32.gmra.mxu0 %v697
      %v949 = vpop.f32.mrf.mxu0
      %v950 = vadd.f32 %v930, %v949
      %951 = vdwg.mxu0
      %952 = vmatpush.msra.mxu0 %v370
      %953 = vmatpush.msra.mxu0 %v369
      %954 = vmatpush.msra.mxu0 %v368
      %955 = vmatpush.msra.mxu0 %v367
      %956 = vmatpush.msra.mxu0 %v366
      %957 = vmatpush.msra.mxu0 %v365
      %958 = vmatpush.msra.mxu0 %v364
      %959 = vmatpush.msra.mxu0 %v363
      %960 = vmatpush.msra.mxu0 %v362
      %961 = vmatpush.msra.mxu0 %v361
      %962 = vmatpush.msra.mxu0 %v360
      %963 = vmatpush.msra.mxu0 %v359
      %964 = vmatpush.msra.mxu0 %v358
      %965 = vmatpush.msra.mxu0 %v357
      %966 = vmatpush.msra.mxu0 %v356
      %967 = vmatpush.msra.mxu0 %v355
      %968 = vmatmul.f32.gmra.mxu0 %v698
      %v969 = vpop.f32.mrf.mxu0
      %v970 = vadd.f32 %v950, %v969
      %971 = vdwg.mxu0
      %972 = vmatpush.msra.mxu0 %v386
      %973 = vmatpush.msra.mxu0 %v385
      %974 = vmatpush.msra.mxu0 %v384
      %975 = vmatpush.msra.mxu0 %v383
      %976 = vmatpush.msra.mxu0 %v382
      %977 = vmatpush.msra.mxu0 %v381
      %978 = vmatpush.msra.mxu0 %v380
      %979 = vmatpush.msra.mxu0 %v379
      %980 = vmatpush.msra.mxu0 %v378
      %981 = vmatpush.msra.mxu0 %v377
      %982 = vmatpush.msra.mxu0 %v376
      %983 = vmatpush.msra.mxu0 %v375
      %984 = vmatpush.msra.mxu0 %v374
      %985 = vmatpush.msra.mxu0 %v373
      %986 = vmatpush.msra.mxu0 %v372
      %987 = vmatpush.msra.mxu0 %v371
      %988 = vmatmul.f32.gmra.mxu0 %v699
      %v989 = vpop.f32.mrf.mxu0
      %v990 = vadd.f32 %v970, %v989
      %991 = vdwg.mxu0
      %992 = vmatpush.msra.mxu0 %v402
      %993 = vmatpush.msra.mxu0 %v401
      %994 = vmatpush.msra.mxu0 %v400
      %995 = vmatpush.msra.mxu0 %v399
      %996 = vmatpush.msra.mxu0 %v398
      %997 = vmatpush.msra.mxu0 %v397
      %998 = vmatpush.msra.mxu0 %v396
      %999 = vmatpush.msra.mxu0 %v395
      %1000 = vmatpush.msra.mxu0 %v394
      %1001 = vmatpush.msra.mxu0 %v393
      %1002 = vmatpush.msra.mxu0 %v392
      %1003 = vmatpush.msra.mxu0 %v391
      %1004 = vmatpush.msra.mxu0 %v390
      %1005 = vmatpush.msra.mxu0 %v389
      %1006 = vmatpush.msra.mxu0 %v388
      %1007 = vmatpush.msra.mxu0 %v387
      %1008 = vmatmul.f32.gmra.mxu0 %v700
      %v1009 = vpop.f32.mrf.mxu0
      %v1010 = vadd.f32 %v990, %v1009
      %1011 = vdwg.mxu0
      %1012 = vmatpush.msra.mxu0 %v418
      %1013 = vmatpush.msra.mxu0 %v417
      %1014 = vmatpush.msra.mxu0 %v416
      %1015 = vmatpush.msra.mxu0 %v415
      %1016 = vmatpush.msra.mxu0 %v414
      %1017 = vmatpush.msra.mxu0 %v413
      %1018 = vmatpush.msra.mxu0 %v412
      %1019 = vmatpush.msra.mxu0 %v411
      %1020 = vmatpush.msra.mxu0 %v410
      %1021 = vmatpush.msra.mxu0 %v409
      %1022 = vmatpush.msra.mxu0 %v408
      %1023 = vmatpush.msra.mxu0 %v407
      %1024 = vmatpush.msra.mxu0 %v406
      %1025 = vmatpush.msra.mxu0 %v405
      %1026 = vmatpush.msra.mxu0 %v404
      %1027 = vmatpush.msra.mxu0 %v403
      %1028 = vmatmul.f32.gmra.mxu0 %v701
      %v1029 = vpop.f32.mrf.mxu0
      %v1030 = vadd.f32 %v1010, %v1029
      %1031 = vdwg.mxu0
      %1032 = vmatpush.msra.mxu0 %v434
      %1033 = vmatpush.msra.mxu0 %v433
      %1034 = vmatpush.msra.mxu0 %v432
      %1035 = vmatpush.msra.mxu0 %v431
      %1036 = vmatpush.msra.mxu0 %v430
      %1037 = vmatpush.msra.mxu0 %v429
      %1038 = vmatpush.msra.mxu0 %v428
      %1039 = vmatpush.msra.mxu0 %v427
      %1040 = vmatpush.msra.mxu0 %v426
      %1041 = vmatpush.msra.mxu0 %v425
      %1042 = vmatpush.msra.mxu0 %v424
      %1043 = vmatpush.msra.mxu0 %v423
      %1044 = vmatpush.msra.mxu0 %v422
      %1045 = vmatpush.msra.mxu0 %v421
      %1046 = vmatpush.msra.mxu0 %v420
      %1047 = vmatpush.msra.mxu0 %v419
      %1048 = vmatmul.f32.gmra.mxu0 %v702
      %v1049 = vpop.f32.mrf.mxu0
      %v1050 = vadd.f32 %v1030, %v1049
      %1051 = vdwg.mxu0
      %1052 = vmatpush.msra.mxu0 %v450
      %1053 = vmatpush.msra.mxu0 %v449
      %1054 = vmatpush.msra.mxu0 %v448
      %1055 = vmatpush.msra.mxu0 %v447
      %1056 = vmatpush.msra.mxu0 %v446
      %1057 = vmatpush.msra.mxu0 %v445
      %1058 = vmatpush.msra.mxu0 %v444
      %1059 = vmatpush.msra.mxu0 %v443
      %1060 = vmatpush.msra.mxu0 %v442
      %1061 = vmatpush.msra.mxu0 %v441
      %1062 = vmatpush.msra.mxu0 %v440
      %1063 = vmatpush.msra.mxu0 %v439
      %1064 = vmatpush.msra.mxu0 %v438
      %1065 = vmatpush.msra.mxu0 %v437
      %1066 = vmatpush.msra.mxu0 %v436
      %1067 = vmatpush.msra.mxu0 %v435
      %1068 = vmatmul.f32.gmra.mxu0 %v703
      %v1069 = vpop.f32.mrf.mxu0
      %v1070 = vadd.f32 %v1050, %v1069
      %1071 = vdwg.mxu0
      %1072 = vmatpush.msra.mxu0 %v466
      %1073 = vmatpush.msra.mxu0 %v465
      %1074 = vmatpush.msra.mxu0 %v464
      %1075 = vmatpush.msra.mxu0 %v463
      %1076 = vmatpush.msra.mxu0 %v462
      %1077 = vmatpush.msra.mxu0 %v461
      %1078 = vmatpush.msra.mxu0 %v460
      %1079 = vmatpush.msra.mxu0 %v459
      %1080 = vmatpush.msra.mxu0 %v458
      %1081 = vmatpush.msra.mxu0 %v457
      %1082 = vmatpush.msra.mxu0 %v456
      %1083 = vmatpush.msra.mxu0 %v455
      %1084 = vmatpush.msra.mxu0 %v454
      %1085 = vmatpush.msra.mxu0 %v453
      %1086 = vmatpush.msra.mxu0 %v452
      %1087 = vmatpush.msra.mxu0 %v451
      %1088 = vmatmul.f32.gmra.mxu0 %v706
      %v1089 = vpop.f32.mrf.mxu0
      %v1090 = vadd.f32 %v1070, %v1089
      %1091 = vdwg.mxu0
      %1092 = vmatpush.msra.mxu0 %v482
      %1093 = vmatpush.msra.mxu0 %v481
      %1094 = vmatpush.msra.mxu0 %v480
      %1095 = vmatpush.msra.mxu0 %v479
      %1096 = vmatpush.msra.mxu0 %v478
      %1097 = vmatpush.msra.mxu0 %v477
      %1098 = vmatpush.msra.mxu0 %v476
      %1099 = vmatpush.msra.mxu0 %v475
      %1100 = vmatpush.msra.mxu0 %v474
      %1101 = vmatpush.msra.mxu0 %v473
      %1102 = vmatpush.msra.mxu0 %v472
      %1103 = vmatpush.msra.mxu0 %v471
      %1104 = vmatpush.msra.mxu0 %v470
      %1105 = vmatpush.msra.mxu0 %v469
      %1106 = vmatpush.msra.mxu0 %v468
      %1107 = vmatpush.msra.mxu0 %v467
      %1108 = vmatmul.f32.gmra.mxu0 %v707
      %v1109 = vpop.f32.mrf.mxu0
      %v1110 = vadd.f32 %v1090, %v1109
      %1111 = vdwg.mxu0
      %1112 = vmatpush.msra.mxu0 %v498
      %1113 = vmatpush.msra.mxu0 %v497
      %1114 = vmatpush.msra.mxu0 %v496
      %1115 = vmatpush.msra.mxu0 %v495
      %1116 = vmatpush.msra.mxu0 %v494
      %1117 = vmatpush.msra.mxu0 %v493
      %1118 = vmatpush.msra.mxu0 %v492
      %1119 = vmatpush.msra.mxu0 %v491
      %1120 = vmatpush.msra.mxu0 %v490
      %1121 = vmatpush.msra.mxu0 %v489
      %1122 = vmatpush.msra.mxu0 %v488
      %1123 = vmatpush.msra.mxu0 %v487
      %1124 = vmatpush.msra.mxu0 %v486
      %1125 = vmatpush.msra.mxu0 %v485
      %1126 = vmatpush.msra.mxu0 %v484
      %1127 = vmatpush.msra.mxu0 %v483
      %1128 = vmatmul.f32.gmra.mxu0 %v708
      %v1129 = vpop.f32.mrf.mxu0
      %v1130 = vadd.f32 %v1110, %v1129
      %1131 = vdwg.mxu0
      %1132 = vmatpush.msra.mxu0 %v514
      %1133 = vmatpush.msra.mxu0 %v513
      %1134 = vmatpush.msra.mxu0 %v512
      %1135 = vmatpush.msra.mxu0 %v511
      %1136 = vmatpush.msra.mxu0 %v510
      %1137 = vmatpush.msra.mxu0 %v509
      %1138 = vmatpush.msra.mxu0 %v508
      %1139 = vmatpush.msra.mxu0 %v507
      %1140 = vmatpush.msra.mxu0 %v506
      %1141 = vmatpush.msra.mxu0 %v505
      %1142 = vmatpush.msra.mxu0 %v504
      %1143 = vmatpush.msra.mxu0 %v503
      %1144 = vmatpush.msra.mxu0 %v502
      %1145 = vmatpush.msra.mxu0 %v501
      %1146 = vmatpush.msra.mxu0 %v500
      %1147 = vmatpush.msra.mxu0 %v499
      %1148 = vmatmul.f32.gmra.mxu0 %v709
      %v1149 = vpop.f32.mrf.mxu0
      %v1150 = vadd.f32 %v1130, %v1149
      %1151 = vdwg.mxu0
      %1152 = vmatpush.msra.mxu0 %v530
      %1153 = vmatpush.msra.mxu0 %v529
      %1154 = vmatpush.msra.mxu0 %v528
      %1155 = vmatpush.msra.mxu0 %v527
      %1156 = vmatpush.msra.mxu0 %v526
      %1157 = vmatpush.msra.mxu0 %v525
      %1158 = vmatpush.msra.mxu0 %v524
      %1159 = vmatpush.msra.mxu0 %v523
      %1160 = vmatpush.msra.mxu0 %v522
      %1161 = vmatpush.msra.mxu0 %v521
      %1162 = vmatpush.msra.mxu0 %v520
      %1163 = vmatpush.msra.mxu0 %v519
      %1164 = vmatpush.msra.mxu0 %v518
      %1165 = vmatpush.msra.mxu0 %v517
      %1166 = vmatpush.msra.mxu0 %v516
      %1167 = vmatpush.msra.mxu0 %v515
      %1168 = vmatmul.f32.gmra.mxu0 %v710
      %v1169 = vpop.f32.mrf.mxu0
      %v1170 = vadd.f32 %v1150, %v1169
      %1171 = vdwg.mxu0
      %1172 = vmatpush.msra.mxu0 %v546
      %1173 = vmatpush.msra.mxu0 %v545
      %1174 = vmatpush.msra.mxu0 %v544
      %1175 = vmatpush.msra.mxu0 %v543
      %1176 = vmatpush.msra.mxu0 %v542
      %1177 = vmatpush.msra.mxu0 %v541
      %1178 = vmatpush.msra.mxu0 %v540
      %1179 = vmatpush.msra.mxu0 %v539
      %1180 = vmatpush.msra.mxu0 %v538
      %1181 = vmatpush.msra.mxu0 %v537
      %1182 = vmatpush.msra.mxu0 %v536
      %1183 = vmatpush.msra.mxu0 %v535
      %1184 = vmatpush.msra.mxu0 %v534
      %1185 = vmatpush.msra.mxu0 %v533
      %1186 = vmatpush.msra.mxu0 %v532
      %1187 = vmatpush.msra.mxu0 %v531
      %1188 = vmatmul.f32.gmra.mxu0 %v711
      %v1189 = vpop.f32.mrf.mxu0
      %v1190 = vadd.f32 %v1170, %v1189
      %1191 = vdwg.mxu0
      %1192 = vmatpush.msra.mxu0 %v562
      %1193 = vmatpush.msra.mxu0 %v561
      %1194 = vmatpush.msra.mxu0 %v560
      %1195 = vmatpush.msra.mxu0 %v559
      %1196 = vmatpush.msra.mxu0 %v558
      %1197 = vmatpush.msra.mxu0 %v557
      %1198 = vmatpush.msra.mxu0 %v556
      %1199 = vmatpush.msra.mxu0 %v555
      %1200 = vmatpush.msra.mxu0 %v554
      %1201 = vmatpush.msra.mxu0 %v553
      %1202 = vmatpush.msra.mxu0 %v552
      %1203 = vmatpush.msra.mxu0 %v551
      %1204 = vmatpush.msra.mxu0 %v550
      %1205 = vmatpush.msra.mxu0 %v549
      %1206 = vmatpush.msra.mxu0 %v548
      %1207 = vmatpush.msra.mxu0 %v547
      %1208 = vmatmul.f32.gmra.mxu0 %v712
      %v1209 = vpop.f32.mrf.mxu0
      %v1210 = vadd.f32 %v1190, %v1209
      %1211 = vdwg.mxu0
      %1212 = vmatpush.msra.mxu0 %v578
      %1213 = vmatpush.msra.mxu0 %v577
      %1214 = vmatpush.msra.mxu0 %v576
      %1215 = vmatpush.msra.mxu0 %v575
      %1216 = vmatpush.msra.mxu0 %v574
      %1217 = vmatpush.msra.mxu0 %v573
      %1218 = vmatpush.msra.mxu0 %v572
      %1219 = vmatpush.msra.mxu0 %v571
      %1220 = vmatpush.msra.mxu0 %v570
      %1221 = vmatpush.msra.mxu0 %v569
      %1222 = vmatpush.msra.mxu0 %v568
      %1223 = vmatpush.msra.mxu0 %v567
      %1224 = vmatpush.msra.mxu0 %v566
      %1225 = vmatpush.msra.mxu0 %v565
      %1226 = vmatpush.msra.mxu0 %v564
      %1227 = vmatpush.msra.mxu0 %v563
      %1228 = vmatmul.f32.gmra.mxu0 %v713
      %v1229 = vpop.f32.mrf.mxu0
      %v1230 = vadd.f32 %v1210, %v1229
      %1231 = vdwg.mxu0
      %1232 = vmatpush.msra.mxu0 %v594
      %1233 = vmatpush.msra.mxu0 %v593
      %1234 = vmatpush.msra.mxu0 %v592
      %1235 = vmatpush.msra.mxu0 %v591
      %1236 = vmatpush.msra.mxu0 %v590
      %1237 = vmatpush.msra.mxu0 %v589
      %1238 = vmatpush.msra.mxu0 %v588
      %1239 = vmatpush.msra.mxu0 %v587
      %1240 = vmatpush.msra.mxu0 %v586
      %1241 = vmatpush.msra.mxu0 %v585
      %1242 = vmatpush.msra.mxu0 %v584
      %1243 = vmatpush.msra.mxu0 %v583
      %1244 = vmatpush.msra.mxu0 %v582
      %1245 = vmatpush.msra.mxu0 %v581
      %1246 = vmatpush.msra.mxu0 %v580
      %1247 = vmatpush.msra.mxu0 %v579
      %1248 = vmatmul.f32.gmra.mxu0 %v716
      %v1249 = vpop.f32.mrf.mxu0
      %v1250 = vadd.f32 %v1230, %v1249
      %1251 = vdwg.mxu0
      %1252 = vmatpush.msra.mxu0 %v610
      %1253 = vmatpush.msra.mxu0 %v609
      %1254 = vmatpush.msra.mxu0 %v608
      %1255 = vmatpush.msra.mxu0 %v607
      %1256 = vmatpush.msra.mxu0 %v606
      %1257 = vmatpush.msra.mxu0 %v605
      %1258 = vmatpush.msra.mxu0 %v604
      %1259 = vmatpush.msra.mxu0 %v603
      %1260 = vmatpush.msra.mxu0 %v602
      %1261 = vmatpush.msra.mxu0 %v601
      %1262 = vmatpush.msra.mxu0 %v600
      %1263 = vmatpush.msra.mxu0 %v599
      %1264 = vmatpush.msra.mxu0 %v598
      %1265 = vmatpush.msra.mxu0 %v597
      %1266 = vmatpush.msra.mxu0 %v596
      %1267 = vmatpush.msra.mxu0 %v595
      %1268 = vmatmul.f32.gmra.mxu0 %v717
      %v1269 = vpop.f32.mrf.mxu0
      %v1270 = vadd.f32 %v1250, %v1269
      %1271 = vdwg.mxu0
      %1272 = vmatpush.msra.mxu0 %v626
      %1273 = vmatpush.msra.mxu0 %v625
      %1274 = vmatpush.msra.mxu0 %v624
      %1275 = vmatpush.msra.mxu0 %v623
      %1276 = vmatpush.msra.mxu0 %v622
      %1277 = vmatpush.msra.mxu0 %v621
      %1278 = vmatpush.msra.mxu0 %v620
      %1279 = vmatpush.msra.mxu0 %v619
      %1280 = vmatpush.msra.mxu0 %v618
      %1281 = vmatpush.msra.mxu0 %v617
      %1282 = vmatpush.msra.mxu0 %v616
      %1283 = vmatpush.msra.mxu0 %v615
      %1284 = vmatpush.msra.mxu0 %v614
      %1285 = vmatpush.msra.mxu0 %v613
      %1286 = vmatpush.msra.mxu0 %v612
      %1287 = vmatpush.msra.mxu0 %v611
      %1288 = vmatmul.f32.gmra.mxu0 %v718
      %v1289 = vpop.f32.mrf.mxu0
      %v1290 = vadd.f32 %v1270, %v1289
      %1291 = vdwg.mxu0
      %1292 = vmatpush.msra.mxu0 %v642
      %1293 = vmatpush.msra.mxu0 %v641
      %1294 = vmatpush.msra.mxu0 %v640
      %1295 = vmatpush.msra.mxu0 %v639
      %1296 = vmatpush.msra.mxu0 %v638
      %1297 = vmatpush.msra.mxu0 %v637
      %1298 = vmatpush.msra.mxu0 %v636
      %1299 = vmatpush.msra.mxu0 %v635
      %1300 = vmatpush.msra.mxu0 %v634
      %1301 = vmatpush.msra.mxu0 %v633
      %1302 = vmatpush.msra.mxu0 %v632
      %1303 = vmatpush.msra.mxu0 %v631
      %1304 = vmatpush.msra.mxu0 %v630
      %1305 = vmatpush.msra.mxu0 %v629
      %1306 = vmatpush.msra.mxu0 %v628
      %1307 = vmatpush.msra.mxu0 %v627
      %1308 = vmatmul.f32.gmra.mxu0 %v719
      %v1309 = vpop.f32.mrf.mxu0
      %v1310 = vadd.f32 %v1290, %v1309
      %1311 = vdwg.mxu0
      %1312 = vmatpush.msra.mxu0 %v658
      %1313 = vmatpush.msra.mxu0 %v657
      %1314 = vmatpush.msra.mxu0 %v656
      %1315 = vmatpush.msra.mxu0 %v655
      %1316 = vmatpush.msra.mxu0 %v654
      %1317 = vmatpush.msra.mxu0 %v653
      %1318 = vmatpush.msra.mxu0 %v652
      %1319 = vmatpush.msra.mxu0 %v651
      %1320 = vmatpush.msra.mxu0 %v650
      %1321 = vmatpush.msra.mxu0 %v649
      %1322 = vmatpush.msra.mxu0 %v648
      %1323 = vmatpush.msra.mxu0 %v647
      %1324 = vmatpush.msra.mxu0 %v646
      %1325 = vmatpush.msra.mxu0 %v645
      %1326 = vmatpush.msra.mxu0 %v644
      %1327 = vmatpush.msra.mxu0 %v643
      %1328 = vmatmul.f32.gmra.mxu0 %v720
      %v1329 = vpop.f32.mrf.mxu0
      %v1330 = vadd.f32 %v1310, %v1329
      %1331 = vdwg.mxu0
      %1332 = vmatpush.msra.mxu0 %v674
      %1333 = vmatpush.msra.mxu0 %v673
      %1334 = vmatpush.msra.mxu0 %v672
      %1335 = vmatpush.msra.mxu0 %v671
      %1336 = vmatpush.msra.mxu0 %v670
      %1337 = vmatpush.msra.mxu0 %v669
      %1338 = vmatpush.msra.mxu0 %v668
      %1339 = vmatpush.msra.mxu0 %v667
      %1340 = vmatpush.msra.mxu0 %v666
      %1341 = vmatpush.msra.mxu0 %v665
      %1342 = vmatpush.msra.mxu0 %v664
      %1343 = vmatpush.msra.mxu0 %v663
      %1344 = vmatpush.msra.mxu0 %v662
      %1345 = vmatpush.msra.mxu0 %v661
      %1346 = vmatpush.msra.mxu0 %v660
      %1347 = vmatpush.msra.mxu0 %v659
      %1348 = vmatmul.f32.gmra.mxu0 %v721
      %v1349 = vpop.f32.mrf.mxu0
      %v1350 = vadd.f32 %v1330, %v1349
      %1351 = vdwg.mxu0
      %v1352 = vadd.f32 %v186, %v1350
      %vm1353 = vcmask 975872
      %1354 = vst.msk [vmem:[#allocation2] sm:$0x3] %vm1353, %v1352
      %p1355 = scmp.eq.s32.totalorder %s14, 14
      // Predicated region
      $region37: #{cnn_forward.7} parent=31 // pred_check
        %p1356 = pneg %p1355
      $region38: #{cnn_forward.7} parent=31 // pred_check_branch
        %1358 = sbr.rel (%p1356) target = $region40
      $region39: #{cnn_forward.7} parent=31 // pred_region
        %v1359 = vld [vmem:[#allocation2] sm:$0x3]
        %v1360 = vld [vmem:[%s2] sm:$0x1]
        %v1362 = vperm.slane %v1360, 0
        %v1364 = vadd.f32 %v1359, %v1362
        %v1365 = vmax.f32 %v1364, 0.0
        %1366 = vst.msk [vmem:[%s3] sm:$0x3] %vm1353, %v1365
      $region40: #{cnn_forward.7} parent=31 // pred_fallthru
        _
      // Predicated region
      $region41: #{cnn_forward.7} parent=31 // pred_check
        %p1367 = pneg %p100
      $region42: #{cnn_forward.7} parent=31 // pred_check_branch
        %1369 = sbr.rel (%p1367) target = $region44
      $region43: #{cnn_forward.7} parent=31 // pred_region
        _
      $region44: #{cnn_forward.7} parent=31 // pred_fallthru
        _
      // Predicated region
      $region45: #{cnn_forward.7} parent=31 // pred_check
        %p1370 = pneg %p100
      $region46: #{cnn_forward.7} parent=31 // pred_check_branch
        %1372 = sbr.rel (%p1370) target = $region48
      $region47: #{cnn_forward.7} parent=31 // pred_region
        _
      $region48: #{cnn_forward.7} parent=31 // pred_fallthru
        _
    $region32: #{cnn_forward.7} parent=5 // pred_fallthru
      _
    %p1373 = scmp.le.s32.totalorder 2, %s9
    // Predicated region
    $region49: #{cnn_forward.7} parent=5 // pred_check
      %p1374 = pneg %p1373
    $region50: #{cnn_forward.7} parent=5 // pred_check_branch
      %1376 = sbr.rel (%p1374) target = $region52
    $region51: #{cnn_forward.7} parent=5 // pred_region
      %s1377 = ssub.s32 %s9, 2
    $region52: #{cnn_forward.7} parent=5 // pred_fallthru
      _
  $region6: #{cnn_forward.7} parent=0 // loop_footer
    %s13 = sadd.s32 1, %s9
  $region7: #{cnn_forward.7} parent=0 // loop_footer_branch
    %8 = sbr.rel target = $region3
  $region8: #{cnn_forward.7} parent=0 // loop_exit
    _

// kernel: cnn_forward.8
$region0: #{cnn_forward.8}
  #allocation0 [shape = 'u32[]', space=smem, size = 0x4, offset = 0x4, fixed_abs, tag = 'smem constant byte address 0x4 - core index']
  #allocation1 [shape = 'u32[72,128]{1,0:T(1,128)}', space=vmem, size = 0x9000, scoped, tag = 'internal scratch']
  %s0 = inlined_call_operand.vmem [shape: f32[2,120], index: 0, kind: input, shape index: {}]
  %s1 = inlined_call_operand.vmem [shape: f32[120,32], index: 1, kind: input, shape index: {}]
  %s2 = inlined_call_operand.vmem [shape: f32[1,32], index: 2, kind: input, shape index: {}]
  %s3 = inlined_call_operand.vmem [shape: f32[2,32], index: 3, kind: output, shape index: {}]
  %s4 = sld [smem:[#allocation0]]
  $region22: #{cnn_forward.8} parent=0
    _
  %s6 = ssub.s32 1, %s4
  %s7 = scalar_select 0, %s6, %s4
  // Predicated region
  $region2: #{cnn_forward.8} parent=0 // pred_check
    _
  $region3: #{cnn_forward.8} parent=0 // pred_check_branch
    %9 = sbr.rel (0) target = $region5
  $region4: #{cnn_forward.8} parent=0 // pred_region
    _
  $region5: #{cnn_forward.8} parent=0 // pred_fallthru
    _
  // Predicated region
  $region6: #{cnn_forward.8} parent=0 // pred_check
    _
  $region7: #{cnn_forward.8} parent=0 // pred_check_branch
    %11 = sbr.rel (0) target = $region9
  $region8: #{cnn_forward.8} parent=0 // pred_region
    _
  $region9: #{cnn_forward.8} parent=0 // pred_fallthru
    _
  // Predicated region
  $region10: #{cnn_forward.8} parent=0 // pred_check
    _
  $region11: #{cnn_forward.8} parent=0 // pred_check_branch
    %13 = sbr.rel (0) target = $region13
  $region12: #{cnn_forward.8} parent=0 // pred_region
    _
  $region13: #{cnn_forward.8} parent=0 // pred_fallthru
    _
  %v14 = vld [vmem:[%s0] sm:$0x3]
  %v15 = vld [vmem:[%s1] sm:$0xff]
  %v16 = vld [vmem:[%s1 + $0x8] sm:$0xff]
  %v17 = vld [vmem:[%s1 + $0x10] sm:$0xff]
  %v18 = vld [vmem:[%s1 + $0x18] sm:$0xff]
  %v19 = vld [vmem:[%s1 + $0x20] sm:$0xff]
  %v20 = vld [vmem:[%s1 + $0x28] sm:$0xff]
  %v21 = vld [vmem:[%s1 + $0x30] sm:$0xff]
  %v22 = vld [vmem:[%s1 + $0x38] sm:$0xff]
  %v23 = vld [vmem:[%s1 + $0x40] sm:$0xff]
  %v24 = vld [vmem:[%s1 + $0x48] sm:$0xff]
  %v25 = vld [vmem:[%s1 + $0x50] sm:$0xff]
  %v26 = vld [vmem:[%s1 + $0x58] sm:$0xff]
  %v27 = vld [vmem:[%s1 + $0x60] sm:$0xff]
  %v28 = vld [vmem:[%s1 + $0x68] sm:$0xff]
  %v29 = vld [vmem:[%s1 + $0x70] sm:$0xff]
  %v30 = vld [vmem:[%s2] sm:$0x1]
  %v32 = vperm.slane %v30, 0
  %vm34 = vcmask 982016
  %v36 = vsel %vm34, %v14, 0
  %38 = vmatpush.msra.mxu0 0.0
  %39 = vmatpush.msra.mxu0 %v29
  %40 = vmatpush.msra.mxu0 %v28
  %41 = vmatpush.msra.mxu0 %v27
  %42 = vmatpush.msra.mxu0 %v26
  %43 = vmatpush.msra.mxu0 %v25
  %44 = vmatpush.msra.mxu0 %v24
  %45 = vmatpush.msra.mxu0 %v23
  %46 = vmatpush.msra.mxu0 %v22
  %47 = vmatpush.msra.mxu0 %v21
  %48 = vmatpush.msra.mxu0 %v20
  %49 = vmatpush.msra.mxu0 %v19
  %50 = vmatpush.msra.mxu0 %v18
  %51 = vmatpush.msra.mxu0 %v17
  %52 = vmatpush.msra.mxu0 %v16
  %53 = vmatpush.msra.mxu0 %v15
  %54 = vmatmul.f32.gmra.mxu0 %v36
  %v55 = vpop.f32.mrf.mxu0
  %v56 = vadd.f32 %v32, %v55
  %57 = vdwg.mxu0
  %v58 = vmax.f32 %v56, 0.0
  %vm59 = vcmask 254976
  %60 = vst.msk [vmem:[%s3] sm:$0x3] %vm59, %v58
  // Predicated region
  $region14: #{cnn_forward.8} parent=0 // pred_check
    _
  $region15: #{cnn_forward.8} parent=0 // pred_check_branch
    %62 = sbr.rel (0) target = $region17
  $region16: #{cnn_forward.8} parent=0 // pred_region
    _
  $region17: #{cnn_forward.8} parent=0 // pred_fallthru
    _
  // Predicated region
  $region18: #{cnn_forward.8} parent=0 // pred_check
    _
  $region19: #{cnn_forward.8} parent=0 // pred_check_branch
    %64 = sbr.rel (0) target = $region21
  $region20: #{cnn_forward.8} parent=0 // pred_region
    _
  $region21: #{cnn_forward.8} parent=0 // pred_fallthru
    _

// kernel: cnn_forward.9
$region0: #{cnn_forward.9}
  #allocation0 [shape = 'u32[]', space=smem, size = 0x4, offset = 0x4, fixed_abs, tag = 'smem constant byte address 0x4 - core index']
  #allocation1 [shape = 'u32[72,128]{1,0:T(1,128)}', space=vmem, size = 0x9000, scoped, tag = 'internal scratch']
  %s0 = inlined_call_operand.vmem [shape: f32[2,32], index: 0, kind: input, shape index: {}]
  %s1 = inlined_call_operand.vmem [shape: f32[32,5], index: 1, kind: input, shape index: {}]
  %s2 = inlined_call_operand.vmem [shape: f32[1,5], index: 2, kind: input, shape index: {}]
  %s3 = inlined_call_operand.hbm [shape: f32[2,5], index: 3, kind: output, shape index: {}]
  %s4 = sld [smem:[#allocation0]]
  $region22: #{cnn_forward.9} parent=0
    _
  %s6 = ssub.s32 1, %s4
  %s7 = scalar_select 0, %s6, %s4
  $region1: #{cnn_forward.9} parent=0
    #allocation2 [shape = 'u8[1024]{0}', space=vmem, size = 0x400, scoped, tag = 'output window, operand 0, single buffered']
    #allocation3 [shape = 's32[1]{0}', space=sflag, size = 0x4, scoped, tag = 'scoped memory for cnn_forward.9']
    %8 = vsyncpa [#allocation3], 0
    // Predicated region
    $region2: #{cnn_forward.9} parent=1 // pred_check
      _
    $region3: #{cnn_forward.9} parent=1 // pred_check_branch
      %10 = sbr.rel (0) target = $region5
    $region4: #{cnn_forward.9} parent=1 // pred_region
      _
    $region5: #{cnn_forward.9} parent=1 // pred_fallthru
      _
    // Predicated region
    $region6: #{cnn_forward.9} parent=1 // pred_check
      _
    $region7: #{cnn_forward.9} parent=1 // pred_check_branch
      %12 = sbr.rel (0) target = $region9
    $region8: #{cnn_forward.9} parent=1 // pred_region
      _
    $region9: #{cnn_forward.9} parent=1 // pred_fallthru
      _
    // Predicated region
    $region10: #{cnn_forward.9} parent=1 // pred_check
      _
    $region11: #{cnn_forward.9} parent=1 // pred_check_branch
      %14 = sbr.rel (0) target = $region13
    $region12: #{cnn_forward.9} parent=1 // pred_region
      _
    $region13: #{cnn_forward.9} parent=1 // pred_fallthru
      _
    %v15 = vld [vmem:[%s0] sm:$0x3]
    %v16 = vld [vmem:[%s1] sm:$0xff]
    %v17 = vld [vmem:[%s1 + $0x8] sm:$0xff]
    %v18 = vld [vmem:[%s1 + $0x10] sm:$0xff]
    %v19 = vld [vmem:[%s1 + $0x18] sm:$0xff]
    %v20 = vld [vmem:[%s2] sm:$0x1]
    %v22 = vperm.slane %v20, 0
    %vm24 = vcmask 261120
    %v26 = vsel %vm24, %v15, 0
    %28 = vmatpush.msra.mxu0 0.0
    %29 = vmatpush.msra.mxu0 0.0
    %30 = vmatpush.msra.mxu0 0.0
    %31 = vmatpush.msra.mxu0 0.0
    %32 = vmatpush.msra.mxu0 0.0
    %33 = vmatpush.msra.mxu0 0.0
    %34 = vmatpush.msra.mxu0 0.0
    %35 = vmatpush.msra.mxu0 0.0
    %36 = vmatpush.msra.mxu0 0.0
    %37 = vmatpush.msra.mxu0 0.0
    %38 = vmatpush.msra.mxu0 0.0
    %39 = vmatpush.msra.mxu0 0.0
    %40 = vmatpush.msra.mxu0 %v19
    %41 = vmatpush.msra.mxu0 %v18
    %42 = vmatpush.msra.mxu0 %v17
    %43 = vmatpush.msra.mxu0 %v16
    %44 = vmatmul.f32.gmra.mxu0 %v26
    %v45 = vpop.f32.mrf.mxu0
    %v46 = vadd.f32 %v22, %v45
    %47 = vdwg.mxu0
    %vm48 = vcmask 33792
    %49 = vst.msk [vmem:[#allocation2] sm:$0x3] %vm48, %v46
    // Predicated region
    $region14: #{cnn_forward.9} parent=1 // pred_check
      _
    $region15: #{cnn_forward.9} parent=1 // pred_check_branch
      %51 = sbr.rel (0) target = $region17
    $region16: #{cnn_forward.9} parent=1 // pred_region
      %53 = vsyncadd [#allocation3], 0
      %s55 = sshll.u32 [#allocation2], 4
      %s56 = int_to_ptr.vmem [resolvable:$true] %s55
      %s57 = sshll.u32 %s3, 4
      %s58 = int_to_ptr.hbm [resolvable:$true] %s57
      %60 = dma.vmem_to_hbm [thread:$0]  %s56, 32, %s58, [#allocation3]
    $region17: #{cnn_forward.9} parent=1 // pred_fallthru
      _
    // Predicated region
    $region18: #{cnn_forward.9} parent=1 // pred_check
      _
    $region19: #{cnn_forward.9} parent=1 // pred_check_branch
      %62 = sbr.rel (0) target = $region21
    $region20: #{cnn_forward.9} parent=1 // pred_region
      %64 = dma.done [#allocation3], 32
    $region21: #{cnn_forward.9} parent=1 // pred_fallthru
      _
    %65 = vsyncpa [#allocation3], 1

</llo_original>
